<compile_context>
chip_gen: v5e
topology: v5e:2x2
jax: 0.10.0
libtpu: 0.0.40
codegen_flags: <defaults>
</compile_context>

<pallas_src>
import functools

import jax
import jax.numpy as jnp
import numpy as np
from jax.experimental import pallas as pl
from jax.experimental.pallas import tpu as pltpu

CPAD = 128  # all channel dims are zero-padded to 128 lanes


# ----------------------------- Pallas kernel -------------------------------


def _net_kernel(x_ref, wc_ref, bc_ref, mask_ref, pool_ref,
                w1_ref, b1_ref, w2_ref, b2_ref,          # inputs
                o_ref,                                   # output
                buf_ref,                                 # scratch: (2, rbuf, CPAD) ping-pong
                *, n_layers, wp, rows, row_off, slack_hi, cpad):
    l = pl.program_id(0)                                 # conv layer index

    # --- step 0: stage the prepared input (zero slack + zero halo) into slot 1 and zero
    #     ONLY the leading/trailing slack rows of slot 0.  Interior rows of both slots are
    #     fully overwritten (masked) every layer, and slot 1's slack is zero via the copy,
    #     so both slots' slack stays zero for every shifted tap read.
    @pl.when(l == 0)
    def _stage_input():
        slot1 = buf_ref.at[1]
        slot1[...] = x_ref[...]
        slot0 = buf_ref.at[0]
        slot0[pl.ds(0, row_off), :] = jnp.zeros((row_off, cpad), jnp.float32)
        slot0[pl.ds(row_off + rows, slack_hi), :] = jnp.zeros((slack_hi, cpad), jnp.float32)

    # --- 3x3 SAME conv for layer l: 9 shifted-slice bf16 matmuls, accumulated in a
    #     loop-carried f32 value (no VMEM accumulator scratch).
    src = buf_ref.at[(l + 1) & 1]                        # layer l reads slot (l+1)%2
    acc = None
    for t in range(9):                                   # static unroll over taps (dy, dx)
        dy, dx = t // 3, t % 3
        start = row_off + (dy - 1) * wp + (dx - 1)       # static row shift
        a = src[pl.ds(start, rows), :].astype(jnp.bfloat16)
        w_t = wc_ref[pl.ds(t * cpad, cpad), :]           # (cpad, cpad) bf16, this layer's tap t
        part = jnp.dot(a, w_t, preferred_element_type=jnp.float32)
        acc = part if acc is None else acc + part

    bias = bc_ref[0]                                     # (1, cpad) BN-folded bias
    # Folded-BN bias + ReLU, then zero the intra-image halo rows (lane-broadcast (rows, 1)
    # mask) so the next layer's shifted reads see correct zero padding.
    y = jnp.maximum(acc + bias, 0.0) * mask_ref[...]     # (rows, cpad) f32

    @pl.when(l < n_layers - 1)
    def _store_activation():
        dst = buf_ref.at[l & 1]                          # layer l writes slot l%2
        dst[pl.ds(row_off, rows), :] = y                 # aligned, lane-dense store

    @pl.when(l == n_layers - 1)
    def _head():
        # Fused global average pool (per-image interior-averaging matrix) + FC head.
        pooled = jnp.dot(pool_ref[...], y.astype(jnp.bfloat16),
                         preferred_element_type=jnp.float32)            # (8, cpad)
        h = jnp.maximum(
            jnp.dot(pooled.astype(jnp.bfloat16), w1_ref[...],
                    preferred_element_type=jnp.float32) + b1_ref[...], 0.0)
        o_ref[...] = jnp.dot(h.astype(jnp.bfloat16), w2_ref[...],
                             preferred_element_type=jnp.float32) + b2_ref[...]


def classifier_net_pallas(xbuf, wc, bc, mask, pool, w1p, b1p, w2p, b2p,
                          *, n_layers, wp, rows, row_off, n_out_rows):
    rbuf = xbuf.shape[0]
    slack_hi = rbuf - row_off - rows
    kernel = functools.partial(_net_kernel, n_layers=n_layers, wp=wp, rows=rows,
                               row_off=row_off, slack_hi=slack_hi, cpad=CPAD)

    flops = (2 * n_layers * 9 * rows * CPAD * CPAD       # conv taps
             + 2 * n_out_rows * rows * CPAD               # pooling matmul
             + 2 * 2 * n_out_rows * CPAD * CPAD)          # two FC layers
    bytes_accessed = (xbuf.size * 4 + wc.size * 2 + bc.size * 4 + mask.size * 4
                      + pool.size * 2 + w1p.size * 2 + b1p.size * 4
                      + w2p.size * 2 + b2p.size * 4 + n_out_rows * CPAD * 4)

    return pl.pallas_call(
        kernel,
        out_shape=jax.ShapeDtypeStruct((n_out_rows, CPAD), jnp.float32),
        grid_spec=pltpu.PrefetchScalarGridSpec(
            num_scalar_prefetch=0,
            grid=(n_layers,),                                         # one step per conv layer
            in_specs=[
                # constant block index -> DMA'd once, stays VMEM-resident across steps
                pl.BlockSpec((rbuf, CPAD), lambda l: (0, 0)),         # prepared input buffer
                # per-layer conv weights: double-buffered -> layer l+1 DMA hides under layer l
                pl.BlockSpec((9 * CPAD, CPAD), lambda l: (l, 0)),
                pl.BlockSpec((1, 1, CPAD), lambda l: (l, 0, 0)),      # per-layer folded bias
                pl.BlockSpec((rows, 1), lambda l: (0, 0)),            # halo mask (lane-broadcast)
                pl.BlockSpec((n_out_rows, rows), lambda l: (0, 0)),   # pooling matrix (bf16)
                pl.BlockSpec((CPAD, CPAD), lambda l: (0, 0)),         # fc1 weight (bf16)
                pl.BlockSpec((1, CPAD), lambda l: (0, 0)),            # fc1 bias
                pl.BlockSpec((CPAD, CPAD), lambda l: (0, 0)),         # fc2 weight (bf16)
                pl.BlockSpec((1, CPAD), lambda l: (0, 0)),            # fc2 bias
            ],
            out_specs=pl.BlockSpec((n_out_rows, CPAD), lambda l: (0, 0)),
            scratch_shapes=[
                pltpu.VMEM((2, rbuf, CPAD), jnp.float32),  # ping-pong activation buffers
            ],
        ),
        compiler_params=pltpu.CompilerParams(
            dimension_semantics=("arbitrary",)),           # layers are strictly sequential
        cost_estimate=pl.CostEstimate(flops=flops, transcendentals=0,
                                      bytes_accessed=bytes_accessed),
    )(xbuf, wc, bc, mask, pool, w1p, b1p, w2p, b2p)


# ------------------------------- JAX glue ----------------------------------


def classifier_net_forward(x_nchw, conv_params, fc_params):
    N, cin0, H, W = x_nchw.shape
    Hp, Wp = H + 2, W + 2
    rows = N * Hp * Wp
    assert rows % 8 == 0, rows
    assert N <= 8
    row_off = ((Wp + 1 + 7) // 8) * 8              # leading slack (>= Wp+1, 8-aligned)
    rbuf = row_off + rows + row_off                # trailing slack == leading slack

    # ---- input buffer: NCHW -> NHWC, spatial halo pad, channel pad to CPAD, flatten ----
    x = jnp.transpose(x_nchw, (0, 2, 3, 1))
    xp = jnp.pad(x, ((0, 0), (1, 1), (1, 1), (0, CPAD - cin0)))
    xbuf = jnp.pad(xp.reshape(rows, CPAD), ((row_off, rbuf - row_off - rows), (0, 0)))

    # ---- conv weights: fold BN scale, tap-major per layer, pad channels, store bf16 ----
    # (One-time parameter prep; in deployment this would be hoisted out of the forward.)
    n_layers = len(conv_params)
    wc_list = []
    bc = jnp.zeros((n_layers, 1, CPAD), jnp.float32)
    for l, (w_hwio, scale, bias) in enumerate(conv_params):
        cin, cout = w_hwio.shape[2], w_hwio.shape[3]
        wf = (w_hwio * scale).reshape(9, cin, cout)            # fold BN scale: x@(w*s)+b
        wl = jnp.zeros((9, CPAD, CPAD), jnp.float32).at[:, :cin, :cout].set(wf)
        wc_list.append(wl)
        bc = bc.at[l, 0, :cout].set(bias)
    wc = (jnp.concatenate(wc_list, axis=0)
          .reshape(n_layers * 9 * CPAD, CPAD).astype(jnp.bfloat16))

    # ---- (rows, 1) halo mask & per-image interior-averaging pooling matrix ----
    yy, xx = np.meshgrid(np.arange(Hp), np.arange(Wp), indexing="ij")
    interior_hw = ((yy >= 1) & (yy <= H) & (xx >= 1) & (xx <= W)).astype(np.float32)
    interior = np.tile(interior_hw.reshape(-1), N)                      # (rows,)
    mask = jnp.asarray(interior[:, None])                               # (rows, 1) f32

    n_out_rows = 8
    pool_np = np.zeros((n_out_rows, rows), np.float32)
    inv_area = 1.0 / float(H * W)                  # 1/256: exact in bf16
    for n in range(N):
        pool_np[n, n * Hp * Wp:(n + 1) * Hp * Wp] = interior_hw.reshape(-1) * inv_area
    pool = jnp.asarray(pool_np).astype(jnp.bfloat16)

    # ---- FC head, padded to lane-dense 128x128 (weights bf16, biases f32) ----
    w1, b1, w2, b2 = fc_params
    c_last, fc_len = w1.shape
    n_cls = w2.shape[1]
    w1p = jnp.zeros((CPAD, CPAD), jnp.float32).at[:c_last, :fc_len].set(w1).astype(jnp.bfloat16)
    b1p = jnp.zeros((1, CPAD), jnp.float32).at[0, :fc_len].set(b1)
    w2p = jnp.zeros((CPAD, CPAD), jnp.float32).at[:fc_len, :n_cls].set(w2).astype(jnp.bfloat16)
    b2p = jnp.zeros((1, CPAD), jnp.float32).at[0, :n_cls].set(b2)

    out = classifier_net_pallas(xbuf, wc, bc, mask, pool, w1p, b1p, w2p, b2p,
                                n_layers=n_layers, wp=Wp, rows=rows, row_off=row_off,
                                n_out_rows=n_out_rows)
    # Rows >= N of the pooled/head output contain bias-only garbage: keep this slice.
    return out[:N, :n_cls]


def reference_forward(x_nchw, conv_params, fc_params):
    """Pure-JAX f32 reference (same semantics as the PyTorch module in eval mode)."""
    x = jnp.transpose(x_nchw, (0, 2, 3, 1))
    for w_hwio, scale, bias in conv_params:
        y = jax.lax.conv_general_dilated(
            x, w_hwio, window_strides=(1, 1), padding="SAME",
            dimension_numbers=("NHWC", "HWIO", "NHWC"))
        x = jnp.maximum(y * scale + bias, 0.0)
    pooled = jnp.mean(x, axis=(1, 2))
    w1, b1, w2, b2 = fc_params
    h = jnp.maximum(pooled @ w1 + b1, 0.0)
    return h @ w2 + b2


# ----------------------------- parameter init ------------------------------


def init_params(key):
    filters = [8, 16, 16, 32, 64]
    fc_length = 16
    eps = 1e-5
    conv_params = []
    prev = 3
    for f in filters:
        key, k_w, k_b, k_g, k_be, k_m, k_v = jax.random.split(key, 7)
        w = jax.random.normal(k_w, (3, 3, prev, f), jnp.float32) / np.sqrt(9.0 * prev)
        conv_b = 0.1 * jax.random.normal(k_b, (f,), jnp.float32)
        gamma = 1.0 + 0.1 * jax.random.normal(k_g, (f,), jnp.float32)
        beta = 0.1 * jax.random.normal(k_be, (f,), jnp.float32)
        run_mean = 0.1 * jax.random.normal(k_m, (f,), jnp.float32)
        run_var = jnp.abs(1.0 + 0.1 * jax.random.normal(k_v, (f,), jnp.float32))
        # Fold eval-mode BatchNorm (and the conv bias) into a per-channel affine.
        scale = gamma / jnp.sqrt(run_var + eps)
        bias = (conv_b - run_mean) * scale + beta
        conv_params.append((w, scale, bias))
        prev = f

    key, k1, k2, k3, k4 = jax.random.split(key, 5)
    w1 = jax.random.normal(k1, (filters[-1], fc_length), jnp.float32) / np.sqrt(filters[-1])
    b1 = 0.1 * jax.random.normal(k2, (fc_length,), jnp.float32)
    w2 = jax.random.normal(k3, (fc_length, 2), jnp.float32) / np.sqrt(fc_length)
    b2 = 0.1 * jax.random.normal(k4, (2,), jnp.float32)
    return conv_params, (w1, b1, w2, b2)


# --------------------------------- main -------------------------------------


if __name__ == "__main__":
    key = jax.random.PRNGKey(0)
    key, k_x = jax.random.split(key)
    # Input matches the PyTorch module's expectation: NCHW with 3 channels.
    x = jax.random.normal(k_x, (2, 3, 16, 16), jnp.float32)

    conv_params, fc_params = init_params(key)

    fwd = jax.jit(classifier_net_forward)
    out = jax.block_until_ready(fwd(x, conv_params, fc_params))

    ref = jax.block_until_ready(reference_forward(x, conv_params, fc_params))
    max_diff = float(jnp.max(jnp.abs(out - ref)))
    assert out.shape == (2, 2), out.shape
    assert max_diff < 5e-2, f"mismatch vs reference: {max_diff}"

    print("KERNEL_OK")
</pallas_src>

<mosaic_0001>
module attributes {stable_mosaic.version = 11 : i64} {
  func.func @_net_kernel(%arg0: i32, %arg1: memref<696x128xf32, #tpu.memory_space<vmem>>, %arg2: memref<1152x128xbf16, #tpu.memory_space<vmem>>, %arg3: memref<1x1x128xf32, #tpu.memory_space<vmem>>, %arg4: memref<648x1xf32, #tpu.memory_space<vmem>>, %arg5: memref<8x648xbf16, #tpu.memory_space<vmem>>, %arg6: memref<128x128xbf16, #tpu.memory_space<vmem>>, %arg7: memref<1x128xf32, #tpu.memory_space<vmem>>, %arg8: memref<128x128xbf16, #tpu.memory_space<vmem>>, %arg9: memref<1x128xf32, #tpu.memory_space<vmem>>, %arg10: memref<8x128xf32, #tpu.memory_space<vmem>>, %arg11: memref<2x696x128xf32, #tpu.memory_space<vmem>>) attributes {dimension_semantics = [#tpu.dimension_semantics<arbitrary>], iteration_bounds = array<i64: 5>, scalar_prefetch = 0 : i64, scratch_operands = 1 : i64, tpu.core_type = #tpu.core_type<tc>, window_params = [{pipeline_mode = #tpu.pipeline_mode<synchronous>, transform_indices = @transform_0, window_bounds = array<i64: 696, 128>}, {transform_indices = @transform_1, window_bounds = array<i64: 1152, 128>}, {transform_indices = @transform_2, window_bounds = array<i64: 1, 1, 128>}, {pipeline_mode = #tpu.pipeline_mode<synchronous>, transform_indices = @transform_3, window_bounds = array<i64: 648, 1>}, {pipeline_mode = #tpu.pipeline_mode<synchronous>, transform_indices = @transform_4, window_bounds = array<i64: 8, 648>}, {pipeline_mode = #tpu.pipeline_mode<synchronous>, transform_indices = @transform_5, window_bounds = array<i64: 128, 128>}, {pipeline_mode = #tpu.pipeline_mode<synchronous>, transform_indices = @transform_6, window_bounds = array<i64: 1, 128>}, {pipeline_mode = #tpu.pipeline_mode<synchronous>, transform_indices = @transform_7, window_bounds = array<i64: 128, 128>}, {pipeline_mode = #tpu.pipeline_mode<synchronous>, transform_indices = @transform_8, window_bounds = array<i64: 1, 128>}, {pipeline_mode = #tpu.pipeline_mode<synchronous>, transform_indices = @transform_9, window_bounds = array<i64: 8, 128>}]} {
    %c0_i32 = arith.constant 0 : i32
    %0 = arith.cmpi eq, %arg0, %c0_i32 : i32
    %1 = arith.extui %0 : i1 to i32
    %c0_i32_0 = arith.constant 0 : i32
    %2 = arith.cmpi ne, %1, %c0_i32_0 : i32
    scf.if %2 {
      %c0_55 = arith.constant 0 : index
      %c0_56 = arith.constant 0 : index
      %82 = vector.load %arg1[%c0_55, %c0_56] : memref<696x128xf32, #tpu.memory_space<vmem>>, vector<696x128xf32>
      %c1 = arith.constant 1 : index
      %c0_57 = arith.constant 0 : index
      %c0_58 = arith.constant 0 : index
      %83 = vector.load %arg11[%c1, %c0_57, %c0_58] : memref<2x696x128xf32, #tpu.memory_space<vmem>>, vector<1x696x128xf32>
      %84 = vector.shape_cast %83 : vector<1x696x128xf32> to vector<696x128xf32>
      %85 = vector.shape_cast %82 : vector<696x128xf32> to vector<1x696x128xf32>
      tpu.vector_store %arg11[%c1, %c0_57, %c0_58], %85 {strides = array<i32>} : memref<2x696x128xf32, #tpu.memory_space<vmem>>, vector<1x696x128xf32>,
      %cst_59 = arith.constant 0.000000e+00 : f32
      %86 = vector.broadcast %cst_59 : f32 to vector<24x128xf32>
      %c0_i32_60 = arith.constant 0 : i32
      %c0_i32_61 = arith.constant 0 : i32
      %c0_i32_62 = arith.constant 0 : i32
      %87 = tpu.memref_slice %arg11[%c0_i32_60, %c0_i32_61, %c0_i32_62] : memref<2x696x128xf32, #tpu.memory_space<vmem>> -> memref<1x696x128xf32, #tpu.memory_space<vmem>>
      %88 = tpu.memref_squeeze %87 : memref<1x696x128xf32, #tpu.memory_space<vmem>> -> memref<696x128xf32, #tpu.memory_space<vmem>>
      %c0_63 = arith.constant 0 : index
      %c0_64 = arith.constant 0 : index
      %89 = vector.load %88[%c0_63, %c0_64] : memref<696x128xf32, #tpu.memory_space<vmem>>, vector<24x128xf32>
      tpu.vector_store %88[%c0_63, %c0_64], %86 {strides = array<i32>} : memref<696x128xf32, #tpu.memory_space<vmem>>, vector<24x128xf32>,
      %cst_65 = arith.constant 0.000000e+00 : f32
      %90 = vector.broadcast %cst_65 : f32 to vector<24x128xf32>
      %c0_i32_66 = arith.constant 0 : i32
      %c0_i32_67 = arith.constant 0 : i32
      %c0_i32_68 = arith.constant 0 : i32
      %91 = tpu.memref_slice %arg11[%c0_i32_66, %c0_i32_67, %c0_i32_68] : memref<2x696x128xf32, #tpu.memory_space<vmem>> -> memref<1x696x128xf32, #tpu.memory_space<vmem>>
      %92 = tpu.memref_squeeze %91 : memref<1x696x128xf32, #tpu.memory_space<vmem>> -> memref<696x128xf32, #tpu.memory_space<vmem>>
      %c672 = arith.constant 672 : index
      %c0_69 = arith.constant 0 : index
      %93 = vector.load %92[%c672, %c0_69] : memref<696x128xf32, #tpu.memory_space<vmem>>, vector<24x128xf32>
      tpu.vector_store %92[%c672, %c0_69], %90 {strides = array<i32>} : memref<696x128xf32, #tpu.memory_space<vmem>>, vector<24x128xf32>,
    } else {
    }
    %c1_i32 = arith.constant 1 : i32
    %3 = arith.addi %arg0, %c1_i32 : i32
    %c1_i32_1 = arith.constant 1 : i32
    %4 = arith.andi %3, %c1_i32_1 : i32
    %c0_i32_2 = arith.constant 0 : i32
    %c0_i32_3 = arith.constant 0 : i32
    %5 = tpu.memref_slice %arg11[%4, %c0_i32_2, %c0_i32_3] : memref<2x696x128xf32, #tpu.memory_space<vmem>> -> memref<1x696x128xf32, #tpu.memory_space<vmem>>
    %6 = tpu.memref_squeeze %5 : memref<1x696x128xf32, #tpu.memory_space<vmem>> -> memref<696x128xf32, #tpu.memory_space<vmem>>
    %c5 = arith.constant 5 : index
    %c0 = arith.constant 0 : index
    %7 = vector.load %6[%c5, %c0] : memref<696x128xf32, #tpu.memory_space<vmem>>, vector<648x128xf32>
    %8 = arith.truncf %7 : vector<648x128xf32> to vector<648x128xbf16>
    %c0_4 = arith.constant 0 : index
    %c0_5 = arith.constant 0 : index
    %9 = vector.load %arg2[%c0_4, %c0_5] : memref<1152x128xbf16, #tpu.memory_space<vmem>>, vector<128x128xbf16>
    %cst = arith.constant dense<0.000000e+00> : vector<648x128xf32>
    %10 = tpu.matmul %8, %9, %cst {dimension_numbers = #tpu.dot_dimension_numbers<[1], [0], [0], [1], [0, 0, 1, 1], [], []>} : vector<648x128xbf16>, vector<128x128xbf16>, vector<648x128xf32> -> vector<648x128xf32>
    %c0_i32_6 = arith.constant 0 : i32
    %c0_i32_7 = arith.constant 0 : i32
    %11 = tpu.memref_slice %arg11[%4, %c0_i32_6, %c0_i32_7] : memref<2x696x128xf32, #tpu.memory_space<vmem>> -> memref<1x696x128xf32, #tpu.memory_space<vmem>>
    %12 = tpu.memref_squeeze %11 : memref<1x696x128xf32, #tpu.memory_space<vmem>> -> memref<696x128xf32, #tpu.memory_space<vmem>>
    %c6 = arith.constant 6 : index
    %c0_8 = arith.constant 0 : index
    %13 = vector.load %12[%c6, %c0_8] : memref<696x128xf32, #tpu.memory_space<vmem>>, vector<648x128xf32>
    %14 = arith.truncf %13 : vector<648x128xf32> to vector<648x128xbf16>
    %c128 = arith.constant 128 : index
    %c0_9 = arith.constant 0 : index
    %15 = vector.load %arg2[%c128, %c0_9] : memref<1152x128xbf16, #tpu.memory_space<vmem>>, vector<128x128xbf16>
    %cst_10 = arith.constant dense<0.000000e+00> : vector<648x128xf32>
    %16 = tpu.matmul %14, %15, %cst_10 {dimension_numbers = #tpu.dot_dimension_numbers<[1], [0], [0], [1], [0, 0, 1, 1], [], []>} : vector<648x128xbf16>, vector<128x128xbf16>, vector<648x128xf32> -> vector<648x128xf32>
    %17 = arith.addf %10, %16 : vector<648x128xf32>
    %c0_i32_11 = arith.constant 0 : i32
    %c0_i32_12 = arith.constant 0 : i32
    %18 = tpu.memref_slice %arg11[%4, %c0_i32_11, %c0_i32_12] : memref<2x696x128xf32, #tpu.memory_space<vmem>> -> memref<1x696x128xf32, #tpu.memory_space<vmem>>
    %19 = tpu.memref_squeeze %18 : memref<1x696x128xf32, #tpu.memory_space<vmem>> -> memref<696x128xf32, #tpu.memory_space<vmem>>
    %c7 = arith.constant 7 : index
    %c0_13 = arith.constant 0 : index
    %20 = vector.load %19[%c7, %c0_13] : memref<696x128xf32, #tpu.memory_space<vmem>>, vector<648x128xf32>
    %21 = arith.truncf %20 : vector<648x128xf32> to vector<648x128xbf16>
    %c256 = arith.constant 256 : index
    %c0_14 = arith.constant 0 : index
    %22 = vector.load %arg2[%c256, %c0_14] : memref<1152x128xbf16, #tpu.memory_space<vmem>>, vector<128x128xbf16>
    %cst_15 = arith.constant dense<0.000000e+00> : vector<648x128xf32>
    %23 = tpu.matmul %21, %22, %cst_15 {dimension_numbers = #tpu.dot_dimension_numbers<[1], [0], [0], [1], [0, 0, 1, 1], [], []>} : vector<648x128xbf16>, vector<128x128xbf16>, vector<648x128xf32> -> vector<648x128xf32>
    %24 = arith.addf %17, %23 : vector<648x128xf32>
    %c0_i32_16 = arith.constant 0 : i32
    %c0_i32_17 = arith.constant 0 : i32
    %25 = tpu.memref_slice %arg11[%4, %c0_i32_16, %c0_i32_17] : memref<2x696x128xf32, #tpu.memory_space<vmem>> -> memref<1x696x128xf32, #tpu.memory_space<vmem>>
    %26 = tpu.memref_squeeze %25 : memref<1x696x128xf32, #tpu.memory_space<vmem>> -> memref<696x128xf32, #tpu.memory_space<vmem>>
    %c23 = arith.constant 23 : index
    %c0_18 = arith.constant 0 : index
    %27 = vector.load %26[%c23, %c0_18] : memref<696x128xf32, #tpu.memory_space<vmem>>, vector<648x128xf32>
    %28 = arith.truncf %27 : vector<648x128xf32> to vector<648x128xbf16>
    %c384 = arith.constant 384 : index
    %c0_19 = arith.constant 0 : index
    %29 = vector.load %arg2[%c384, %c0_19] : memref<1152x128xbf16, #tpu.memory_space<vmem>>, vector<128x128xbf16>
    %cst_20 = arith.constant dense<0.000000e+00> : vector<648x128xf32>
    %30 = tpu.matmul %28, %29, %cst_20 {dimension_numbers = #tpu.dot_dimension_numbers<[1], [0], [0], [1], [0, 0, 1, 1], [], []>} : vector<648x128xbf16>, vector<128x128xbf16>, vector<648x128xf32> -> vector<648x128xf32>
    %31 = arith.addf %24, %30 : vector<648x128xf32>
    %c0_i32_21 = arith.constant 0 : i32
    %c0_i32_22 = arith.constant 0 : i32
    %32 = tpu.memref_slice %arg11[%4, %c0_i32_21, %c0_i32_22] : memref<2x696x128xf32, #tpu.memory_space<vmem>> -> memref<1x696x128xf32, #tpu.memory_space<vmem>>
    %33 = tpu.memref_squeeze %32 : memref<1x696x128xf32, #tpu.memory_space<vmem>> -> memref<696x128xf32, #tpu.memory_space<vmem>>
    %c24 = arith.constant 24 : index
    %c0_23 = arith.constant 0 : index
    %34 = vector.load %33[%c24, %c0_23] : memref<696x128xf32, #tpu.memory_space<vmem>>, vector<648x128xf32>
    %35 = arith.truncf %34 : vector<648x128xf32> to vector<648x128xbf16>
    %c512 = arith.constant 512 : index
    %c0_24 = arith.constant 0 : index
    %36 = vector.load %arg2[%c512, %c0_24] : memref<1152x128xbf16, #tpu.memory_space<vmem>>, vector<128x128xbf16>
    %cst_25 = arith.constant dense<0.000000e+00> : vector<648x128xf32>
    %37 = tpu.matmul %35, %36, %cst_25 {dimension_numbers = #tpu.dot_dimension_numbers<[1], [0], [0], [1], [0, 0, 1, 1], [], []>} : vector<648x128xbf16>, vector<128x128xbf16>, vector<648x128xf32> -> vector<648x128xf32>
    %38 = arith.addf %31, %37 : vector<648x128xf32>
    %c0_i32_26 = arith.constant 0 : i32
    %c0_i32_27 = arith.constant 0 : i32
    %39 = tpu.memref_slice %arg11[%4, %c0_i32_26, %c0_i32_27] : memref<2x696x128xf32, #tpu.memory_space<vmem>> -> memref<1x696x128xf32, #tpu.memory_space<vmem>>
    %40 = tpu.memref_squeeze %39 : memref<1x696x128xf32, #tpu.memory_space<vmem>> -> memref<696x128xf32, #tpu.memory_space<vmem>>
    %c25 = arith.constant 25 : index
    %c0_28 = arith.constant 0 : index
    %41 = vector.load %40[%c25, %c0_28] : memref<696x128xf32, #tpu.memory_space<vmem>>, vector<648x128xf32>
    %42 = arith.truncf %41 : vector<648x128xf32> to vector<648x128xbf16>
    %c640 = arith.constant 640 : index
    %c0_29 = arith.constant 0 : index
    %43 = vector.load %arg2[%c640, %c0_29] : memref<1152x128xbf16, #tpu.memory_space<vmem>>, vector<128x128xbf16>
    %cst_30 = arith.constant dense<0.000000e+00> : vector<648x128xf32>
    %44 = tpu.matmul %42, %43, %cst_30 {dimension_numbers = #tpu.dot_dimension_numbers<[1], [0], [0], [1], [0, 0, 1, 1], [], []>} : vector<648x128xbf16>, vector<128x128xbf16>, vector<648x128xf32> -> vector<648x128xf32>
    %45 = arith.addf %38, %44 : vector<648x128xf32>
    %c0_i32_31 = arith.constant 0 : i32
    %c0_i32_32 = arith.constant 0 : i32
    %46 = tpu.memref_slice %arg11[%4, %c0_i32_31, %c0_i32_32] : memref<2x696x128xf32, #tpu.memory_space<vmem>> -> memref<1x696x128xf32, #tpu.memory_space<vmem>>
    %47 = tpu.memref_squeeze %46 : memref<1x696x128xf32, #tpu.memory_space<vmem>> -> memref<696x128xf32, #tpu.memory_space<vmem>>
    %c41 = arith.constant 41 : index
    %c0_33 = arith.constant 0 : index
    %48 = vector.load %47[%c41, %c0_33] : memref<696x128xf32, #tpu.memory_space<vmem>>, vector<648x128xf32>
    %49 = arith.truncf %48 : vector<648x128xf32> to vector<648x128xbf16>
    %c768 = arith.constant 768 : index
    %c0_34 = arith.constant 0 : index
    %50 = vector.load %arg2[%c768, %c0_34] : memref<1152x128xbf16, #tpu.memory_space<vmem>>, vector<128x128xbf16>
    %cst_35 = arith.constant dense<0.000000e+00> : vector<648x128xf32>
    %51 = tpu.matmul %49, %50, %cst_35 {dimension_numbers = #tpu.dot_dimension_numbers<[1], [0], [0], [1], [0, 0, 1, 1], [], []>} : vector<648x128xbf16>, vector<128x128xbf16>, vector<648x128xf32> -> vector<648x128xf32>
    %52 = arith.addf %45, %51 : vector<648x128xf32>
    %c0_i32_36 = arith.constant 0 : i32
    %c0_i32_37 = arith.constant 0 : i32
    %53 = tpu.memref_slice %arg11[%4, %c0_i32_36, %c0_i32_37] : memref<2x696x128xf32, #tpu.memory_space<vmem>> -> memref<1x696x128xf32, #tpu.memory_space<vmem>>
    %54 = tpu.memref_squeeze %53 : memref<1x696x128xf32, #tpu.memory_space<vmem>> -> memref<696x128xf32, #tpu.memory_space<vmem>>
    %c42 = arith.constant 42 : index
    %c0_38 = arith.constant 0 : index
    %55 = vector.load %54[%c42, %c0_38] : memref<696x128xf32, #tpu.memory_space<vmem>>, vector<648x128xf32>
    %56 = arith.truncf %55 : vector<648x128xf32> to vector<648x128xbf16>
    %c896 = arith.constant 896 : index
    %c0_39 = arith.constant 0 : index
    %57 = vector.load %arg2[%c896, %c0_39] : memref<1152x128xbf16, #tpu.memory_space<vmem>>, vector<128x128xbf16>
    %cst_40 = arith.constant dense<0.000000e+00> : vector<648x128xf32>
    %58 = tpu.matmul %56, %57, %cst_40 {dimension_numbers = #tpu.dot_dimension_numbers<[1], [0], [0], [1], [0, 0, 1, 1], [], []>} : vector<648x128xbf16>, vector<128x128xbf16>, vector<648x128xf32> -> vector<648x128xf32>
    %59 = arith.addf %52, %58 : vector<648x128xf32>
    %c0_i32_41 = arith.constant 0 : i32
    %c0_i32_42 = arith.constant 0 : i32
    %60 = tpu.memref_slice %arg11[%4, %c0_i32_41, %c0_i32_42] : memref<2x696x128xf32, #tpu.memory_space<vmem>> -> memref<1x696x128xf32, #tpu.memory_space<vmem>>
    %61 = tpu.memref_squeeze %60 : memref<1x696x128xf32, #tpu.memory_space<vmem>> -> memref<696x128xf32, #tpu.memory_space<vmem>>
    %c43 = arith.constant 43 : index
    %c0_43 = arith.constant 0 : index
    %62 = vector.load %61[%c43, %c0_43] : memref<696x128xf32, #tpu.memory_space<vmem>>, vector<648x128xf32>
    %63 = arith.truncf %62 : vector<648x128xf32> to vector<648x128xbf16>
    %c1024 = arith.constant 1024 : index
    %c0_44 = arith.constant 0 : index
    %64 = vector.load %arg2[%c1024, %c0_44] : memref<1152x128xbf16, #tpu.memory_space<vmem>>, vector<128x128xbf16>
    %cst_45 = arith.constant dense<0.000000e+00> : vector<648x128xf32>
    %65 = tpu.matmul %63, %64, %cst_45 {dimension_numbers = #tpu.dot_dimension_numbers<[1], [0], [0], [1], [0, 0, 1, 1], [], []>} : vector<648x128xbf16>, vector<128x128xbf16>, vector<648x128xf32> -> vector<648x128xf32>
    %66 = arith.addf %59, %65 : vector<648x128xf32>
    %c0_46 = arith.constant 0 : index
    %c0_47 = arith.constant 0 : index
    %c0_48 = arith.constant 0 : index
    %67 = vector.load %arg3[%c0_46, %c0_47, %c0_48] : memref<1x1x128xf32, #tpu.memory_space<vmem>>, vector<1x1x128xf32>
    %68 = vector.shape_cast %67 : vector<1x1x128xf32> to vector<1x128xf32>
    %69 = vector.broadcast %68 : vector<1x128xf32> to vector<648x128xf32>
    %70 = arith.addf %66, %69 : vector<648x128xf32>
    %cst_49 = arith.constant 0.000000e+00 : f32
    %71 = vector.broadcast %cst_49 : f32 to vector<648x128xf32>
    %72 = arith.maximumf %70, %71 : vector<648x128xf32>
    %c0_50 = arith.constant 0 : index
    %c0_51 = arith.constant 0 : index
    %73 = vector.load %arg4[%c0_50, %c0_51] : memref<648x1xf32, #tpu.memory_space<vmem>>, vector<648x1xf32>
    %74 = vector.broadcast %73 : vector<648x1xf32> to vector<648x128xf32>
    %75 = arith.mulf %72, %74 : vector<648x128xf32>
    %c4_i32 = arith.constant 4 : i32
    %76 = arith.cmpi slt, %arg0, %c4_i32 : i32
    %77 = arith.extui %76 : i1 to i32
    %c0_i32_52 = arith.constant 0 : i32
    %78 = arith.cmpi ne, %77, %c0_i32_52 : i32
    scf.if %78 {
      %c1_i32_55 = arith.constant 1 : i32
      %82 = arith.andi %arg0, %c1_i32_55 : i32
      %c0_i32_56 = arith.constant 0 : i32
      %c0_i32_57 = arith.constant 0 : i32
      %83 = tpu.memref_slice %arg11[%82, %c0_i32_56, %c0_i32_57] : memref<2x696x128xf32, #tpu.memory_space<vmem>> -> memref<1x696x128xf32, #tpu.memory_space<vmem>>
      %84 = tpu.memref_squeeze %83 : memref<1x696x128xf32, #tpu.memory_space<vmem>> -> memref<696x128xf32, #tpu.memory_space<vmem>>
      %c24_58 = arith.constant 24 : index
      %c0_59 = arith.constant 0 : index
      %85 = vector.load %84[%c24_58, %c0_59] : memref<696x128xf32, #tpu.memory_space<vmem>>, vector<648x128xf32>
      tpu.vector_store %84[%c24_58, %c0_59], %75 {strides = array<i32>} : memref<696x128xf32, #tpu.memory_space<vmem>>, vector<648x128xf32>,
    } else {
    }
    %c4_i32_53 = arith.constant 4 : i32
    %79 = arith.cmpi eq, %arg0, %c4_i32_53 : i32
    %80 = arith.extui %79 : i1 to i32
    %c0_i32_54 = arith.constant 0 : i32
    %81 = arith.cmpi ne, %80, %c0_i32_54 : i32
    scf.if %81 {
      %c0_55 = arith.constant 0 : index
      %c0_56 = arith.constant 0 : index
      %82 = vector.load %arg5[%c0_55, %c0_56] : memref<8x648xbf16, #tpu.memory_space<vmem>>, vector<8x648xbf16>
      %83 = arith.truncf %75 : vector<648x128xf32> to vector<648x128xbf16>
      %cst_57 = arith.constant dense<0.000000e+00> : vector<8x128xf32>
      %84 = tpu.matmul %82, %83, %cst_57 {dimension_numbers = #tpu.dot_dimension_numbers<[1], [0], [0], [1], [0, 0, 1, 1], [], []>} : vector<8x648xbf16>, vector<648x128xbf16>, vector<8x128xf32> -> vector<8x128xf32>
      %85 = arith.truncf %84 : vector<8x128xf32> to vector<8x128xbf16>
      %c0_58 = arith.constant 0 : index
      %c0_59 = arith.constant 0 : index
      %86 = vector.load %arg6[%c0_58, %c0_59] : memref<128x128xbf16, #tpu.memory_space<vmem>>, vector<128x128xbf16>
      %cst_60 = arith.constant dense<0.000000e+00> : vector<8x128xf32>
      %87 = tpu.matmul %85, %86, %cst_60 {dimension_numbers = #tpu.dot_dimension_numbers<[1], [0], [0], [1], [0, 0, 1, 1], [], []>} : vector<8x128xbf16>, vector<128x128xbf16>, vector<8x128xf32> -> vector<8x128xf32>
      %c0_61 = arith.constant 0 : index
      %c0_62 = arith.constant 0 : index
      %88 = vector.load %arg7[%c0_61, %c0_62] : memref<1x128xf32, #tpu.memory_space<vmem>>, vector<1x128xf32>
      %89 = vector.broadcast %88 : vector<1x128xf32> to vector<8x128xf32>
      %90 = arith.addf %87, %89 : vector<8x128xf32>
      %cst_63 = arith.constant 0.000000e+00 : f32
      %91 = vector.broadcast %cst_63 : f32 to vector<8x128xf32>
      %92 = arith.maximumf %90, %91 : vector<8x128xf32>
      %93 = arith.truncf %92 : vector<8x128xf32> to vector<8x128xbf16>
      %c0_64 = arith.constant 0 : index
      %c0_65 = arith.constant 0 : index
      %94 = vector.load %arg8[%c0_64, %c0_65] : memref<128x128xbf16, #tpu.memory_space<vmem>>, vector<128x128xbf16>
      %cst_66 = arith.constant dense<0.000000e+00> : vector<8x128xf32>
      %95 = tpu.matmul %93, %94, %cst_66 {dimension_numbers = #tpu.dot_dimension_numbers<[1], [0], [0], [1], [0, 0, 1, 1], [], []>} : vector<8x128xbf16>, vector<128x128xbf16>, vector<8x128xf32> -> vector<8x128xf32>
      %c0_67 = arith.constant 0 : index
      %c0_68 = arith.constant 0 : index
      %96 = vector.load %arg9[%c0_67, %c0_68] : memref<1x128xf32, #tpu.memory_space<vmem>>, vector<1x128xf32>
      %97 = vector.broadcast %96 : vector<1x128xf32> to vector<8x128xf32>
      %98 = arith.addf %95, %97 : vector<8x128xf32>
      %c0_69 = arith.constant 0 : index
      %c0_70 = arith.constant 0 : index
      %99 = vector.load %arg10[%c0_69, %c0_70] : memref<8x128xf32, #tpu.memory_space<vmem>>, vector<8x128xf32>
      tpu.vector_store %arg10[%c0_69, %c0_70], %98 {strides = array<i32>} : memref<8x128xf32, #tpu.memory_space<vmem>>, vector<8x128xf32>,
    } else {
    }
    return
  }
  func.func @transform_0(%arg0: i32) -> (i32, i32) {
    %c0_i32 = arith.constant 0 : i32
    %c0_i32_0 = arith.constant 0 : i32
    %c0_i32_1 = arith.constant 0 : i32
    return %c0_i32, %c0_i32_0 : i32, i32
  }
  func.func @transform_1(%arg0: i32) -> (i32, i32) {
    %c0_i32 = arith.constant 0 : i32
    %c0_i32_0 = arith.constant 0 : i32
    return %arg0, %c0_i32 : i32, i32
  }
  func.func @transform_2(%arg0: i32) -> (i32, i32, i32) {
    %c0_i32 = arith.constant 0 : i32
    %c0_i32_0 = arith.constant 0 : i32
    %c0_i32_1 = arith.constant 0 : i32
    return %arg0, %c0_i32, %c0_i32_0 : i32, i32, i32
  }
  func.func @transform_3(%arg0: i32) -> (i32, i32) {
    %c0_i32 = arith.constant 0 : i32
    %c0_i32_0 = arith.constant 0 : i32
    %c0_i32_1 = arith.constant 0 : i32
    return %c0_i32, %c0_i32_0 : i32, i32
  }
  func.func @transform_4(%arg0: i32) -> (i32, i32) {
    %c0_i32 = arith.constant 0 : i32
    %c0_i32_0 = arith.constant 0 : i32
    %c0_i32_1 = arith.constant 0 : i32
    return %c0_i32, %c0_i32_0 : i32, i32
  }
  func.func @transform_5(%arg0: i32) -> (i32, i32) {
    %c0_i32 = arith.constant 0 : i32
    %c0_i32_0 = arith.constant 0 : i32
    %c0_i32_1 = arith.constant 0 : i32
    return %c0_i32, %c0_i32_0 : i32, i32
  }
  func.func @transform_6(%arg0: i32) -> (i32, i32) {
    %c0_i32 = arith.constant 0 : i32
    %c0_i32_0 = arith.constant 0 : i32
    %c0_i32_1 = arith.constant 0 : i32
    return %c0_i32, %c0_i32_0 : i32, i32
  }
  func.func @transform_7(%arg0: i32) -> (i32, i32) {
    %c0_i32 = arith.constant 0 : i32
    %c0_i32_0 = arith.constant 0 : i32
    %c0_i32_1 = arith.constant 0 : i32
    return %c0_i32, %c0_i32_0 : i32, i32
  }
  func.func @transform_8(%arg0: i32) -> (i32, i32) {
    %c0_i32 = arith.constant 0 : i32
    %c0_i32_0 = arith.constant 0 : i32
    %c0_i32_1 = arith.constant 0 : i32
    return %c0_i32, %c0_i32_0 : i32, i32
  }
  func.func @transform_9(%arg0: i32) -> (i32, i32) {
    %c0_i32 = arith.constant 0 : i32
    %c0_i32_0 = arith.constant 0 : i32
    %c0_i32_1 = arith.constant 0 : i32
    return %c0_i32, %c0_i32_0 : i32, i32
  }
}

</mosaic_0001>

<llo_original>
// kernel: classifier_net_forward.1
$region0: #{classifier_net_forward.1}
  #allocation0 [shape = 'u32[]', space=smem, size = 0x4, offset = 0x4, fixed_abs, tag = 'smem constant byte address 0x4 - core index']
  #allocation1 [shape = 'u32[72,128]{1,0:T(1,128)}', space=vmem, size = 0x9000, scoped, tag = 'internal scratch']
  #allocation2 [shape = 'f32[2,696,128]{2,1,0:T(8,128)}', space=vmem, size = 0xae000, scoped, tag = 'scratch operand']
  %s0 = inlined_call_operand.vmem [shape: f32[696,128], index: 0, kind: input, shape index: {}]
  %s1 = inlined_call_operand.vmem [shape: bf16[5760,128], index: 1, kind: input, shape index: {}]
  %s2 = inlined_call_operand.vmem [shape: f32[5,1,128], index: 2, kind: input, shape index: {}]
  %s3 = inlined_call_operand.vmem [shape: f32[648,1], index: 3, kind: input, shape index: {}]
  %s4 = inlined_call_operand.vmem [shape: bf16[8,648], index: 4, kind: input, shape index: {}]
  %s5 = inlined_call_operand.vmem [shape: bf16[128,128], index: 5, kind: input, shape index: {}]
  %s6 = inlined_call_operand.vmem [shape: f32[1,128], index: 6, kind: input, shape index: {}]
  %s7 = inlined_call_operand.vmem [shape: bf16[128,128], index: 7, kind: input, shape index: {}]
  %s8 = inlined_call_operand.vmem [shape: f32[1,128], index: 8, kind: input, shape index: {}]
  %s9 = inlined_call_operand.vmem [shape: f32[8,128], index: 9, kind: output, shape index: {}]
  %s10 = sld [smem:[#allocation0]]
  $region81: #{classifier_net_forward.1} parent=0
    _
  %s12 = ssub.s32 1, %s10
  %s13 = scalar_select 0, %s12, %s10
  loop: start=0, step=1, limit=7
  $region2: #{classifier_net_forward.1} parent=0 // loop_pre_header
    _
  $region3: #{classifier_net_forward.1} parent=0 // loop_header
    %s15 = sphi 0, %s19
    %p16 = scmp.ge.s32.totalorder %s15, 7
    %s23 = sphi 0, %s23
    %s25 = sphi 0, %s23
    %s26 = sphi 0, %s25
    %s40 = sphi 0, %s26
    %s46 = sphi 0, %s48
    %s49 = sphi 0, %s46
    %s50 = sphi 0, %s49
    %s66 = sphi 0, %s50
    %s72 = sphi 0, %s74
    %s75 = sphi 0, %s72
    %s76 = sphi 0, %s75
    %s92 = sphi 0, %s76
    %s96 = sphi 0, %s96
    %s98 = sphi 0, %s96
    %s99 = sphi 0, %s98
    %s113 = sphi 0, %s99
    %s117 = sphi 0, %s117
    %s119 = sphi 0, %s117
    %s120 = sphi 0, %s119
    %s134 = sphi 0, %s120
    %s138 = sphi 0, %s138
    %s140 = sphi 0, %s138
    %s141 = sphi 0, %s140
    %s155 = sphi 0, %s141
    %s159 = sphi 0, %s159
    %s161 = sphi 0, %s159
    %s162 = sphi 0, %s161
    %s176 = sphi 0, %s162
    %s180 = sphi 0, %s180
    %s182 = sphi 0, %s180
    %s183 = sphi 0, %s182
    %s197 = sphi 0, %s183
    %s201 = sphi 0, %s201
    %s203 = sphi 0, %s201
    %s204 = sphi 0, %s203
    %s218 = sphi 0, %s204
    %s222 = sphi 0, %s222
    %s224 = sphi 0, %s222
    %s225 = sphi 0, %s224
    %s239 = sphi 0, %s225
  $region4: #{classifier_net_forward.1} parent=0 // loop_header_branch
    %18 = sbr.rel (%p16) target = $region8
  $region5: #{classifier_net_forward.1} parent=0 // loop_body
    %s20 = ssub.s32 %s15, 1
    %s21 = ssub.s32 %s15, 2
    %s22 = sadd.s32 %s15, 1
    %s24 = sadd.s32 %s23, 1
    %p27 = scmp.eq.s32.totalorder %s15, 4
    %p28 = scmp.ne.s32.totalorder %s23, %s25
    %p29 = scmp.eq.s32.totalorder %s15, 0
    %p30 = por %p28, %p29
    %p31 = scmp.ne.s32.totalorder %s23, %s25
    %p32 = scmp.eq.s32.totalorder %s20, 4
    %p33 = por %p31, %p32
    %p34 = scmp.ne.s32.totalorder %s25, %s26
    %p35 = scmp.eq.s32.totalorder %s20, 0
    %p36 = por %p34, %p35
    %p37 = scmp.ne.s32.totalorder %s25, %s26
    %p38 = scmp.eq.s32.totalorder %s21, 4
    %p39 = por %p37, %p38
    %p41 = scmp.ne.s32.totalorder %s26, %s40
    %p42 = scmp.eq.s32.totalorder %s21, 0
    %p43 = por %p41, %p42
    %s44 = ssub.s32 %s15, %s22
    %p45 = scmp.eq.s32.totalorder %s44, 0
    %s47 = sadd.s32 %s46, 1
    %s48 = scalar_select %p45, %s46, %s47
    %p51 = pneg %p45
    %p52 = scmp.eq.s32.totalorder %s15, 4
    %p53 = por %p51, %p52
    %p54 = scmp.ne.s32.totalorder %s46, %s49
    %p55 = scmp.eq.s32.totalorder %s15, 0
    %p56 = por %p54, %p55
    %p57 = scmp.ne.s32.totalorder %s46, %s49
    %p58 = scmp.eq.s32.totalorder %s20, 4
    %p59 = por %p57, %p58
    %p60 = scmp.ne.s32.totalorder %s49, %s50
    %p61 = scmp.eq.s32.totalorder %s20, 0
    %p62 = por %p60, %p61
    %p63 = scmp.ne.s32.totalorder %s49, %s50
    %p64 = scmp.eq.s32.totalorder %s21, 4
    %p65 = por %p63, %p64
    %p67 = scmp.ne.s32.totalorder %s50, %s66
    %p68 = scmp.eq.s32.totalorder %s21, 0
    %p69 = por %p67, %p68
    %s70 = ssub.s32 %s15, %s22
    %p71 = scmp.eq.s32.totalorder %s70, 0
    %s73 = sadd.s32 %s72, 1
    %s74 = scalar_select %p71, %s72, %s73
    %p77 = pneg %p71
    %p78 = scmp.eq.s32.totalorder %s15, 4
    %p79 = por %p77, %p78
    %p80 = scmp.ne.s32.totalorder %s72, %s75
    %p81 = scmp.eq.s32.totalorder %s15, 0
    %p82 = por %p80, %p81
    %p83 = scmp.ne.s32.totalorder %s72, %s75
    %p84 = scmp.eq.s32.totalorder %s20, 4
    %p85 = por %p83, %p84
    %p86 = scmp.ne.s32.totalorder %s75, %s76
    %p87 = scmp.eq.s32.totalorder %s20, 0
    %p88 = por %p86, %p87
    %p89 = scmp.ne.s32.totalorder %s75, %s76
    %p90 = scmp.eq.s32.totalorder %s21, 4
    %p91 = por %p89, %p90
    %p93 = scmp.ne.s32.totalorder %s76, %s92
    %p94 = scmp.eq.s32.totalorder %s21, 0
    %p95 = por %p93, %p94
    %s97 = sadd.s32 %s96, 1
    %p100 = scmp.eq.s32.totalorder %s15, 4
    %p101 = scmp.ne.s32.totalorder %s96, %s98
    %p102 = scmp.eq.s32.totalorder %s15, 0
    %p103 = por %p101, %p102
    %p104 = scmp.ne.s32.totalorder %s96, %s98
    %p105 = scmp.eq.s32.totalorder %s20, 4
    %p106 = por %p104, %p105
    %p107 = scmp.ne.s32.totalorder %s98, %s99
    %p108 = scmp.eq.s32.totalorder %s20, 0
    %p109 = por %p107, %p108
    %p110 = scmp.ne.s32.totalorder %s98, %s99
    %p111 = scmp.eq.s32.totalorder %s21, 4
    %p112 = por %p110, %p111
    %p114 = scmp.ne.s32.totalorder %s99, %s113
    %p115 = scmp.eq.s32.totalorder %s21, 0
    %p116 = por %p114, %p115
    %s118 = sadd.s32 %s117, 1
    %p121 = scmp.eq.s32.totalorder %s15, 4
    %p122 = scmp.ne.s32.totalorder %s117, %s119
    %p123 = scmp.eq.s32.totalorder %s15, 0
    %p124 = por %p122, %p123
    %p125 = scmp.ne.s32.totalorder %s117, %s119
    %p126 = scmp.eq.s32.totalorder %s20, 4
    %p127 = por %p125, %p126
    %p128 = scmp.ne.s32.totalorder %s119, %s120
    %p129 = scmp.eq.s32.totalorder %s20, 0
    %p130 = por %p128, %p129
    %p131 = scmp.ne.s32.totalorder %s119, %s120
    %p132 = scmp.eq.s32.totalorder %s21, 4
    %p133 = por %p131, %p132
    %p135 = scmp.ne.s32.totalorder %s120, %s134
    %p136 = scmp.eq.s32.totalorder %s21, 0
    %p137 = por %p135, %p136
    %s139 = sadd.s32 %s138, 1
    %p142 = scmp.eq.s32.totalorder %s15, 4
    %p143 = scmp.ne.s32.totalorder %s138, %s140
    %p144 = scmp.eq.s32.totalorder %s15, 0
    %p145 = por %p143, %p144
    %p146 = scmp.ne.s32.totalorder %s138, %s140
    %p147 = scmp.eq.s32.totalorder %s20, 4
    %p148 = por %p146, %p147
    %p149 = scmp.ne.s32.totalorder %s140, %s141
    %p150 = scmp.eq.s32.totalorder %s20, 0
    %p151 = por %p149, %p150
    %p152 = scmp.ne.s32.totalorder %s140, %s141
    %p153 = scmp.eq.s32.totalorder %s21, 4
    %p154 = por %p152, %p153
    %p156 = scmp.ne.s32.totalorder %s141, %s155
    %p157 = scmp.eq.s32.totalorder %s21, 0
    %p158 = por %p156, %p157
    %s160 = sadd.s32 %s159, 1
    %p163 = scmp.eq.s32.totalorder %s15, 4
    %p164 = scmp.ne.s32.totalorder %s159, %s161
    %p165 = scmp.eq.s32.totalorder %s15, 0
    %p166 = por %p164, %p165
    %p167 = scmp.ne.s32.totalorder %s159, %s161
    %p168 = scmp.eq.s32.totalorder %s20, 4
    %p169 = por %p167, %p168
    %p170 = scmp.ne.s32.totalorder %s161, %s162
    %p171 = scmp.eq.s32.totalorder %s20, 0
    %p172 = por %p170, %p171
    %p173 = scmp.ne.s32.totalorder %s161, %s162
    %p174 = scmp.eq.s32.totalorder %s21, 4
    %p175 = por %p173, %p174
    %p177 = scmp.ne.s32.totalorder %s162, %s176
    %p178 = scmp.eq.s32.totalorder %s21, 0
    %p179 = por %p177, %p178
    %s181 = sadd.s32 %s180, 1
    %p184 = scmp.eq.s32.totalorder %s15, 4
    %p185 = scmp.ne.s32.totalorder %s180, %s182
    %p186 = scmp.eq.s32.totalorder %s15, 0
    %p187 = por %p185, %p186
    %p188 = scmp.ne.s32.totalorder %s180, %s182
    %p189 = scmp.eq.s32.totalorder %s20, 4
    %p190 = por %p188, %p189
    %p191 = scmp.ne.s32.totalorder %s182, %s183
    %p192 = scmp.eq.s32.totalorder %s20, 0
    %p193 = por %p191, %p192
    %p194 = scmp.ne.s32.totalorder %s182, %s183
    %p195 = scmp.eq.s32.totalorder %s21, 4
    %p196 = por %p194, %p195
    %p198 = scmp.ne.s32.totalorder %s183, %s197
    %p199 = scmp.eq.s32.totalorder %s21, 0
    %p200 = por %p198, %p199
    %s202 = sadd.s32 %s201, 1
    %p205 = scmp.eq.s32.totalorder %s15, 4
    %p206 = scmp.ne.s32.totalorder %s201, %s203
    %p207 = scmp.eq.s32.totalorder %s15, 0
    %p208 = por %p206, %p207
    %p209 = scmp.ne.s32.totalorder %s201, %s203
    %p210 = scmp.eq.s32.totalorder %s20, 4
    %p211 = por %p209, %p210
    %p212 = scmp.ne.s32.totalorder %s203, %s204
    %p213 = scmp.eq.s32.totalorder %s20, 0
    %p214 = por %p212, %p213
    %p215 = scmp.ne.s32.totalorder %s203, %s204
    %p216 = scmp.eq.s32.totalorder %s21, 4
    %p217 = por %p215, %p216
    %p219 = scmp.ne.s32.totalorder %s204, %s218
    %p220 = scmp.eq.s32.totalorder %s21, 0
    %p221 = por %p219, %p220
    %s223 = sadd.s32 %s222, 1
    %p226 = scmp.eq.s32.totalorder %s15, 4
    %p227 = scmp.ne.s32.totalorder %s222, %s224
    %p228 = scmp.eq.s32.totalorder %s15, 0
    %p229 = por %p227, %p228
    %p230 = scmp.ne.s32.totalorder %s222, %s224
    %p231 = scmp.eq.s32.totalorder %s20, 4
    %p232 = por %p230, %p231
    %p233 = scmp.ne.s32.totalorder %s224, %s225
    %p234 = scmp.eq.s32.totalorder %s20, 0
    %p235 = por %p233, %p234
    %p236 = scmp.ne.s32.totalorder %s224, %s225
    %p237 = scmp.eq.s32.totalorder %s21, 4
    %p238 = por %p236, %p237
    %p240 = scmp.ne.s32.totalorder %s225, %s239
    %p241 = scmp.eq.s32.totalorder %s21, 0
    %p242 = por %p240, %p241
    %p243 = scmp.le.s32.totalorder 1, %s15
    %p244 = scmp.lt.s32.totalorder %s15, 6
    %p245 = pnand %p243, %p244
    %p246 = pneg %p245
    // Predicated region
    $region9: #{classifier_net_forward.1} parent=5 // pred_check
      _
    $region10: #{classifier_net_forward.1} parent=5 // pred_check_branch
      %248 = sbr.rel (%p245) target = $region12
    $region11: #{classifier_net_forward.1} parent=5 // pred_region
      %s249 = ssub.s32 %s15, 1
      // Predicated region
      $region13: #{classifier_net_forward.1} parent=11 // pred_check
        %p250 = pneg %p36
      $region14: #{classifier_net_forward.1} parent=11 // pred_check_branch
        %252 = sbr.rel (%p250) target = $region16
      $region15: #{classifier_net_forward.1} parent=11 // pred_region
        _
      $region16: #{classifier_net_forward.1} parent=11 // pred_fallthru
        _
      // Predicated region
      $region17: #{classifier_net_forward.1} parent=11 // pred_check
        %p253 = pneg %p109
      $region18: #{classifier_net_forward.1} parent=11 // pred_check_branch
        %255 = sbr.rel (%p253) target = $region20
      $region19: #{classifier_net_forward.1} parent=11 // pred_region
        _
      $region20: #{classifier_net_forward.1} parent=11 // pred_fallthru
        _
      // Predicated region
      $region21: #{classifier_net_forward.1} parent=11 // pred_check
        %p256 = pneg %p130
      $region22: #{classifier_net_forward.1} parent=11 // pred_check_branch
        %258 = sbr.rel (%p256) target = $region24
      $region23: #{classifier_net_forward.1} parent=11 // pred_region
        _
      $region24: #{classifier_net_forward.1} parent=11 // pred_fallthru
        _
      // Predicated region
      $region25: #{classifier_net_forward.1} parent=11 // pred_check
        %p259 = pneg %p151
      $region26: #{classifier_net_forward.1} parent=11 // pred_check_branch
        %261 = sbr.rel (%p259) target = $region28
      $region27: #{classifier_net_forward.1} parent=11 // pred_region
        _
      $region28: #{classifier_net_forward.1} parent=11 // pred_fallthru
        _
      // Predicated region
      $region29: #{classifier_net_forward.1} parent=11 // pred_check
        %p262 = pneg %p172
      $region30: #{classifier_net_forward.1} parent=11 // pred_check_branch
        %264 = sbr.rel (%p262) target = $region32
      $region31: #{classifier_net_forward.1} parent=11 // pred_region
        _
      $region32: #{classifier_net_forward.1} parent=11 // pred_fallthru
        _
      // Predicated region
      $region33: #{classifier_net_forward.1} parent=11 // pred_check
        %p265 = pneg %p193
      $region34: #{classifier_net_forward.1} parent=11 // pred_check_branch
        %267 = sbr.rel (%p265) target = $region36
      $region35: #{classifier_net_forward.1} parent=11 // pred_region
        _
      $region36: #{classifier_net_forward.1} parent=11 // pred_fallthru
        _
      // Predicated region
      $region37: #{classifier_net_forward.1} parent=11 // pred_check
        %p268 = pneg %p214
      $region38: #{classifier_net_forward.1} parent=11 // pred_check_branch
        %270 = sbr.rel (%p268) target = $region40
      $region39: #{classifier_net_forward.1} parent=11 // pred_region
        _
      $region40: #{classifier_net_forward.1} parent=11 // pred_fallthru
        _
    $region12: #{classifier_net_forward.1} parent=5 // pred_fallthru
      _
    %p271 = scmp.lt.s32.totalorder %s15, 5
    // Predicated region
    $region41: #{classifier_net_forward.1} parent=5 // pred_check
      %p272 = pneg %p271
    $region42: #{classifier_net_forward.1} parent=5 // pred_check_branch
      %274 = sbr.rel (%p272) target = $region44
    $region43: #{classifier_net_forward.1} parent=5 // pred_region
      // Predicated region
      $region45: #{classifier_net_forward.1} parent=43 // pred_check
        %p275 = pneg %p56
      $region46: #{classifier_net_forward.1} parent=43 // pred_check_branch
        %277 = sbr.rel (%p275) target = $region48
      $region47: #{classifier_net_forward.1} parent=43 // pred_region
        %s278 = smul.u32 144, %s15
        %p279 = scmp.lt.s32.totalorder %s278, 719
        %s280 = scalar_select %p279, %s278, 719
        %s281 = smul.addr %s280, 4
        %s282 = scalar_lea.vmem %s1, %s281
        %s283 = smul.u32 144, %s15
      $region48: #{classifier_net_forward.1} parent=43 // pred_fallthru
        _
      // Predicated region
      $region49: #{classifier_net_forward.1} parent=43 // pred_check
        %p284 = pneg %p82
      $region50: #{classifier_net_forward.1} parent=43 // pred_check_branch
        %286 = sbr.rel (%p284) target = $region52
      $region51: #{classifier_net_forward.1} parent=43 // pred_region
        %p287 = scmp.lt.s32.totalorder %s15, 4
        %s288 = scalar_select %p287, %s15, 4
        %s289 = scalar_lea.vmem %s2, %s288
      $region52: #{classifier_net_forward.1} parent=43 // pred_fallthru
        _
    $region44: #{classifier_net_forward.1} parent=5 // pred_fallthru
      _
    %p290 = scmp.le.s32.totalorder 1, %s15
    %p291 = scmp.lt.s32.totalorder %s15, 6
    %p292 = pnand %p290, %p291
    %p293 = pneg %p292
    // Predicated region
    $region53: #{classifier_net_forward.1} parent=5 // pred_check
      _
    $region54: #{classifier_net_forward.1} parent=5 // pred_check_branch
      %295 = sbr.rel (%p292) target = $region56
    $region55: #{classifier_net_forward.1} parent=5 // pred_region
      %s296 = ssub.s32 %s15, 1
      %p297 = pneg %p36
      %p298 = pneg %p33
      %s299 = smul.u32 144, %s20
      %p300 = scmp.lt.s32.totalorder %s299, 719
      %s301 = scalar_select %p300, %s299, 719
      %s302 = smul.addr %s301, 4
      %s303 = scalar_lea.vmem %s1, %s302
      %p304 = pneg %p62
      %p305 = pneg %p59
      %p306 = scmp.lt.s32.totalorder %s20, 4
      %s307 = scalar_select %p306, %s20, 4
      %s308 = scalar_lea.vmem %s2, %s307
      %p309 = pneg %p88
      %p310 = pneg %p85
      %p311 = pneg %p109
      %p312 = pneg %p106
      %p313 = pneg %p130
      %p314 = pneg %p127
      %p315 = pneg %p151
      %p316 = pneg %p148
      %p317 = pneg %p172
      %p318 = pneg %p169
      %p319 = pneg %p193
      %p320 = pneg %p190
      %p321 = pneg %p214
      %p322 = pneg %p211
      %p323 = pneg %p235
      %p324 = pneg %p232
      %s325 = smul.u32 144, %s20
      %p326 = scmp.lt.s32.totalorder %s325, 719
      %s327 = scalar_select %p326, %s325, 719
      %s328 = smul.addr %s327, 4
      %s329 = scalar_lea.vmem %s1, %s328
      %s330 = smul.u32 144, %s20
      %p331 = scmp.lt.s32.totalorder %s20, 4
      %s332 = scalar_select %p331, %s20, 4
      %s333 = scalar_lea.vmem %s2, %s332
      %p335 = scmp.eq.s32.totalorder %s20, 0
      // Predicated region
      $region57: #{classifier_net_forward.1} parent=55 // pred_check
        %p336 = pneg %p335
      $region58: #{classifier_net_forward.1} parent=55 // pred_check_branch
        %338 = sbr.rel (%p336) target = $region60
      $region59: #{classifier_net_forward.1} parent=55 // pred_region
        %v339 = vld [vmem:[%s0] sm:$0xff]
        %v340 = vld [vmem:[%s0 + $0x8] sm:$0xff]
        %v341 = vld [vmem:[%s0 + $0x10] sm:$0xff]
        %v342 = vld [vmem:[%s0 + $0x18] sm:$0xff]
        %v343 = vld [vmem:[%s0 + $0x20] sm:$0xff]
        %v344 = vld [vmem:[%s0 + $0x28] sm:$0xff]
        %v345 = vld [vmem:[%s0 + $0x30] sm:$0xff]
        %v346 = vld [vmem:[%s0 + $0x38] sm:$0xff]
        %v347 = vld [vmem:[%s0 + $0x40] sm:$0xff]
        %v348 = vld [vmem:[%s0 + $0x48] sm:$0xff]
        %v349 = vld [vmem:[%s0 + $0x50] sm:$0xff]
        %v350 = vld [vmem:[%s0 + $0x58] sm:$0xff]
        %v351 = vld [vmem:[%s0 + $0x60] sm:$0xff]
        %v352 = vld [vmem:[%s0 + $0x68] sm:$0xff]
        %v353 = vld [vmem:[%s0 + $0x70] sm:$0xff]
        %v354 = vld [vmem:[%s0 + $0x78] sm:$0xff]
        %v355 = vld [vmem:[%s0 + $0x80] sm:$0xff]
        %v356 = vld [vmem:[%s0 + $0x88] sm:$0xff]
        %v357 = vld [vmem:[%s0 + $0x90] sm:$0xff]
        %v358 = vld [vmem:[%s0 + $0x98] sm:$0xff]
        %v359 = vld [vmem:[%s0 + $0xa0] sm:$0xff]
        %v360 = vld [vmem:[%s0 + $0xa8] sm:$0xff]
        %v361 = vld [vmem:[%s0 + $0xb0] sm:$0xff]
        %v362 = vld [vmem:[%s0 + $0xb8] sm:$0xff]
        %v363 = vld [vmem:[%s0 + $0xc0] sm:$0xff]
        %v364 = vld [vmem:[%s0 + $0xc8] sm:$0xff]
        %v365 = vld [vmem:[%s0 + $0xd0] sm:$0xff]
        %v366 = vld [vmem:[%s0 + $0xd8] sm:$0xff]
        %v367 = vld [vmem:[%s0 + $0xe0] sm:$0xff]
        %v368 = vld [vmem:[%s0 + $0xe8] sm:$0xff]
        %v369 = vld [vmem:[%s0 + $0xf0] sm:$0xff]
        %v370 = vld [vmem:[%s0 + $0xf8] sm:$0xff]
        %v371 = vld [vmem:[%s0 + $0x100] sm:$0xff]
        %v372 = vld [vmem:[%s0 + $0x108] sm:$0xff]
        %v373 = vld [vmem:[%s0 + $0x110] sm:$0xff]
        %v374 = vld [vmem:[%s0 + $0x118] sm:$0xff]
        %v375 = vld [vmem:[%s0 + $0x120] sm:$0xff]
        %v376 = vld [vmem:[%s0 + $0x128] sm:$0xff]
        %v377 = vld [vmem:[%s0 + $0x130] sm:$0xff]
        %v378 = vld [vmem:[%s0 + $0x138] sm:$0xff]
        %v379 = vld [vmem:[%s0 + $0x140] sm:$0xff]
        %v380 = vld [vmem:[%s0 + $0x148] sm:$0xff]
        %v381 = vld [vmem:[%s0 + $0x150] sm:$0xff]
        %v382 = vld [vmem:[%s0 + $0x158] sm:$0xff]
        %v383 = vld [vmem:[%s0 + $0x160] sm:$0xff]
        %v384 = vld [vmem:[%s0 + $0x168] sm:$0xff]
        %v385 = vld [vmem:[%s0 + $0x170] sm:$0xff]
        %v386 = vld [vmem:[%s0 + $0x178] sm:$0xff]
        %v387 = vld [vmem:[%s0 + $0x180] sm:$0xff]
        %v388 = vld [vmem:[%s0 + $0x188] sm:$0xff]
        %v389 = vld [vmem:[%s0 + $0x190] sm:$0xff]
        %v390 = vld [vmem:[%s0 + $0x198] sm:$0xff]
        %v391 = vld [vmem:[%s0 + $0x1a0] sm:$0xff]
        %v392 = vld [vmem:[%s0 + $0x1a8] sm:$0xff]
        %v393 = vld [vmem:[%s0 + $0x1b0] sm:$0xff]
        %v394 = vld [vmem:[%s0 + $0x1b8] sm:$0xff]
        %v395 = vld [vmem:[%s0 + $0x1c0] sm:$0xff]
        %v396 = vld [vmem:[%s0 + $0x1c8] sm:$0xff]
        %v397 = vld [vmem:[%s0 + $0x1d0] sm:$0xff]
        %v398 = vld [vmem:[%s0 + $0x1d8] sm:$0xff]
        %v399 = vld [vmem:[%s0 + $0x1e0] sm:$0xff]
        %v400 = vld [vmem:[%s0 + $0x1e8] sm:$0xff]
        %v401 = vld [vmem:[%s0 + $0x1f0] sm:$0xff]
        %v402 = vld [vmem:[%s0 + $0x1f8] sm:$0xff]
        %v403 = vld [vmem:[%s0 + $0x200] sm:$0xff]
        %v404 = vld [vmem:[%s0 + $0x208] sm:$0xff]
        %v405 = vld [vmem:[%s0 + $0x210] sm:$0xff]
        %v406 = vld [vmem:[%s0 + $0x218] sm:$0xff]
        %v407 = vld [vmem:[%s0 + $0x220] sm:$0xff]
        %v408 = vld [vmem:[%s0 + $0x228] sm:$0xff]
        %v409 = vld [vmem:[%s0 + $0x230] sm:$0xff]
        %v410 = vld [vmem:[%s0 + $0x238] sm:$0xff]
        %v411 = vld [vmem:[%s0 + $0x240] sm:$0xff]
        %v412 = vld [vmem:[%s0 + $0x248] sm:$0xff]
        %v413 = vld [vmem:[%s0 + $0x250] sm:$0xff]
        %v414 = vld [vmem:[%s0 + $0x258] sm:$0xff]
        %v415 = vld [vmem:[%s0 + $0x260] sm:$0xff]
        %v416 = vld [vmem:[%s0 + $0x268] sm:$0xff]
        %v417 = vld [vmem:[%s0 + $0x270] sm:$0xff]
        %v418 = vld [vmem:[%s0 + $0x278] sm:$0xff]
        %v419 = vld [vmem:[%s0 + $0x280] sm:$0xff]
        %v420 = vld [vmem:[%s0 + $0x288] sm:$0xff]
        %v421 = vld [vmem:[%s0 + $0x290] sm:$0xff]
        %v422 = vld [vmem:[%s0 + $0x298] sm:$0xff]
        %v423 = vld [vmem:[%s0 + $0x2a0] sm:$0xff]
        %v424 = vld [vmem:[%s0 + $0x2a8] sm:$0xff]
        %v425 = vld [vmem:[%s0 + $0x2b0] sm:$0xff]
        %s426 = scalar_lea.vmem [#allocation2], 696
        %427 = vst [vmem:[%s426] sm:$0xff] %v339
        %428 = vst [vmem:[%s426 + $0x8] sm:$0xff] %v340
        %429 = vst [vmem:[%s426 + $0x10] sm:$0xff] %v341
        %430 = vst [vmem:[%s426 + $0x18] sm:$0xff] %v342
        %431 = vst [vmem:[%s426 + $0x20] sm:$0xff] %v343
        %432 = vst [vmem:[%s426 + $0x28] sm:$0xff] %v344
        %433 = vst [vmem:[%s426 + $0x30] sm:$0xff] %v345
        %434 = vst [vmem:[%s426 + $0x38] sm:$0xff] %v346
        %435 = vst [vmem:[%s426 + $0x40] sm:$0xff] %v347
        %436 = vst [vmem:[%s426 + $0x48] sm:$0xff] %v348
        %437 = vst [vmem:[%s426 + $0x50] sm:$0xff] %v349
        %438 = vst [vmem:[%s426 + $0x58] sm:$0xff] %v350
        %439 = vst [vmem:[%s426 + $0x60] sm:$0xff] %v351
        %440 = vst [vmem:[%s426 + $0x68] sm:$0xff] %v352
        %441 = vst [vmem:[%s426 + $0x70] sm:$0xff] %v353
        %442 = vst [vmem:[%s426 + $0x78] sm:$0xff] %v354
        %443 = vst [vmem:[%s426 + $0x80] sm:$0xff] %v355
        %444 = vst [vmem:[%s426 + $0x88] sm:$0xff] %v356
        %445 = vst [vmem:[%s426 + $0x90] sm:$0xff] %v357
        %446 = vst [vmem:[%s426 + $0x98] sm:$0xff] %v358
        %447 = vst [vmem:[%s426 + $0xa0] sm:$0xff] %v359
        %448 = vst [vmem:[%s426 + $0xa8] sm:$0xff] %v360
        %449 = vst [vmem:[%s426 + $0xb0] sm:$0xff] %v361
        %450 = vst [vmem:[%s426 + $0xb8] sm:$0xff] %v362
        %451 = vst [vmem:[%s426 + $0xc0] sm:$0xff] %v363
        %452 = vst [vmem:[%s426 + $0xc8] sm:$0xff] %v364
        %453 = vst [vmem:[%s426 + $0xd0] sm:$0xff] %v365
        %454 = vst [vmem:[%s426 + $0xd8] sm:$0xff] %v366
        %455 = vst [vmem:[%s426 + $0xe0] sm:$0xff] %v367
        %456 = vst [vmem:[%s426 + $0xe8] sm:$0xff] %v368
        %457 = vst [vmem:[%s426 + $0xf0] sm:$0xff] %v369
        %458 = vst [vmem:[%s426 + $0xf8] sm:$0xff] %v370
        %459 = vst [vmem:[%s426 + $0x100] sm:$0xff] %v371
        %460 = vst [vmem:[%s426 + $0x108] sm:$0xff] %v372
        %461 = vst [vmem:[%s426 + $0x110] sm:$0xff] %v373
        %462 = vst [vmem:[%s426 + $0x118] sm:$0xff] %v374
        %463 = vst [vmem:[%s426 + $0x120] sm:$0xff] %v375
        %464 = vst [vmem:[%s426 + $0x128] sm:$0xff] %v376
        %465 = vst [vmem:[%s426 + $0x130] sm:$0xff] %v377
        %466 = vst [vmem:[%s426 + $0x138] sm:$0xff] %v378
        %467 = vst [vmem:[%s426 + $0x140] sm:$0xff] %v379
        %468 = vst [vmem:[%s426 + $0x148] sm:$0xff] %v380
        %469 = vst [vmem:[%s426 + $0x150] sm:$0xff] %v381
        %470 = vst [vmem:[%s426 + $0x158] sm:$0xff] %v382
        %471 = vst [vmem:[%s426 + $0x160] sm:$0xff] %v383
        %472 = vst [vmem:[%s426 + $0x168] sm:$0xff] %v384
        %473 = vst [vmem:[%s426 + $0x170] sm:$0xff] %v385
        %474 = vst [vmem:[%s426 + $0x178] sm:$0xff] %v386
        %475 = vst [vmem:[%s426 + $0x180] sm:$0xff] %v387
        %476 = vst [vmem:[%s426 + $0x188] sm:$0xff] %v388
        %477 = vst [vmem:[%s426 + $0x190] sm:$0xff] %v389
        %478 = vst [vmem:[%s426 + $0x198] sm:$0xff] %v390
        %479 = vst [vmem:[%s426 + $0x1a0] sm:$0xff] %v391
        %480 = vst [vmem:[%s426 + $0x1a8] sm:$0xff] %v392
        %481 = vst [vmem:[%s426 + $0x1b0] sm:$0xff] %v393
        %482 = vst [vmem:[%s426 + $0x1b8] sm:$0xff] %v394
        %483 = vst [vmem:[%s426 + $0x1c0] sm:$0xff] %v395
        %484 = vst [vmem:[%s426 + $0x1c8] sm:$0xff] %v396
        %485 = vst [vmem:[%s426 + $0x1d0] sm:$0xff] %v397
        %486 = vst [vmem:[%s426 + $0x1d8] sm:$0xff] %v398
        %487 = vst [vmem:[%s426 + $0x1e0] sm:$0xff] %v399
        %488 = vst [vmem:[%s426 + $0x1e8] sm:$0xff] %v400
        %489 = vst [vmem:[%s426 + $0x1f0] sm:$0xff] %v401
        %490 = vst [vmem:[%s426 + $0x1f8] sm:$0xff] %v402
        %491 = vst [vmem:[%s426 + $0x200] sm:$0xff] %v403
        %492 = vst [vmem:[%s426 + $0x208] sm:$0xff] %v404
        %493 = vst [vmem:[%s426 + $0x210] sm:$0xff] %v405
        %494 = vst [vmem:[%s426 + $0x218] sm:$0xff] %v406
        %495 = vst [vmem:[%s426 + $0x220] sm:$0xff] %v407
        %496 = vst [vmem:[%s426 + $0x228] sm:$0xff] %v408
        %497 = vst [vmem:[%s426 + $0x230] sm:$0xff] %v409
        %498 = vst [vmem:[%s426 + $0x238] sm:$0xff] %v410
        %499 = vst [vmem:[%s426 + $0x240] sm:$0xff] %v411
        %500 = vst [vmem:[%s426 + $0x248] sm:$0xff] %v412
        %501 = vst [vmem:[%s426 + $0x250] sm:$0xff] %v413
        %502 = vst [vmem:[%s426 + $0x258] sm:$0xff] %v414
        %503 = vst [vmem:[%s426 + $0x260] sm:$0xff] %v415
        %504 = vst [vmem:[%s426 + $0x268] sm:$0xff] %v416
        %505 = vst [vmem:[%s426 + $0x270] sm:$0xff] %v417
        %506 = vst [vmem:[%s426 + $0x278] sm:$0xff] %v418
        %507 = vst [vmem:[%s426 + $0x280] sm:$0xff] %v419
        %508 = vst [vmem:[%s426 + $0x288] sm:$0xff] %v420
        %509 = vst [vmem:[%s426 + $0x290] sm:$0xff] %v421
        %510 = vst [vmem:[%s426 + $0x298] sm:$0xff] %v422
        %511 = vst [vmem:[%s426 + $0x2a0] sm:$0xff] %v423
        %512 = vst [vmem:[%s426 + $0x2a8] sm:$0xff] %v424
        %513 = vst [vmem:[%s426 + $0x2b0] sm:$0xff] %v425
        %514 = vst [vmem:[#allocation2] sm:$0xff] 0.0
        %515 = vst [vmem:[#allocation2 + $0x8] sm:$0xff] 0.0
        %516 = vst [vmem:[#allocation2 + $0x10] sm:$0xff] 0.0
        %517 = vst [vmem:[#allocation2 + $0x2a0] sm:$0xff] 0.0
        %518 = vst [vmem:[#allocation2 + $0x2a8] sm:$0xff] 0.0
        %519 = vst [vmem:[#allocation2 + $0x2b0] sm:$0xff] 0.0
      $region60: #{classifier_net_forward.1} parent=55 // pred_fallthru
        _
      %s520 = sadd.s32 %s20, 1
      %s521 = sand.u32 %s520, 1
      %s522 = smul.u32 %s521, 696
      %s523 = scalar_lea.vmem [#allocation2], %s522
      %v524 = vld [vmem:[%s523 + $0x5] sm:$0xff]
      %v525 = vld [vmem:[%s523 + $0xd] sm:$0xff]
      %v526 = vld [vmem:[%s523 + $0x15] sm:$0xff]
      %v527 = vld [vmem:[%s523 + $0x1d] sm:$0xff]
      %v528 = vld [vmem:[%s523 + $0x25] sm:$0xff]
      %v529 = vld [vmem:[%s523 + $0x2d] sm:$0xff]
      %v530 = vld [vmem:[%s523 + $0x35] sm:$0xff]
      %v531 = vld [vmem:[%s523 + $0x3d] sm:$0xff]
      %v532 = vld [vmem:[%s523 + $0x45] sm:$0xff]
      %v533 = vld [vmem:[%s523 + $0x4d] sm:$0xff]
      %v534 = vld [vmem:[%s523 + $0x55] sm:$0xff]
      %v535 = vld [vmem:[%s523 + $0x5d] sm:$0xff]
      %v536 = vld [vmem:[%s523 + $0x65] sm:$0xff]
      %v537 = vld [vmem:[%s523 + $0x6d] sm:$0xff]
      %v538 = vld [vmem:[%s523 + $0x75] sm:$0xff]
      %v539 = vld [vmem:[%s523 + $0x7d] sm:$0xff]
      %v540 = vld [vmem:[%s523 + $0x85] sm:$0xff]
      %v541 = vld [vmem:[%s523 + $0x8d] sm:$0xff]
      %v542 = vld [vmem:[%s523 + $0x95] sm:$0xff]
      %v543 = vld [vmem:[%s523 + $0x9d] sm:$0xff]
      %v544 = vld [vmem:[%s523 + $0xa5] sm:$0xff]
      %v545 = vld [vmem:[%s523 + $0xad] sm:$0xff]
      %v546 = vld [vmem:[%s523 + $0xb5] sm:$0xff]
      %v547 = vld [vmem:[%s523 + $0xbd] sm:$0xff]
      %v548 = vld [vmem:[%s523 + $0xc5] sm:$0xff]
      %v549 = vld [vmem:[%s523 + $0xcd] sm:$0xff]
      %v550 = vld [vmem:[%s523 + $0xd5] sm:$0xff]
      %v551 = vld [vmem:[%s523 + $0xdd] sm:$0xff]
      %v552 = vld [vmem:[%s523 + $0xe5] sm:$0xff]
      %v553 = vld [vmem:[%s523 + $0xed] sm:$0xff]
      %v554 = vld [vmem:[%s523 + $0xf5] sm:$0xff]
      %v555 = vld [vmem:[%s523 + $0xfd] sm:$0xff]
      %v556 = vld [vmem:[%s523 + $0x105] sm:$0xff]
      %v557 = vld [vmem:[%s523 + $0x10d] sm:$0xff]
      %v558 = vld [vmem:[%s523 + $0x115] sm:$0xff]
      %v559 = vld [vmem:[%s523 + $0x11d] sm:$0xff]
      %v560 = vld [vmem:[%s523 + $0x125] sm:$0xff]
      %v561 = vld [vmem:[%s523 + $0x12d] sm:$0xff]
      %v562 = vld [vmem:[%s523 + $0x135] sm:$0xff]
      %v563 = vld [vmem:[%s523 + $0x13d] sm:$0xff]
      %v564 = vld [vmem:[%s523 + $0x145] sm:$0xff]
      %v565 = vld [vmem:[%s523 + $0x14d] sm:$0xff]
      %v566 = vld [vmem:[%s523 + $0x155] sm:$0xff]
      %v567 = vld [vmem:[%s523 + $0x15d] sm:$0xff]
      %v568 = vld [vmem:[%s523 + $0x165] sm:$0xff]
      %v569 = vld [vmem:[%s523 + $0x16d] sm:$0xff]
      %v570 = vld [vmem:[%s523 + $0x175] sm:$0xff]
      %v571 = vld [vmem:[%s523 + $0x17d] sm:$0xff]
      %v572 = vld [vmem:[%s523 + $0x185] sm:$0xff]
      %v573 = vld [vmem:[%s523 + $0x18d] sm:$0xff]
      %v574 = vld [vmem:[%s523 + $0x195] sm:$0xff]
      %v575 = vld [vmem:[%s523 + $0x19d] sm:$0xff]
      %v576 = vld [vmem:[%s523 + $0x1a5] sm:$0xff]
      %v577 = vld [vmem:[%s523 + $0x1ad] sm:$0xff]
      %v578 = vld [vmem:[%s523 + $0x1b5] sm:$0xff]
      %v579 = vld [vmem:[%s523 + $0x1bd] sm:$0xff]
      %v580 = vld [vmem:[%s523 + $0x1c5] sm:$0xff]
      %v581 = vld [vmem:[%s523 + $0x1cd] sm:$0xff]
      %v582 = vld [vmem:[%s523 + $0x1d5] sm:$0xff]
      %v583 = vld [vmem:[%s523 + $0x1dd] sm:$0xff]
      %v584 = vld [vmem:[%s523 + $0x1e5] sm:$0xff]
      %v585 = vld [vmem:[%s523 + $0x1ed] sm:$0xff]
      %v586 = vld [vmem:[%s523 + $0x1f5] sm:$0xff]
      %v587 = vld [vmem:[%s523 + $0x1fd] sm:$0xff]
      %v588 = vld [vmem:[%s523 + $0x205] sm:$0xff]
      %v589 = vld [vmem:[%s523 + $0x20d] sm:$0xff]
      %v590 = vld [vmem:[%s523 + $0x215] sm:$0xff]
      %v591 = vld [vmem:[%s523 + $0x21d] sm:$0xff]
      %v592 = vld [vmem:[%s523 + $0x225] sm:$0xff]
      %v593 = vld [vmem:[%s523 + $0x22d] sm:$0xff]
      %v594 = vld [vmem:[%s523 + $0x235] sm:$0xff]
      %v595 = vld [vmem:[%s523 + $0x23d] sm:$0xff]
      %v596 = vld [vmem:[%s523 + $0x245] sm:$0xff]
      %v597 = vld [vmem:[%s523 + $0x24d] sm:$0xff]
      %v598 = vld [vmem:[%s523 + $0x255] sm:$0xff]
      %v599 = vld [vmem:[%s523 + $0x25d] sm:$0xff]
      %v600 = vld [vmem:[%s523 + $0x265] sm:$0xff]
      %v601 = vld [vmem:[%s523 + $0x26d] sm:$0xff]
      %v602 = vld [vmem:[%s523 + $0x275] sm:$0xff]
      %v603 = vld [vmem:[%s523 + $0x27d] sm:$0xff]
      %v604 = vld [vmem:[%s523 + $0x285] sm:$0xff]
      %v605 = vpack.c.bf16 %v525, %v524
      %v606 = vpack.c.bf16 %v527, %v526
      %v607 = vpack.c.bf16 %v529, %v528
      %v608 = vpack.c.bf16 %v531, %v530
      %v609 = vpack.c.bf16 %v533, %v532
      %v610 = vpack.c.bf16 %v535, %v534
      %v611 = vpack.c.bf16 %v537, %v536
      %v612 = vpack.c.bf16 %v539, %v538
      %v613 = vpack.c.bf16 %v541, %v540
      %v614 = vpack.c.bf16 %v543, %v542
      %v615 = vpack.c.bf16 %v545, %v544
      %v616 = vpack.c.bf16 %v547, %v546
      %v617 = vpack.c.bf16 %v549, %v548
      %v618 = vpack.c.bf16 %v551, %v550
      %v619 = vpack.c.bf16 %v553, %v552
      %v620 = vpack.c.bf16 %v555, %v554
      %v621 = vpack.c.bf16 %v557, %v556
      %v622 = vpack.c.bf16 %v559, %v558
      %v623 = vpack.c.bf16 %v561, %v560
      %v624 = vpack.c.bf16 %v563, %v562
      %v625 = vpack.c.bf16 %v565, %v564
      %v626 = vpack.c.bf16 %v567, %v566
      %v627 = vpack.c.bf16 %v569, %v568
      %v628 = vpack.c.bf16 %v571, %v570
      %v629 = vpack.c.bf16 %v573, %v572
      %v630 = vpack.c.bf16 %v575, %v574
      %v631 = vpack.c.bf16 %v577, %v576
      %v632 = vpack.c.bf16 %v579, %v578
      %v633 = vpack.c.bf16 %v581, %v580
      %v634 = vpack.c.bf16 %v583, %v582
      %v635 = vpack.c.bf16 %v585, %v584
      %v636 = vpack.c.bf16 %v587, %v586
      %v637 = vpack.c.bf16 %v589, %v588
      %v638 = vpack.c.bf16 %v591, %v590
      %v639 = vpack.c.bf16 %v593, %v592
      %v640 = vpack.c.bf16 %v595, %v594
      %v641 = vpack.c.bf16 %v597, %v596
      %v642 = vpack.c.bf16 %v599, %v598
      %v643 = vpack.c.bf16 %v601, %v600
      %v644 = vpack.c.bf16 %v603, %v602
      %v645 = vpack.c.bf16 %v604, %v604
      %v646 = vld [vmem:[%s329] sm:$0xf]
      %v647 = vld [vmem:[%s329 + $0x4] sm:$0xf]
      %v648 = vld [vmem:[%s329 + $0x8] sm:$0xf]
      %v649 = vld [vmem:[%s329 + $0xc] sm:$0xf]
      %v650 = vld [vmem:[%s329 + $0x10] sm:$0xf]
      %v651 = vld [vmem:[%s329 + $0x14] sm:$0xf]
      %v652 = vld [vmem:[%s329 + $0x18] sm:$0xf]
      %v653 = vld [vmem:[%s329 + $0x1c] sm:$0xf]
      %v654 = vld [vmem:[%s329 + $0x20] sm:$0xf]
      %v655 = vld [vmem:[%s329 + $0x24] sm:$0xf]
      %v656 = vld [vmem:[%s329 + $0x28] sm:$0xf]
      %v657 = vld [vmem:[%s329 + $0x2c] sm:$0xf]
      %v658 = vld [vmem:[%s329 + $0x30] sm:$0xf]
      %v659 = vld [vmem:[%s329 + $0x34] sm:$0xf]
      %v660 = vld [vmem:[%s329 + $0x38] sm:$0xf]
      %v661 = vld [vmem:[%s329 + $0x3c] sm:$0xf]
      %v662 = vld [vmem:[%s523 + $0x6] sm:$0xff]
      %v663 = vld [vmem:[%s523 + $0xe] sm:$0xff]
      %v664 = vld [vmem:[%s523 + $0x16] sm:$0xff]
      %v665 = vld [vmem:[%s523 + $0x1e] sm:$0xff]
      %v666 = vld [vmem:[%s523 + $0x26] sm:$0xff]
      %v667 = vld [vmem:[%s523 + $0x2e] sm:$0xff]
      %v668 = vld [vmem:[%s523 + $0x36] sm:$0xff]
      %v669 = vld [vmem:[%s523 + $0x3e] sm:$0xff]
      %v670 = vld [vmem:[%s523 + $0x46] sm:$0xff]
      %v671 = vld [vmem:[%s523 + $0x4e] sm:$0xff]
      %v672 = vld [vmem:[%s523 + $0x56] sm:$0xff]
      %v673 = vld [vmem:[%s523 + $0x5e] sm:$0xff]
      %v674 = vld [vmem:[%s523 + $0x66] sm:$0xff]
      %v675 = vld [vmem:[%s523 + $0x6e] sm:$0xff]
      %v676 = vld [vmem:[%s523 + $0x76] sm:$0xff]
      %v677 = vld [vmem:[%s523 + $0x7e] sm:$0xff]
      %v678 = vld [vmem:[%s523 + $0x86] sm:$0xff]
      %v679 = vld [vmem:[%s523 + $0x8e] sm:$0xff]
      %v680 = vld [vmem:[%s523 + $0x96] sm:$0xff]
      %v681 = vld [vmem:[%s523 + $0x9e] sm:$0xff]
      %v682 = vld [vmem:[%s523 + $0xa6] sm:$0xff]
      %v683 = vld [vmem:[%s523 + $0xae] sm:$0xff]
      %v684 = vld [vmem:[%s523 + $0xb6] sm:$0xff]
      %v685 = vld [vmem:[%s523 + $0xbe] sm:$0xff]
      %v686 = vld [vmem:[%s523 + $0xc6] sm:$0xff]
      %v687 = vld [vmem:[%s523 + $0xce] sm:$0xff]
      %v688 = vld [vmem:[%s523 + $0xd6] sm:$0xff]
      %v689 = vld [vmem:[%s523 + $0xde] sm:$0xff]
      %v690 = vld [vmem:[%s523 + $0xe6] sm:$0xff]
      %v691 = vld [vmem:[%s523 + $0xee] sm:$0xff]
      %v692 = vld [vmem:[%s523 + $0xf6] sm:$0xff]
      %v693 = vld [vmem:[%s523 + $0xfe] sm:$0xff]
      %v694 = vld [vmem:[%s523 + $0x106] sm:$0xff]
      %v695 = vld [vmem:[%s523 + $0x10e] sm:$0xff]
      %v696 = vld [vmem:[%s523 + $0x116] sm:$0xff]
      %v697 = vld [vmem:[%s523 + $0x11e] sm:$0xff]
      %v698 = vld [vmem:[%s523 + $0x126] sm:$0xff]
      %v699 = vld [vmem:[%s523 + $0x12e] sm:$0xff]
      %v700 = vld [vmem:[%s523 + $0x136] sm:$0xff]
      %v701 = vld [vmem:[%s523 + $0x13e] sm:$0xff]
      %v702 = vld [vmem:[%s523 + $0x146] sm:$0xff]
      %v703 = vld [vmem:[%s523 + $0x14e] sm:$0xff]
      %v704 = vld [vmem:[%s523 + $0x156] sm:$0xff]
      %v705 = vld [vmem:[%s523 + $0x15e] sm:$0xff]
      %v706 = vld [vmem:[%s523 + $0x166] sm:$0xff]
      %v707 = vld [vmem:[%s523 + $0x16e] sm:$0xff]
      %v708 = vld [vmem:[%s523 + $0x176] sm:$0xff]
      %v709 = vld [vmem:[%s523 + $0x17e] sm:$0xff]
      %v710 = vld [vmem:[%s523 + $0x186] sm:$0xff]
      %v711 = vld [vmem:[%s523 + $0x18e] sm:$0xff]
      %v712 = vld [vmem:[%s523 + $0x196] sm:$0xff]
      %v713 = vld [vmem:[%s523 + $0x19e] sm:$0xff]
      %v714 = vld [vmem:[%s523 + $0x1a6] sm:$0xff]
      %v715 = vld [vmem:[%s523 + $0x1ae] sm:$0xff]
      %v716 = vld [vmem:[%s523 + $0x1b6] sm:$0xff]
      %v717 = vld [vmem:[%s523 + $0x1be] sm:$0xff]
      %v718 = vld [vmem:[%s523 + $0x1c6] sm:$0xff]
      %v719 = vld [vmem:[%s523 + $0x1ce] sm:$0xff]
      %v720 = vld [vmem:[%s523 + $0x1d6] sm:$0xff]
      %v721 = vld [vmem:[%s523 + $0x1de] sm:$0xff]
      %v722 = vld [vmem:[%s523 + $0x1e6] sm:$0xff]
      %v723 = vld [vmem:[%s523 + $0x1ee] sm:$0xff]
      %v724 = vld [vmem:[%s523 + $0x1f6] sm:$0xff]
      %v725 = vld [vmem:[%s523 + $0x1fe] sm:$0xff]
      %v726 = vld [vmem:[%s523 + $0x206] sm:$0xff]
      %v727 = vld [vmem:[%s523 + $0x20e] sm:$0xff]
      %v728 = vld [vmem:[%s523 + $0x216] sm:$0xff]
      %v729 = vld [vmem:[%s523 + $0x21e] sm:$0xff]
      %v730 = vld [vmem:[%s523 + $0x226] sm:$0xff]
      %v731 = vld [vmem:[%s523 + $0x22e] sm:$0xff]
      %v732 = vld [vmem:[%s523 + $0x236] sm:$0xff]
      %v733 = vld [vmem:[%s523 + $0x23e] sm:$0xff]
      %v734 = vld [vmem:[%s523 + $0x246] sm:$0xff]
      %v735 = vld [vmem:[%s523 + $0x24e] sm:$0xff]
      %v736 = vld [vmem:[%s523 + $0x256] sm:$0xff]
      %v737 = vld [vmem:[%s523 + $0x25e] sm:$0xff]
      %v738 = vld [vmem:[%s523 + $0x266] sm:$0xff]
      %v739 = vld [vmem:[%s523 + $0x26e] sm:$0xff]
      %v740 = vld [vmem:[%s523 + $0x276] sm:$0xff]
      %v741 = vld [vmem:[%s523 + $0x27e] sm:$0xff]
      %v742 = vld [vmem:[%s523 + $0x286] sm:$0xff]
      %v743 = vpack.c.bf16 %v663, %v662
      %v744 = vpack.c.bf16 %v665, %v664
      %v745 = vpack.c.bf16 %v667, %v666
      %v746 = vpack.c.bf16 %v669, %v668
      %v747 = vpack.c.bf16 %v671, %v670
      %v748 = vpack.c.bf16 %v673, %v672
      %v749 = vpack.c.bf16 %v675, %v674
      %v750 = vpack.c.bf16 %v677, %v676
      %v751 = vpack.c.bf16 %v679, %v678
      %v752 = vpack.c.bf16 %v681, %v680
      %v753 = vpack.c.bf16 %v683, %v682
      %v754 = vpack.c.bf16 %v685, %v684
      %v755 = vpack.c.bf16 %v687, %v686
      %v756 = vpack.c.bf16 %v689, %v688
      %v757 = vpack.c.bf16 %v691, %v690
      %v758 = vpack.c.bf16 %v693, %v692
      %v759 = vpack.c.bf16 %v695, %v694
      %v760 = vpack.c.bf16 %v697, %v696
      %v761 = vpack.c.bf16 %v699, %v698
      %v762 = vpack.c.bf16 %v701, %v700
      %v763 = vpack.c.bf16 %v703, %v702
      %v764 = vpack.c.bf16 %v705, %v704
      %v765 = vpack.c.bf16 %v707, %v706
      %v766 = vpack.c.bf16 %v709, %v708
      %v767 = vpack.c.bf16 %v711, %v710
      %v768 = vpack.c.bf16 %v713, %v712
      %v769 = vpack.c.bf16 %v715, %v714
      %v770 = vpack.c.bf16 %v717, %v716
      %v771 = vpack.c.bf16 %v719, %v718
      %v772 = vpack.c.bf16 %v721, %v720
      %v773 = vpack.c.bf16 %v723, %v722
      %v774 = vpack.c.bf16 %v725, %v724
      %v775 = vpack.c.bf16 %v727, %v726
      %v776 = vpack.c.bf16 %v729, %v728
      %v777 = vpack.c.bf16 %v731, %v730
      %v778 = vpack.c.bf16 %v733, %v732
      %v779 = vpack.c.bf16 %v735, %v734
      %v780 = vpack.c.bf16 %v737, %v736
      %v781 = vpack.c.bf16 %v739, %v738
      %v782 = vpack.c.bf16 %v741, %v740
      %v783 = vpack.c.bf16 %v742, %v742
      %v784 = vld [vmem:[%s329 + $0x40] sm:$0xf]
      %v785 = vld [vmem:[%s329 + $0x44] sm:$0xf]
      %v786 = vld [vmem:[%s329 + $0x48] sm:$0xf]
      %v787 = vld [vmem:[%s329 + $0x4c] sm:$0xf]
      %v788 = vld [vmem:[%s329 + $0x50] sm:$0xf]
      %v789 = vld [vmem:[%s329 + $0x54] sm:$0xf]
      %v790 = vld [vmem:[%s329 + $0x58] sm:$0xf]
      %v791 = vld [vmem:[%s329 + $0x5c] sm:$0xf]
      %v792 = vld [vmem:[%s329 + $0x60] sm:$0xf]
      %v793 = vld [vmem:[%s329 + $0x64] sm:$0xf]
      %v794 = vld [vmem:[%s329 + $0x68] sm:$0xf]
      %v795 = vld [vmem:[%s329 + $0x6c] sm:$0xf]
      %v796 = vld [vmem:[%s329 + $0x70] sm:$0xf]
      %v797 = vld [vmem:[%s329 + $0x74] sm:$0xf]
      %v798 = vld [vmem:[%s329 + $0x78] sm:$0xf]
      %v799 = vld [vmem:[%s329 + $0x7c] sm:$0xf]
      %v816 = vunpack.c.l.b16 %v784
      %v817 = vunpack.c.l.b16 %v785
      %v818 = vunpack.c.l.b16 %v786
      %v819 = vunpack.c.l.b16 %v787
      %v820 = vunpack.c.l.b16 %v788
      %v821 = vunpack.c.l.b16 %v789
      %v822 = vunpack.c.l.b16 %v790
      %v823 = vunpack.c.l.b16 %v791
      %v824 = vunpack.c.l.b16 %v792
      %v825 = vunpack.c.l.b16 %v793
      %v826 = vunpack.c.l.b16 %v794
      %v827 = vunpack.c.l.b16 %v795
      %v828 = vunpack.c.l.b16 %v796
      %v829 = vunpack.c.l.b16 %v797
      %v830 = vunpack.c.l.b16 %v798
      %v831 = vunpack.c.l.b16 %v799
      %v832 = vpack.c.b16 %v817, %v816
      %v833 = vpack.c.b16 %v819, %v818
      %v834 = vpack.c.b16 %v821, %v820
      %v835 = vpack.c.b16 %v823, %v822
      %v836 = vpack.c.b16 %v825, %v824
      %v837 = vpack.c.b16 %v827, %v826
      %v838 = vpack.c.b16 %v829, %v828
      %v839 = vpack.c.b16 %v831, %v830
      %848 = vmatpush.bf16.msra.mxu0 %v839
      %849 = vmatpush.bf16.msra.mxu0 %v838
      %850 = vmatpush.bf16.msra.mxu0 %v837
      %851 = vmatpush.bf16.msra.mxu0 %v836
      %852 = vmatpush.bf16.msra.mxu0 %v835
      %853 = vmatpush.bf16.msra.mxu0 %v834
      %854 = vmatpush.bf16.msra.mxu0 %v833
      %855 = vmatpush.bf16.msra.mxu0 %v832
      %856 = vmatmul.bf16.gmra.mxu0 %v743
      %v857 = vpop.f32.mrf.mxu0
      %v858 = vadd.f32 0.0, %v857
      %v859 = vpop.f32.mrf.mxu0
      %v860 = vadd.f32 0.0, %v859
      %861 = vmatmul.bf16.gmra.mxu0 %v744
      %v862 = vpop.f32.mrf.mxu0
      %v863 = vadd.f32 0.0, %v862
      %v864 = vpop.f32.mrf.mxu0
      %v865 = vadd.f32 0.0, %v864
      %866 = vmatmul.bf16.gmra.mxu0 %v745
      %v867 = vpop.f32.mrf.mxu0
      %v868 = vadd.f32 0.0, %v867
      %v869 = vpop.f32.mrf.mxu0
      %v870 = vadd.f32 0.0, %v869
      %871 = vmatmul.bf16.gmra.mxu0 %v746
      %v872 = vpop.f32.mrf.mxu0
      %v873 = vadd.f32 0.0, %v872
      %v874 = vpop.f32.mrf.mxu0
      %v875 = vadd.f32 0.0, %v874
      %876 = vmatmul.bf16.gmra.mxu0 %v747
      %v877 = vpop.f32.mrf.mxu0
      %v878 = vadd.f32 0.0, %v877
      %v879 = vpop.f32.mrf.mxu0
      %v880 = vadd.f32 0.0, %v879
      %881 = vmatmul.bf16.gmra.mxu0 %v748
      %v882 = vpop.f32.mrf.mxu0
      %v883 = vadd.f32 0.0, %v882
      %v884 = vpop.f32.mrf.mxu0
      %v885 = vadd.f32 0.0, %v884
      %886 = vmatmul.bf16.gmra.mxu0 %v749
      %v887 = vpop.f32.mrf.mxu0
      %v888 = vadd.f32 0.0, %v887
      %v889 = vpop.f32.mrf.mxu0
      %v890 = vadd.f32 0.0, %v889
      %891 = vmatmul.bf16.gmra.mxu0 %v750
      %v892 = vpop.f32.mrf.mxu0
      %v893 = vadd.f32 0.0, %v892
      %v894 = vpop.f32.mrf.mxu0
      %v895 = vadd.f32 0.0, %v894
      %896 = vmatmul.bf16.gmra.mxu0 %v751
      %v897 = vpop.f32.mrf.mxu0
      %v898 = vadd.f32 0.0, %v897
      %v899 = vpop.f32.mrf.mxu0
      %v900 = vadd.f32 0.0, %v899
      %901 = vmatmul.bf16.gmra.mxu0 %v752
      %v902 = vpop.f32.mrf.mxu0
      %v903 = vadd.f32 0.0, %v902
      %v904 = vpop.f32.mrf.mxu0
      %v905 = vadd.f32 0.0, %v904
      %906 = vmatmul.bf16.gmra.mxu0 %v753
      %v907 = vpop.f32.mrf.mxu0
      %v908 = vadd.f32 0.0, %v907
      %v909 = vpop.f32.mrf.mxu0
      %v910 = vadd.f32 0.0, %v909
      %911 = vmatmul.bf16.gmra.mxu0 %v754
      %v912 = vpop.f32.mrf.mxu0
      %v913 = vadd.f32 0.0, %v912
      %v914 = vpop.f32.mrf.mxu0
      %v915 = vadd.f32 0.0, %v914
      %916 = vmatmul.bf16.gmra.mxu0 %v755
      %v917 = vpop.f32.mrf.mxu0
      %v918 = vadd.f32 0.0, %v917
      %v919 = vpop.f32.mrf.mxu0
      %v920 = vadd.f32 0.0, %v919
      %921 = vmatmul.bf16.gmra.mxu0 %v756
      %v922 = vpop.f32.mrf.mxu0
      %v923 = vadd.f32 0.0, %v922
      %v924 = vpop.f32.mrf.mxu0
      %v925 = vadd.f32 0.0, %v924
      %926 = vmatmul.bf16.gmra.mxu0 %v757
      %v927 = vpop.f32.mrf.mxu0
      %v928 = vadd.f32 0.0, %v927
      %v929 = vpop.f32.mrf.mxu0
      %v930 = vadd.f32 0.0, %v929
      %931 = vmatmul.bf16.gmra.mxu0 %v758
      %v932 = vpop.f32.mrf.mxu0
      %v933 = vadd.f32 0.0, %v932
      %v934 = vpop.f32.mrf.mxu0
      %v935 = vadd.f32 0.0, %v934
      %936 = vmatmul.bf16.gmra.mxu0 %v759
      %v937 = vpop.f32.mrf.mxu0
      %v938 = vadd.f32 0.0, %v937
      %v939 = vpop.f32.mrf.mxu0
      %v940 = vadd.f32 0.0, %v939
      %941 = vmatmul.bf16.gmra.mxu0 %v760
      %v942 = vpop.f32.mrf.mxu0
      %v943 = vadd.f32 0.0, %v942
      %v944 = vpop.f32.mrf.mxu0
      %v945 = vadd.f32 0.0, %v944
      %946 = vmatmul.bf16.gmra.mxu0 %v761
      %v947 = vpop.f32.mrf.mxu0
      %v948 = vadd.f32 0.0, %v947
      %v949 = vpop.f32.mrf.mxu0
      %v950 = vadd.f32 0.0, %v949
      %951 = vmatmul.bf16.gmra.mxu0 %v762
      %v952 = vpop.f32.mrf.mxu0
      %v953 = vadd.f32 0.0, %v952
      %v954 = vpop.f32.mrf.mxu0
      %v955 = vadd.f32 0.0, %v954
      %956 = vmatmul.bf16.gmra.mxu0 %v763
      %v957 = vpop.f32.mrf.mxu0
      %v958 = vadd.f32 0.0, %v957
      %v959 = vpop.f32.mrf.mxu0
      %v960 = vadd.f32 0.0, %v959
      %961 = vmatmul.bf16.gmra.mxu0 %v764
      %v962 = vpop.f32.mrf.mxu0
      %v963 = vadd.f32 0.0, %v962
      %v964 = vpop.f32.mrf.mxu0
      %v965 = vadd.f32 0.0, %v964
      %966 = vmatmul.bf16.gmra.mxu0 %v765
      %v967 = vpop.f32.mrf.mxu0
      %v968 = vadd.f32 0.0, %v967
      %v969 = vpop.f32.mrf.mxu0
      %v970 = vadd.f32 0.0, %v969
      %971 = vmatmul.bf16.gmra.mxu0 %v766
      %v972 = vpop.f32.mrf.mxu0
      %v973 = vadd.f32 0.0, %v972
      %v974 = vpop.f32.mrf.mxu0
      %v975 = vadd.f32 0.0, %v974
      %976 = vmatmul.bf16.gmra.mxu0 %v767
      %v977 = vpop.f32.mrf.mxu0
      %v978 = vadd.f32 0.0, %v977
      %v979 = vpop.f32.mrf.mxu0
      %v980 = vadd.f32 0.0, %v979
      %981 = vmatmul.bf16.gmra.mxu0 %v768
      %v982 = vpop.f32.mrf.mxu0
      %v983 = vadd.f32 0.0, %v982
      %v984 = vpop.f32.mrf.mxu0
      %v985 = vadd.f32 0.0, %v984
      %986 = vmatmul.bf16.gmra.mxu0 %v769
      %v987 = vpop.f32.mrf.mxu0
      %v988 = vadd.f32 0.0, %v987
      %v989 = vpop.f32.mrf.mxu0
      %v990 = vadd.f32 0.0, %v989
      %991 = vmatmul.bf16.gmra.mxu0 %v770
      %v992 = vpop.f32.mrf.mxu0
      %v993 = vadd.f32 0.0, %v992
      %v994 = vpop.f32.mrf.mxu0
      %v995 = vadd.f32 0.0, %v994
      %996 = vmatmul.bf16.gmra.mxu0 %v771
      %v997 = vpop.f32.mrf.mxu0
      %v998 = vadd.f32 0.0, %v997
      %v999 = vpop.f32.mrf.mxu0
      %v1000 = vadd.f32 0.0, %v999
      %1001 = vmatmul.bf16.gmra.mxu0 %v772
      %v1002 = vpop.f32.mrf.mxu0
      %v1003 = vadd.f32 0.0, %v1002
      %v1004 = vpop.f32.mrf.mxu0
      %v1005 = vadd.f32 0.0, %v1004
      %1006 = vmatmul.bf16.gmra.mxu0 %v773
      %v1007 = vpop.f32.mrf.mxu0
      %v1008 = vadd.f32 0.0, %v1007
      %v1009 = vpop.f32.mrf.mxu0
      %v1010 = vadd.f32 0.0, %v1009
      %1011 = vmatmul.bf16.gmra.mxu0 %v774
      %v1012 = vpop.f32.mrf.mxu0
      %v1013 = vadd.f32 0.0, %v1012
      %v1014 = vpop.f32.mrf.mxu0
      %v1015 = vadd.f32 0.0, %v1014
      %1016 = vmatmul.bf16.gmra.mxu0 %v775
      %v1017 = vpop.f32.mrf.mxu0
      %v1018 = vadd.f32 0.0, %v1017
      %v1019 = vpop.f32.mrf.mxu0
      %v1020 = vadd.f32 0.0, %v1019
      %1021 = vmatmul.bf16.gmra.mxu0 %v776
      %v1022 = vpop.f32.mrf.mxu0
      %v1023 = vadd.f32 0.0, %v1022
      %v1024 = vpop.f32.mrf.mxu0
      %v1025 = vadd.f32 0.0, %v1024
      %1026 = vmatmul.bf16.gmra.mxu0 %v777
      %v1027 = vpop.f32.mrf.mxu0
      %v1028 = vadd.f32 0.0, %v1027
      %v1029 = vpop.f32.mrf.mxu0
      %v1030 = vadd.f32 0.0, %v1029
      %1031 = vmatmul.bf16.gmra.mxu0 %v778
      %v1032 = vpop.f32.mrf.mxu0
      %v1033 = vadd.f32 0.0, %v1032
      %v1034 = vpop.f32.mrf.mxu0
      %v1035 = vadd.f32 0.0, %v1034
      %1036 = vmatmul.bf16.gmra.mxu0 %v779
      %v1037 = vpop.f32.mrf.mxu0
      %v1038 = vadd.f32 0.0, %v1037
      %v1039 = vpop.f32.mrf.mxu0
      %v1040 = vadd.f32 0.0, %v1039
      %1041 = vmatmul.bf16.gmra.mxu0 %v780
      %v1042 = vpop.f32.mrf.mxu0
      %v1043 = vadd.f32 0.0, %v1042
      %v1044 = vpop.f32.mrf.mxu0
      %v1045 = vadd.f32 0.0, %v1044
      %1046 = vmatmul.bf16.gmra.mxu0 %v781
      %v1047 = vpop.f32.mrf.mxu0
      %v1048 = vadd.f32 0.0, %v1047
      %v1049 = vpop.f32.mrf.mxu0
      %v1050 = vadd.f32 0.0, %v1049
      %1051 = vmatmul.bf16.gmra.mxu0 %v782
      %v1052 = vpop.f32.mrf.mxu0
      %v1053 = vadd.f32 0.0, %v1052
      %v1054 = vpop.f32.mrf.mxu0
      %v1055 = vadd.f32 0.0, %v1054
      %1056 = vmatmul.bf16.gmra.mxu0 %v783
      %v1057 = vpop.f32.mrf.mxu0
      %v1058 = vadd.f32 0.0, %v1057
      %v1059 = vpop.f32.mrf.mxu0
      %1060 = vdwg.mxu0
      %v1077 = vunpack.c.l.b16 %v646
      %v1078 = vunpack.c.l.b16 %v647
      %v1079 = vunpack.c.l.b16 %v648
      %v1080 = vunpack.c.l.b16 %v649
      %v1081 = vunpack.c.l.b16 %v650
      %v1082 = vunpack.c.l.b16 %v651
      %v1083 = vunpack.c.l.b16 %v652
      %v1084 = vunpack.c.l.b16 %v653
      %v1085 = vunpack.c.l.b16 %v654
      %v1086 = vunpack.c.l.b16 %v655
      %v1087 = vunpack.c.l.b16 %v656
      %v1088 = vunpack.c.l.b16 %v657
      %v1089 = vunpack.c.l.b16 %v658
      %v1090 = vunpack.c.l.b16 %v659
      %v1091 = vunpack.c.l.b16 %v660
      %v1092 = vunpack.c.l.b16 %v661
      %v1093 = vpack.c.b16 %v1078, %v1077
      %v1094 = vpack.c.b16 %v1080, %v1079
      %v1095 = vpack.c.b16 %v1082, %v1081
      %v1096 = vpack.c.b16 %v1084, %v1083
      %v1097 = vpack.c.b16 %v1086, %v1085
      %v1098 = vpack.c.b16 %v1088, %v1087
      %v1099 = vpack.c.b16 %v1090, %v1089
      %v1100 = vpack.c.b16 %v1092, %v1091
      %1109 = vmatpush.bf16.msra.mxu0 %v1100
      %1110 = vmatpush.bf16.msra.mxu0 %v1099
      %1111 = vmatpush.bf16.msra.mxu0 %v1098
      %1112 = vmatpush.bf16.msra.mxu0 %v1097
      %1113 = vmatpush.bf16.msra.mxu0 %v1096
      %1114 = vmatpush.bf16.msra.mxu0 %v1095
      %1115 = vmatpush.bf16.msra.mxu0 %v1094
      %1116 = vmatpush.bf16.msra.mxu0 %v1093
      %1117 = vmatmul.bf16.gmra.mxu0 %v605
      %v1118 = vpop.f32.mrf.mxu0
      %v1119 = vadd.f32 %v858, %v1118
      %v1120 = vpop.f32.mrf.mxu0
      %v1121 = vadd.f32 %v860, %v1120
      %1122 = vmatmul.bf16.gmra.mxu0 %v606
      %v1123 = vpop.f32.mrf.mxu0
      %v1124 = vadd.f32 %v863, %v1123
      %v1125 = vpop.f32.mrf.mxu0
      %v1126 = vadd.f32 %v865, %v1125
      %1127 = vmatmul.bf16.gmra.mxu0 %v607
      %v1128 = vpop.f32.mrf.mxu0
      %v1129 = vadd.f32 %v868, %v1128
      %v1130 = vpop.f32.mrf.mxu0
      %v1131 = vadd.f32 %v870, %v1130
      %1132 = vmatmul.bf16.gmra.mxu0 %v608
      %v1133 = vpop.f32.mrf.mxu0
      %v1134 = vadd.f32 %v873, %v1133
      %v1135 = vpop.f32.mrf.mxu0
      %v1136 = vadd.f32 %v875, %v1135
      %1137 = vmatmul.bf16.gmra.mxu0 %v609
      %v1138 = vpop.f32.mrf.mxu0
      %v1139 = vadd.f32 %v878, %v1138
      %v1140 = vpop.f32.mrf.mxu0
      %v1141 = vadd.f32 %v880, %v1140
      %1142 = vmatmul.bf16.gmra.mxu0 %v610
      %v1143 = vpop.f32.mrf.mxu0
      %v1144 = vadd.f32 %v883, %v1143
      %v1145 = vpop.f32.mrf.mxu0
      %v1146 = vadd.f32 %v885, %v1145
      %1147 = vmatmul.bf16.gmra.mxu0 %v611
      %v1148 = vpop.f32.mrf.mxu0
      %v1149 = vadd.f32 %v888, %v1148
      %v1150 = vpop.f32.mrf.mxu0
      %v1151 = vadd.f32 %v890, %v1150
      %1152 = vmatmul.bf16.gmra.mxu0 %v612
      %v1153 = vpop.f32.mrf.mxu0
      %v1154 = vadd.f32 %v893, %v1153
      %v1155 = vpop.f32.mrf.mxu0
      %v1156 = vadd.f32 %v895, %v1155
      %1157 = vmatmul.bf16.gmra.mxu0 %v613
      %v1158 = vpop.f32.mrf.mxu0
      %v1159 = vadd.f32 %v898, %v1158
      %v1160 = vpop.f32.mrf.mxu0
      %v1161 = vadd.f32 %v900, %v1160
      %1162 = vmatmul.bf16.gmra.mxu0 %v614
      %v1163 = vpop.f32.mrf.mxu0
      %v1164 = vadd.f32 %v903, %v1163
      %v1165 = vpop.f32.mrf.mxu0
      %v1166 = vadd.f32 %v905, %v1165
      %1167 = vmatmul.bf16.gmra.mxu0 %v615
      %v1168 = vpop.f32.mrf.mxu0
      %v1169 = vadd.f32 %v908, %v1168
      %v1170 = vpop.f32.mrf.mxu0
      %v1171 = vadd.f32 %v910, %v1170
      %1172 = vmatmul.bf16.gmra.mxu0 %v616
      %v1173 = vpop.f32.mrf.mxu0
      %v1174 = vadd.f32 %v913, %v1173
      %v1175 = vpop.f32.mrf.mxu0
      %v1176 = vadd.f32 %v915, %v1175
      %1177 = vmatmul.bf16.gmra.mxu0 %v617
      %v1178 = vpop.f32.mrf.mxu0
      %v1179 = vadd.f32 %v918, %v1178
      %v1180 = vpop.f32.mrf.mxu0
      %v1181 = vadd.f32 %v920, %v1180
      %1182 = vmatmul.bf16.gmra.mxu0 %v618
      %v1183 = vpop.f32.mrf.mxu0
      %v1184 = vadd.f32 %v923, %v1183
      %v1185 = vpop.f32.mrf.mxu0
      %v1186 = vadd.f32 %v925, %v1185
      %1187 = vmatmul.bf16.gmra.mxu0 %v619
      %v1188 = vpop.f32.mrf.mxu0
      %v1189 = vadd.f32 %v928, %v1188
      %v1190 = vpop.f32.mrf.mxu0
      %v1191 = vadd.f32 %v930, %v1190
      %1192 = vmatmul.bf16.gmra.mxu0 %v620
      %v1193 = vpop.f32.mrf.mxu0
      %v1194 = vadd.f32 %v933, %v1193
      %v1195 = vpop.f32.mrf.mxu0
      %v1196 = vadd.f32 %v935, %v1195
      %1197 = vmatmul.bf16.gmra.mxu0 %v621
      %v1198 = vpop.f32.mrf.mxu0
      %v1199 = vadd.f32 %v938, %v1198
      %v1200 = vpop.f32.mrf.mxu0
      %v1201 = vadd.f32 %v940, %v1200
      %1202 = vmatmul.bf16.gmra.mxu0 %v622
      %v1203 = vpop.f32.mrf.mxu0
      %v1204 = vadd.f32 %v943, %v1203
      %v1205 = vpop.f32.mrf.mxu0
      %v1206 = vadd.f32 %v945, %v1205
      %1207 = vmatmul.bf16.gmra.mxu0 %v623
      %v1208 = vpop.f32.mrf.mxu0
      %v1209 = vadd.f32 %v948, %v1208
      %v1210 = vpop.f32.mrf.mxu0
      %v1211 = vadd.f32 %v950, %v1210
      %1212 = vmatmul.bf16.gmra.mxu0 %v624
      %v1213 = vpop.f32.mrf.mxu0
      %v1214 = vadd.f32 %v953, %v1213
      %v1215 = vpop.f32.mrf.mxu0
      %v1216 = vadd.f32 %v955, %v1215
      %1217 = vmatmul.bf16.gmra.mxu0 %v625
      %v1218 = vpop.f32.mrf.mxu0
      %v1219 = vadd.f32 %v958, %v1218
      %v1220 = vpop.f32.mrf.mxu0
      %v1221 = vadd.f32 %v960, %v1220
      %1222 = vmatmul.bf16.gmra.mxu0 %v626
      %v1223 = vpop.f32.mrf.mxu0
      %v1224 = vadd.f32 %v963, %v1223
      %v1225 = vpop.f32.mrf.mxu0
      %v1226 = vadd.f32 %v965, %v1225
      %1227 = vmatmul.bf16.gmra.mxu0 %v627
      %v1228 = vpop.f32.mrf.mxu0
      %v1229 = vadd.f32 %v968, %v1228
      %v1230 = vpop.f32.mrf.mxu0
      %v1231 = vadd.f32 %v970, %v1230
      %1232 = vmatmul.bf16.gmra.mxu0 %v628
      %v1233 = vpop.f32.mrf.mxu0
      %v1234 = vadd.f32 %v973, %v1233
      %v1235 = vpop.f32.mrf.mxu0
      %v1236 = vadd.f32 %v975, %v1235
      %1237 = vmatmul.bf16.gmra.mxu0 %v629
      %v1238 = vpop.f32.mrf.mxu0
      %v1239 = vadd.f32 %v978, %v1238
      %v1240 = vpop.f32.mrf.mxu0
      %v1241 = vadd.f32 %v980, %v1240
      %1242 = vmatmul.bf16.gmra.mxu0 %v630
      %v1243 = vpop.f32.mrf.mxu0
      %v1244 = vadd.f32 %v983, %v1243
      %v1245 = vpop.f32.mrf.mxu0
      %v1246 = vadd.f32 %v985, %v1245
      %1247 = vmatmul.bf16.gmra.mxu0 %v631
      %v1248 = vpop.f32.mrf.mxu0
      %v1249 = vadd.f32 %v988, %v1248
      %v1250 = vpop.f32.mrf.mxu0
      %v1251 = vadd.f32 %v990, %v1250
      %1252 = vmatmul.bf16.gmra.mxu0 %v632
      %v1253 = vpop.f32.mrf.mxu0
      %v1254 = vadd.f32 %v993, %v1253
      %v1255 = vpop.f32.mrf.mxu0
      %v1256 = vadd.f32 %v995, %v1255
      %1257 = vmatmul.bf16.gmra.mxu0 %v633
      %v1258 = vpop.f32.mrf.mxu0
      %v1259 = vadd.f32 %v998, %v1258
      %v1260 = vpop.f32.mrf.mxu0
      %v1261 = vadd.f32 %v1000, %v1260
      %1262 = vmatmul.bf16.gmra.mxu0 %v634
      %v1263 = vpop.f32.mrf.mxu0
      %v1264 = vadd.f32 %v1003, %v1263
      %v1265 = vpop.f32.mrf.mxu0
      %v1266 = vadd.f32 %v1005, %v1265
      %1267 = vmatmul.bf16.gmra.mxu0 %v635
      %v1268 = vpop.f32.mrf.mxu0
      %v1269 = vadd.f32 %v1008, %v1268
      %v1270 = vpop.f32.mrf.mxu0
      %v1271 = vadd.f32 %v1010, %v1270
      %1272 = vmatmul.bf16.gmra.mxu0 %v636
      %v1273 = vpop.f32.mrf.mxu0
      %v1274 = vadd.f32 %v1013, %v1273
      %v1275 = vpop.f32.mrf.mxu0
      %v1276 = vadd.f32 %v1015, %v1275
      %1277 = vmatmul.bf16.gmra.mxu0 %v637
      %v1278 = vpop.f32.mrf.mxu0
      %v1279 = vadd.f32 %v1018, %v1278
      %v1280 = vpop.f32.mrf.mxu0
      %v1281 = vadd.f32 %v1020, %v1280
      %1282 = vmatmul.bf16.gmra.mxu0 %v638
      %v1283 = vpop.f32.mrf.mxu0
      %v1284 = vadd.f32 %v1023, %v1283
      %v1285 = vpop.f32.mrf.mxu0
      %v1286 = vadd.f32 %v1025, %v1285
      %1287 = vmatmul.bf16.gmra.mxu0 %v639
      %v1288 = vpop.f32.mrf.mxu0
      %v1289 = vadd.f32 %v1028, %v1288
      %v1290 = vpop.f32.mrf.mxu0
      %v1291 = vadd.f32 %v1030, %v1290
      %1292 = vmatmul.bf16.gmra.mxu0 %v640
      %v1293 = vpop.f32.mrf.mxu0
      %v1294 = vadd.f32 %v1033, %v1293
      %v1295 = vpop.f32.mrf.mxu0
      %v1296 = vadd.f32 %v1035, %v1295
      %1297 = vmatmul.bf16.gmra.mxu0 %v641
      %v1298 = vpop.f32.mrf.mxu0
      %v1299 = vadd.f32 %v1038, %v1298
      %v1300 = vpop.f32.mrf.mxu0
      %v1301 = vadd.f32 %v1040, %v1300
      %1302 = vmatmul.bf16.gmra.mxu0 %v642
      %v1303 = vpop.f32.mrf.mxu0
      %v1304 = vadd.f32 %v1043, %v1303
      %v1305 = vpop.f32.mrf.mxu0
      %v1306 = vadd.f32 %v1045, %v1305
      %1307 = vmatmul.bf16.gmra.mxu0 %v643
      %v1308 = vpop.f32.mrf.mxu0
      %v1309 = vadd.f32 %v1048, %v1308
      %v1310 = vpop.f32.mrf.mxu0
      %v1311 = vadd.f32 %v1050, %v1310
      %1312 = vmatmul.bf16.gmra.mxu0 %v644
      %v1313 = vpop.f32.mrf.mxu0
      %v1314 = vadd.f32 %v1053, %v1313
      %v1315 = vpop.f32.mrf.mxu0
      %v1316 = vadd.f32 %v1055, %v1315
      %1317 = vmatmul.bf16.gmra.mxu0 %v645
      %v1318 = vpop.f32.mrf.mxu0
      %v1319 = vadd.f32 %v1058, %v1318
      %v1320 = vpop.f32.mrf.mxu0
      %1321 = vdwg.mxu0
      %v1322 = vld [vmem:[%s523 + $0x7] sm:$0xff]
      %v1323 = vld [vmem:[%s523 + $0xf] sm:$0xff]
      %v1324 = vld [vmem:[%s523 + $0x17] sm:$0xff]
      %v1325 = vld [vmem:[%s523 + $0x1f] sm:$0xff]
      %v1326 = vld [vmem:[%s523 + $0x27] sm:$0xff]
      %v1327 = vld [vmem:[%s523 + $0x2f] sm:$0xff]
      %v1328 = vld [vmem:[%s523 + $0x37] sm:$0xff]
      %v1329 = vld [vmem:[%s523 + $0x3f] sm:$0xff]
      %v1330 = vld [vmem:[%s523 + $0x47] sm:$0xff]
      %v1331 = vld [vmem:[%s523 + $0x4f] sm:$0xff]
      %v1332 = vld [vmem:[%s523 + $0x57] sm:$0xff]
      %v1333 = vld [vmem:[%s523 + $0x5f] sm:$0xff]
      %v1334 = vld [vmem:[%s523 + $0x67] sm:$0xff]
      %v1335 = vld [vmem:[%s523 + $0x6f] sm:$0xff]
      %v1336 = vld [vmem:[%s523 + $0x77] sm:$0xff]
      %v1337 = vld [vmem:[%s523 + $0x7f] sm:$0xff]
      %v1338 = vld [vmem:[%s523 + $0x87] sm:$0xff]
      %v1339 = vld [vmem:[%s523 + $0x8f] sm:$0xff]
      %v1340 = vld [vmem:[%s523 + $0x97] sm:$0xff]
      %v1341 = vld [vmem:[%s523 + $0x9f] sm:$0xff]
      %v1342 = vld [vmem:[%s523 + $0xa7] sm:$0xff]
      %v1343 = vld [vmem:[%s523 + $0xaf] sm:$0xff]
      %v1344 = vld [vmem:[%s523 + $0xb7] sm:$0xff]
      %v1345 = vld [vmem:[%s523 + $0xbf] sm:$0xff]
      %v1346 = vld [vmem:[%s523 + $0xc7] sm:$0xff]
      %v1347 = vld [vmem:[%s523 + $0xcf] sm:$0xff]
      %v1348 = vld [vmem:[%s523 + $0xd7] sm:$0xff]
      %v1349 = vld [vmem:[%s523 + $0xdf] sm:$0xff]
      %v1350 = vld [vmem:[%s523 + $0xe7] sm:$0xff]
      %v1351 = vld [vmem:[%s523 + $0xef] sm:$0xff]
      %v1352 = vld [vmem:[%s523 + $0xf7] sm:$0xff]
      %v1353 = vld [vmem:[%s523 + $0xff] sm:$0xff]
      %v1354 = vld [vmem:[%s523 + $0x107] sm:$0xff]
      %v1355 = vld [vmem:[%s523 + $0x10f] sm:$0xff]
      %v1356 = vld [vmem:[%s523 + $0x117] sm:$0xff]
      %v1357 = vld [vmem:[%s523 + $0x11f] sm:$0xff]
      %v1358 = vld [vmem:[%s523 + $0x127] sm:$0xff]
      %v1359 = vld [vmem:[%s523 + $0x12f] sm:$0xff]
      %v1360 = vld [vmem:[%s523 + $0x137] sm:$0xff]
      %v1361 = vld [vmem:[%s523 + $0x13f] sm:$0xff]
      %v1362 = vld [vmem:[%s523 + $0x147] sm:$0xff]
      %v1363 = vld [vmem:[%s523 + $0x14f] sm:$0xff]
      %v1364 = vld [vmem:[%s523 + $0x157] sm:$0xff]
      %v1365 = vld [vmem:[%s523 + $0x15f] sm:$0xff]
      %v1366 = vld [vmem:[%s523 + $0x167] sm:$0xff]
      %v1367 = vld [vmem:[%s523 + $0x16f] sm:$0xff]
      %v1368 = vld [vmem:[%s523 + $0x177] sm:$0xff]
      %v1369 = vld [vmem:[%s523 + $0x17f] sm:$0xff]
      %v1370 = vld [vmem:[%s523 + $0x187] sm:$0xff]
      %v1371 = vld [vmem:[%s523 + $0x18f] sm:$0xff]
      %v1372 = vld [vmem:[%s523 + $0x197] sm:$0xff]
      %v1373 = vld [vmem:[%s523 + $0x19f] sm:$0xff]
      %v1374 = vld [vmem:[%s523 + $0x1a7] sm:$0xff]
      %v1375 = vld [vmem:[%s523 + $0x1af] sm:$0xff]
      %v1376 = vld [vmem:[%s523 + $0x1b7] sm:$0xff]
      %v1377 = vld [vmem:[%s523 + $0x1bf] sm:$0xff]
      %v1378 = vld [vmem:[%s523 + $0x1c7] sm:$0xff]
      %v1379 = vld [vmem:[%s523 + $0x1cf] sm:$0xff]
      %v1380 = vld [vmem:[%s523 + $0x1d7] sm:$0xff]
      %v1381 = vld [vmem:[%s523 + $0x1df] sm:$0xff]
      %v1382 = vld [vmem:[%s523 + $0x1e7] sm:$0xff]
      %v1383 = vld [vmem:[%s523 + $0x1ef] sm:$0xff]
      %v1384 = vld [vmem:[%s523 + $0x1f7] sm:$0xff]
      %v1385 = vld [vmem:[%s523 + $0x1ff] sm:$0xff]
      %v1386 = vld [vmem:[%s523 + $0x207] sm:$0xff]
      %v1387 = vld [vmem:[%s523 + $0x20f] sm:$0xff]
      %v1388 = vld [vmem:[%s523 + $0x217] sm:$0xff]
      %v1389 = vld [vmem:[%s523 + $0x21f] sm:$0xff]
      %v1390 = vld [vmem:[%s523 + $0x227] sm:$0xff]
      %v1391 = vld [vmem:[%s523 + $0x22f] sm:$0xff]
      %v1392 = vld [vmem:[%s523 + $0x237] sm:$0xff]
      %v1393 = vld [vmem:[%s523 + $0x23f] sm:$0xff]
      %v1394 = vld [vmem:[%s523 + $0x247] sm:$0xff]
      %v1395 = vld [vmem:[%s523 + $0x24f] sm:$0xff]
      %v1396 = vld [vmem:[%s523 + $0x257] sm:$0xff]
      %v1397 = vld [vmem:[%s523 + $0x25f] sm:$0xff]
      %v1398 = vld [vmem:[%s523 + $0x267] sm:$0xff]
      %v1399 = vld [vmem:[%s523 + $0x26f] sm:$0xff]
      %v1400 = vld [vmem:[%s523 + $0x277] sm:$0xff]
      %v1401 = vld [vmem:[%s523 + $0x27f] sm:$0xff]
      %v1402 = vld [vmem:[%s523 + $0x287] sm:$0xff]
      %v1403 = vpack.c.bf16 %v1323, %v1322
      %v1404 = vpack.c.bf16 %v1325, %v1324
      %v1405 = vpack.c.bf16 %v1327, %v1326
      %v1406 = vpack.c.bf16 %v1329, %v1328
      %v1407 = vpack.c.bf16 %v1331, %v1330
      %v1408 = vpack.c.bf16 %v1333, %v1332
      %v1409 = vpack.c.bf16 %v1335, %v1334
      %v1410 = vpack.c.bf16 %v1337, %v1336
      %v1411 = vpack.c.bf16 %v1339, %v1338
      %v1412 = vpack.c.bf16 %v1341, %v1340
      %v1413 = vpack.c.bf16 %v1343, %v1342
      %v1414 = vpack.c.bf16 %v1345, %v1344
      %v1415 = vpack.c.bf16 %v1347, %v1346
      %v1416 = vpack.c.bf16 %v1349, %v1348
      %v1417 = vpack.c.bf16 %v1351, %v1350
      %v1418 = vpack.c.bf16 %v1353, %v1352
      %v1419 = vpack.c.bf16 %v1355, %v1354
      %v1420 = vpack.c.bf16 %v1357, %v1356
      %v1421 = vpack.c.bf16 %v1359, %v1358
      %v1422 = vpack.c.bf16 %v1361, %v1360
      %v1423 = vpack.c.bf16 %v1363, %v1362
      %v1424 = vpack.c.bf16 %v1365, %v1364
      %v1425 = vpack.c.bf16 %v1367, %v1366
      %v1426 = vpack.c.bf16 %v1369, %v1368
      %v1427 = vpack.c.bf16 %v1371, %v1370
      %v1428 = vpack.c.bf16 %v1373, %v1372
      %v1429 = vpack.c.bf16 %v1375, %v1374
      %v1430 = vpack.c.bf16 %v1377, %v1376
      %v1431 = vpack.c.bf16 %v1379, %v1378
      %v1432 = vpack.c.bf16 %v1381, %v1380
      %v1433 = vpack.c.bf16 %v1383, %v1382
      %v1434 = vpack.c.bf16 %v1385, %v1384
      %v1435 = vpack.c.bf16 %v1387, %v1386
      %v1436 = vpack.c.bf16 %v1389, %v1388
      %v1437 = vpack.c.bf16 %v1391, %v1390
      %v1438 = vpack.c.bf16 %v1393, %v1392
      %v1439 = vpack.c.bf16 %v1395, %v1394
      %v1440 = vpack.c.bf16 %v1397, %v1396
      %v1441 = vpack.c.bf16 %v1399, %v1398
      %v1442 = vpack.c.bf16 %v1401, %v1400
      %v1443 = vpack.c.bf16 %v1402, %v1402
      %v1444 = vld [vmem:[%s329 + $0x80] sm:$0xf]
      %v1445 = vld [vmem:[%s329 + $0x84] sm:$0xf]
      %v1446 = vld [vmem:[%s329 + $0x88] sm:$0xf]
      %v1447 = vld [vmem:[%s329 + $0x8c] sm:$0xf]
      %v1448 = vld [vmem:[%s329 + $0x90] sm:$0xf]
      %v1449 = vld [vmem:[%s329 + $0x94] sm:$0xf]
      %v1450 = vld [vmem:[%s329 + $0x98] sm:$0xf]
      %v1451 = vld [vmem:[%s329 + $0x9c] sm:$0xf]
      %v1452 = vld [vmem:[%s329 + $0xa0] sm:$0xf]
      %v1453 = vld [vmem:[%s329 + $0xa4] sm:$0xf]
      %v1454 = vld [vmem:[%s329 + $0xa8] sm:$0xf]
      %v1455 = vld [vmem:[%s329 + $0xac] sm:$0xf]
      %v1456 = vld [vmem:[%s329 + $0xb0] sm:$0xf]
      %v1457 = vld [vmem:[%s329 + $0xb4] sm:$0xf]
      %v1458 = vld [vmem:[%s329 + $0xb8] sm:$0xf]
      %v1459 = vld [vmem:[%s329 + $0xbc] sm:$0xf]
      %v1476 = vunpack.c.l.b16 %v1444
      %v1477 = vunpack.c.l.b16 %v1445
      %v1478 = vunpack.c.l.b16 %v1446
      %v1479 = vunpack.c.l.b16 %v1447
      %v1480 = vunpack.c.l.b16 %v1448
      %v1481 = vunpack.c.l.b16 %v1449
      %v1482 = vunpack.c.l.b16 %v1450
      %v1483 = vunpack.c.l.b16 %v1451
      %v1484 = vunpack.c.l.b16 %v1452
      %v1485 = vunpack.c.l.b16 %v1453
      %v1486 = vunpack.c.l.b16 %v1454
      %v1487 = vunpack.c.l.b16 %v1455
      %v1488 = vunpack.c.l.b16 %v1456
      %v1489 = vunpack.c.l.b16 %v1457
      %v1490 = vunpack.c.l.b16 %v1458
      %v1491 = vunpack.c.l.b16 %v1459
      %v1492 = vpack.c.b16 %v1477, %v1476
      %v1493 = vpack.c.b16 %v1479, %v1478
      %v1494 = vpack.c.b16 %v1481, %v1480
      %v1495 = vpack.c.b16 %v1483, %v1482
      %v1496 = vpack.c.b16 %v1485, %v1484
      %v1497 = vpack.c.b16 %v1487, %v1486
      %v1498 = vpack.c.b16 %v1489, %v1488
      %v1499 = vpack.c.b16 %v1491, %v1490
      %1508 = vmatpush.bf16.msra.mxu0 %v1499
      %1509 = vmatpush.bf16.msra.mxu0 %v1498
      %1510 = vmatpush.bf16.msra.mxu0 %v1497
      %1511 = vmatpush.bf16.msra.mxu0 %v1496
      %1512 = vmatpush.bf16.msra.mxu0 %v1495
      %1513 = vmatpush.bf16.msra.mxu0 %v1494
      %1514 = vmatpush.bf16.msra.mxu0 %v1493
      %1515 = vmatpush.bf16.msra.mxu0 %v1492
      %1516 = vmatmul.bf16.gmra.mxu0 %v1403
      %v1517 = vpop.f32.mrf.mxu0
      %v1518 = vadd.f32 0.0, %v1517
      %v1519 = vpop.f32.mrf.mxu0
      %v1520 = vadd.f32 0.0, %v1519
      %1521 = vmatmul.bf16.gmra.mxu0 %v1404
      %v1522 = vpop.f32.mrf.mxu0
      %v1523 = vadd.f32 0.0, %v1522
      %v1524 = vpop.f32.mrf.mxu0
      %v1525 = vadd.f32 0.0, %v1524
      %1526 = vmatmul.bf16.gmra.mxu0 %v1405
      %v1527 = vpop.f32.mrf.mxu0
      %v1528 = vadd.f32 0.0, %v1527
      %v1529 = vpop.f32.mrf.mxu0
      %v1530 = vadd.f32 0.0, %v1529
      %1531 = vmatmul.bf16.gmra.mxu0 %v1406
      %v1532 = vpop.f32.mrf.mxu0
      %v1533 = vadd.f32 0.0, %v1532
      %v1534 = vpop.f32.mrf.mxu0
      %v1535 = vadd.f32 0.0, %v1534
      %1536 = vmatmul.bf16.gmra.mxu0 %v1407
      %v1537 = vpop.f32.mrf.mxu0
      %v1538 = vadd.f32 0.0, %v1537
      %v1539 = vpop.f32.mrf.mxu0
      %v1540 = vadd.f32 0.0, %v1539
      %1541 = vmatmul.bf16.gmra.mxu0 %v1408
      %v1542 = vpop.f32.mrf.mxu0
      %v1543 = vadd.f32 0.0, %v1542
      %v1544 = vpop.f32.mrf.mxu0
      %v1545 = vadd.f32 0.0, %v1544
      %1546 = vmatmul.bf16.gmra.mxu0 %v1409
      %v1547 = vpop.f32.mrf.mxu0
      %v1548 = vadd.f32 0.0, %v1547
      %v1549 = vpop.f32.mrf.mxu0
      %v1550 = vadd.f32 0.0, %v1549
      %1551 = vmatmul.bf16.gmra.mxu0 %v1410
      %v1552 = vpop.f32.mrf.mxu0
      %v1553 = vadd.f32 0.0, %v1552
      %v1554 = vpop.f32.mrf.mxu0
      %v1555 = vadd.f32 0.0, %v1554
      %1556 = vmatmul.bf16.gmra.mxu0 %v1411
      %v1557 = vpop.f32.mrf.mxu0
      %v1558 = vadd.f32 0.0, %v1557
      %v1559 = vpop.f32.mrf.mxu0
      %v1560 = vadd.f32 0.0, %v1559
      %1561 = vmatmul.bf16.gmra.mxu0 %v1412
      %v1562 = vpop.f32.mrf.mxu0
      %v1563 = vadd.f32 0.0, %v1562
      %v1564 = vpop.f32.mrf.mxu0
      %v1565 = vadd.f32 0.0, %v1564
      %1566 = vmatmul.bf16.gmra.mxu0 %v1413
      %v1567 = vpop.f32.mrf.mxu0
      %v1568 = vadd.f32 0.0, %v1567
      %v1569 = vpop.f32.mrf.mxu0
      %v1570 = vadd.f32 0.0, %v1569
      %1571 = vmatmul.bf16.gmra.mxu0 %v1414
      %v1572 = vpop.f32.mrf.mxu0
      %v1573 = vadd.f32 0.0, %v1572
      %v1574 = vpop.f32.mrf.mxu0
      %v1575 = vadd.f32 0.0, %v1574
      %1576 = vmatmul.bf16.gmra.mxu0 %v1415
      %v1577 = vpop.f32.mrf.mxu0
      %v1578 = vadd.f32 0.0, %v1577
      %v1579 = vpop.f32.mrf.mxu0
      %v1580 = vadd.f32 0.0, %v1579
      %1581 = vmatmul.bf16.gmra.mxu0 %v1416
      %v1582 = vpop.f32.mrf.mxu0
      %v1583 = vadd.f32 0.0, %v1582
      %v1584 = vpop.f32.mrf.mxu0
      %v1585 = vadd.f32 0.0, %v1584
      %1586 = vmatmul.bf16.gmra.mxu0 %v1417
      %v1587 = vpop.f32.mrf.mxu0
      %v1588 = vadd.f32 0.0, %v1587
      %v1589 = vpop.f32.mrf.mxu0
      %v1590 = vadd.f32 0.0, %v1589
      %1591 = vmatmul.bf16.gmra.mxu0 %v1418
      %v1592 = vpop.f32.mrf.mxu0
      %v1593 = vadd.f32 0.0, %v1592
      %v1594 = vpop.f32.mrf.mxu0
      %v1595 = vadd.f32 0.0, %v1594
      %1596 = vmatmul.bf16.gmra.mxu0 %v1419
      %v1597 = vpop.f32.mrf.mxu0
      %v1598 = vadd.f32 0.0, %v1597
      %v1599 = vpop.f32.mrf.mxu0
      %v1600 = vadd.f32 0.0, %v1599
      %1601 = vmatmul.bf16.gmra.mxu0 %v1420
      %v1602 = vpop.f32.mrf.mxu0
      %v1603 = vadd.f32 0.0, %v1602
      %v1604 = vpop.f32.mrf.mxu0
      %v1605 = vadd.f32 0.0, %v1604
      %1606 = vmatmul.bf16.gmra.mxu0 %v1421
      %v1607 = vpop.f32.mrf.mxu0
      %v1608 = vadd.f32 0.0, %v1607
      %v1609 = vpop.f32.mrf.mxu0
      %v1610 = vadd.f32 0.0, %v1609
      %1611 = vmatmul.bf16.gmra.mxu0 %v1422
      %v1612 = vpop.f32.mrf.mxu0
      %v1613 = vadd.f32 0.0, %v1612
      %v1614 = vpop.f32.mrf.mxu0
      %v1615 = vadd.f32 0.0, %v1614
      %1616 = vmatmul.bf16.gmra.mxu0 %v1423
      %v1617 = vpop.f32.mrf.mxu0
      %v1618 = vadd.f32 0.0, %v1617
      %v1619 = vpop.f32.mrf.mxu0
      %v1620 = vadd.f32 0.0, %v1619
      %1621 = vmatmul.bf16.gmra.mxu0 %v1424
      %v1622 = vpop.f32.mrf.mxu0
      %v1623 = vadd.f32 0.0, %v1622
      %v1624 = vpop.f32.mrf.mxu0
      %v1625 = vadd.f32 0.0, %v1624
      %1626 = vmatmul.bf16.gmra.mxu0 %v1425
      %v1627 = vpop.f32.mrf.mxu0
      %v1628 = vadd.f32 0.0, %v1627
      %v1629 = vpop.f32.mrf.mxu0
      %v1630 = vadd.f32 0.0, %v1629
      %1631 = vmatmul.bf16.gmra.mxu0 %v1426
      %v1632 = vpop.f32.mrf.mxu0
      %v1633 = vadd.f32 0.0, %v1632
      %v1634 = vpop.f32.mrf.mxu0
      %v1635 = vadd.f32 0.0, %v1634
      %1636 = vmatmul.bf16.gmra.mxu0 %v1427
      %v1637 = vpop.f32.mrf.mxu0
      %v1638 = vadd.f32 0.0, %v1637
      %v1639 = vpop.f32.mrf.mxu0
      %v1640 = vadd.f32 0.0, %v1639
      %1641 = vmatmul.bf16.gmra.mxu0 %v1428
      %v1642 = vpop.f32.mrf.mxu0
      %v1643 = vadd.f32 0.0, %v1642
      %v1644 = vpop.f32.mrf.mxu0
      %v1645 = vadd.f32 0.0, %v1644
      %1646 = vmatmul.bf16.gmra.mxu0 %v1429
      %v1647 = vpop.f32.mrf.mxu0
      %v1648 = vadd.f32 0.0, %v1647
      %v1649 = vpop.f32.mrf.mxu0
      %v1650 = vadd.f32 0.0, %v1649
      %1651 = vmatmul.bf16.gmra.mxu0 %v1430
      %v1652 = vpop.f32.mrf.mxu0
      %v1653 = vadd.f32 0.0, %v1652
      %v1654 = vpop.f32.mrf.mxu0
      %v1655 = vadd.f32 0.0, %v1654
      %1656 = vmatmul.bf16.gmra.mxu0 %v1431
      %v1657 = vpop.f32.mrf.mxu0
      %v1658 = vadd.f32 0.0, %v1657
      %v1659 = vpop.f32.mrf.mxu0
      %v1660 = vadd.f32 0.0, %v1659
      %1661 = vmatmul.bf16.gmra.mxu0 %v1432
      %v1662 = vpop.f32.mrf.mxu0
      %v1663 = vadd.f32 0.0, %v1662
      %v1664 = vpop.f32.mrf.mxu0
      %v1665 = vadd.f32 0.0, %v1664
      %1666 = vmatmul.bf16.gmra.mxu0 %v1433
      %v1667 = vpop.f32.mrf.mxu0
      %v1668 = vadd.f32 0.0, %v1667
      %v1669 = vpop.f32.mrf.mxu0
      %v1670 = vadd.f32 0.0, %v1669
      %1671 = vmatmul.bf16.gmra.mxu0 %v1434
      %v1672 = vpop.f32.mrf.mxu0
      %v1673 = vadd.f32 0.0, %v1672
      %v1674 = vpop.f32.mrf.mxu0
      %v1675 = vadd.f32 0.0, %v1674
      %1676 = vmatmul.bf16.gmra.mxu0 %v1435
      %v1677 = vpop.f32.mrf.mxu0
      %v1678 = vadd.f32 0.0, %v1677
      %v1679 = vpop.f32.mrf.mxu0
      %v1680 = vadd.f32 0.0, %v1679
      %1681 = vmatmul.bf16.gmra.mxu0 %v1436
      %v1682 = vpop.f32.mrf.mxu0
      %v1683 = vadd.f32 0.0, %v1682
      %v1684 = vpop.f32.mrf.mxu0
      %v1685 = vadd.f32 0.0, %v1684
      %1686 = vmatmul.bf16.gmra.mxu0 %v1437
      %v1687 = vpop.f32.mrf.mxu0
      %v1688 = vadd.f32 0.0, %v1687
      %v1689 = vpop.f32.mrf.mxu0
      %v1690 = vadd.f32 0.0, %v1689
      %1691 = vmatmul.bf16.gmra.mxu0 %v1438
      %v1692 = vpop.f32.mrf.mxu0
      %v1693 = vadd.f32 0.0, %v1692
      %v1694 = vpop.f32.mrf.mxu0
      %v1695 = vadd.f32 0.0, %v1694
      %1696 = vmatmul.bf16.gmra.mxu0 %v1439
      %v1697 = vpop.f32.mrf.mxu0
      %v1698 = vadd.f32 0.0, %v1697
      %v1699 = vpop.f32.mrf.mxu0
      %v1700 = vadd.f32 0.0, %v1699
      %1701 = vmatmul.bf16.gmra.mxu0 %v1440
      %v1702 = vpop.f32.mrf.mxu0
      %v1703 = vadd.f32 0.0, %v1702
      %v1704 = vpop.f32.mrf.mxu0
      %v1705 = vadd.f32 0.0, %v1704
      %1706 = vmatmul.bf16.gmra.mxu0 %v1441
      %v1707 = vpop.f32.mrf.mxu0
      %v1708 = vadd.f32 0.0, %v1707
      %v1709 = vpop.f32.mrf.mxu0
      %v1710 = vadd.f32 0.0, %v1709
      %1711 = vmatmul.bf16.gmra.mxu0 %v1442
      %v1712 = vpop.f32.mrf.mxu0
      %v1713 = vadd.f32 0.0, %v1712
      %v1714 = vpop.f32.mrf.mxu0
      %v1715 = vadd.f32 0.0, %v1714
      %1716 = vmatmul.bf16.gmra.mxu0 %v1443
      %v1717 = vpop.f32.mrf.mxu0
      %v1718 = vadd.f32 0.0, %v1717
      %v1719 = vpop.f32.mrf.mxu0
      %1720 = vdwg.mxu0
      %v1721 = vadd.f32 %v1119, %v1518
      %v1722 = vadd.f32 %v1121, %v1520
      %v1723 = vadd.f32 %v1124, %v1523
      %v1724 = vadd.f32 %v1126, %v1525
      %v1725 = vadd.f32 %v1129, %v1528
      %v1726 = vadd.f32 %v1131, %v1530
      %v1727 = vadd.f32 %v1134, %v1533
      %v1728 = vadd.f32 %v1136, %v1535
      %v1729 = vadd.f32 %v1139, %v1538
      %v1730 = vadd.f32 %v1141, %v1540
      %v1731 = vadd.f32 %v1144, %v1543
      %v1732 = vadd.f32 %v1146, %v1545
      %v1733 = vadd.f32 %v1149, %v1548
      %v1734 = vadd.f32 %v1151, %v1550
      %v1735 = vadd.f32 %v1154, %v1553
      %v1736 = vadd.f32 %v1156, %v1555
      %v1737 = vadd.f32 %v1159, %v1558
      %v1738 = vadd.f32 %v1161, %v1560
      %v1739 = vadd.f32 %v1164, %v1563
      %v1740 = vadd.f32 %v1166, %v1565
      %v1741 = vadd.f32 %v1169, %v1568
      %v1742 = vadd.f32 %v1171, %v1570
      %v1743 = vadd.f32 %v1174, %v1573
      %v1744 = vadd.f32 %v1176, %v1575
      %v1745 = vadd.f32 %v1179, %v1578
      %v1746 = vadd.f32 %v1181, %v1580
      %v1747 = vadd.f32 %v1184, %v1583
      %v1748 = vadd.f32 %v1186, %v1585
      %v1749 = vadd.f32 %v1189, %v1588
      %v1750 = vadd.f32 %v1191, %v1590
      %v1751 = vadd.f32 %v1194, %v1593
      %v1752 = vadd.f32 %v1196, %v1595
      %v1753 = vadd.f32 %v1199, %v1598
      %v1754 = vadd.f32 %v1201, %v1600
      %v1755 = vadd.f32 %v1204, %v1603
      %v1756 = vadd.f32 %v1206, %v1605
      %v1757 = vadd.f32 %v1209, %v1608
      %v1758 = vadd.f32 %v1211, %v1610
      %v1759 = vadd.f32 %v1214, %v1613
      %v1760 = vadd.f32 %v1216, %v1615
      %v1761 = vadd.f32 %v1219, %v1618
      %v1762 = vadd.f32 %v1221, %v1620
      %v1763 = vadd.f32 %v1224, %v1623
      %v1764 = vadd.f32 %v1226, %v1625
      %v1765 = vadd.f32 %v1229, %v1628
      %v1766 = vadd.f32 %v1231, %v1630
      %v1767 = vadd.f32 %v1234, %v1633
      %v1768 = vadd.f32 %v1236, %v1635
      %v1769 = vadd.f32 %v1239, %v1638
      %v1770 = vadd.f32 %v1241, %v1640
      %v1771 = vadd.f32 %v1244, %v1643
      %v1772 = vadd.f32 %v1246, %v1645
      %v1773 = vadd.f32 %v1249, %v1648
      %v1774 = vadd.f32 %v1251, %v1650
      %v1775 = vadd.f32 %v1254, %v1653
      %v1776 = vadd.f32 %v1256, %v1655
      %v1777 = vadd.f32 %v1259, %v1658
      %v1778 = vadd.f32 %v1261, %v1660
      %v1779 = vadd.f32 %v1264, %v1663
      %v1780 = vadd.f32 %v1266, %v1665
      %v1781 = vadd.f32 %v1269, %v1668
      %v1782 = vadd.f32 %v1271, %v1670
      %v1783 = vadd.f32 %v1274, %v1673
      %v1784 = vadd.f32 %v1276, %v1675
      %v1785 = vadd.f32 %v1279, %v1678
      %v1786 = vadd.f32 %v1281, %v1680
      %v1787 = vadd.f32 %v1284, %v1683
      %v1788 = vadd.f32 %v1286, %v1685
      %v1789 = vadd.f32 %v1289, %v1688
      %v1790 = vadd.f32 %v1291, %v1690
      %v1791 = vadd.f32 %v1294, %v1693
      %v1792 = vadd.f32 %v1296, %v1695
      %v1793 = vadd.f32 %v1299, %v1698
      %v1794 = vadd.f32 %v1301, %v1700
      %v1795 = vadd.f32 %v1304, %v1703
      %v1796 = vadd.f32 %v1306, %v1705
      %v1797 = vadd.f32 %v1309, %v1708
      %v1798 = vadd.f32 %v1311, %v1710
      %v1799 = vadd.f32 %v1314, %v1713
      %v1800 = vadd.f32 %v1316, %v1715
      %v1801 = vadd.f32 %v1319, %v1718
      %v1802 = vld [vmem:[%s523 + $0x17] sm:$0xff]
      %v1803 = vld [vmem:[%s523 + $0x1f] sm:$0xff]
      %v1804 = vld [vmem:[%s523 + $0x27] sm:$0xff]
      %v1805 = vld [vmem:[%s523 + $0x2f] sm:$0xff]
      %v1806 = vld [vmem:[%s523 + $0x37] sm:$0xff]
      %v1807 = vld [vmem:[%s523 + $0x3f] sm:$0xff]
      %v1808 = vld [vmem:[%s523 + $0x47] sm:$0xff]
      %v1809 = vld [vmem:[%s523 + $0x4f] sm:$0xff]
      %v1810 = vld [vmem:[%s523 + $0x57] sm:$0xff]
      %v1811 = vld [vmem:[%s523 + $0x5f] sm:$0xff]
      %v1812 = vld [vmem:[%s523 + $0x67] sm:$0xff]
      %v1813 = vld [vmem:[%s523 + $0x6f] sm:$0xff]
      %v1814 = vld [vmem:[%s523 + $0x77] sm:$0xff]
      %v1815 = vld [vmem:[%s523 + $0x7f] sm:$0xff]
      %v1816 = vld [vmem:[%s523 + $0x87] sm:$0xff]
      %v1817 = vld [vmem:[%s523 + $0x8f] sm:$0xff]
      %v1818 = vld [vmem:[%s523 + $0x97] sm:$0xff]
      %v1819 = vld [vmem:[%s523 + $0x9f] sm:$0xff]
      %v1820 = vld [vmem:[%s523 + $0xa7] sm:$0xff]
      %v1821 = vld [vmem:[%s523 + $0xaf] sm:$0xff]
      %v1822 = vld [vmem:[%s523 + $0xb7] sm:$0xff]
      %v1823 = vld [vmem:[%s523 + $0xbf] sm:$0xff]
      %v1824 = vld [vmem:[%s523 + $0xc7] sm:$0xff]
      %v1825 = vld [vmem:[%s523 + $0xcf] sm:$0xff]
      %v1826 = vld [vmem:[%s523 + $0xd7] sm:$0xff]
      %v1827 = vld [vmem:[%s523 + $0xdf] sm:$0xff]
      %v1828 = vld [vmem:[%s523 + $0xe7] sm:$0xff]
      %v1829 = vld [vmem:[%s523 + $0xef] sm:$0xff]
      %v1830 = vld [vmem:[%s523 + $0xf7] sm:$0xff]
      %v1831 = vld [vmem:[%s523 + $0xff] sm:$0xff]
      %v1832 = vld [vmem:[%s523 + $0x107] sm:$0xff]
      %v1833 = vld [vmem:[%s523 + $0x10f] sm:$0xff]
      %v1834 = vld [vmem:[%s523 + $0x117] sm:$0xff]
      %v1835 = vld [vmem:[%s523 + $0x11f] sm:$0xff]
      %v1836 = vld [vmem:[%s523 + $0x127] sm:$0xff]
      %v1837 = vld [vmem:[%s523 + $0x12f] sm:$0xff]
      %v1838 = vld [vmem:[%s523 + $0x137] sm:$0xff]
      %v1839 = vld [vmem:[%s523 + $0x13f] sm:$0xff]
      %v1840 = vld [vmem:[%s523 + $0x147] sm:$0xff]
      %v1841 = vld [vmem:[%s523 + $0x14f] sm:$0xff]
      %v1842 = vld [vmem:[%s523 + $0x157] sm:$0xff]
      %v1843 = vld [vmem:[%s523 + $0x15f] sm:$0xff]
      %v1844 = vld [vmem:[%s523 + $0x167] sm:$0xff]
      %v1845 = vld [vmem:[%s523 + $0x16f] sm:$0xff]
      %v1846 = vld [vmem:[%s523 + $0x177] sm:$0xff]
      %v1847 = vld [vmem:[%s523 + $0x17f] sm:$0xff]
      %v1848 = vld [vmem:[%s523 + $0x187] sm:$0xff]
      %v1849 = vld [vmem:[%s523 + $0x18f] sm:$0xff]
      %v1850 = vld [vmem:[%s523 + $0x197] sm:$0xff]
      %v1851 = vld [vmem:[%s523 + $0x19f] sm:$0xff]
      %v1852 = vld [vmem:[%s523 + $0x1a7] sm:$0xff]
      %v1853 = vld [vmem:[%s523 + $0x1af] sm:$0xff]
      %v1854 = vld [vmem:[%s523 + $0x1b7] sm:$0xff]
      %v1855 = vld [vmem:[%s523 + $0x1bf] sm:$0xff]
      %v1856 = vld [vmem:[%s523 + $0x1c7] sm:$0xff]
      %v1857 = vld [vmem:[%s523 + $0x1cf] sm:$0xff]
      %v1858 = vld [vmem:[%s523 + $0x1d7] sm:$0xff]
      %v1859 = vld [vmem:[%s523 + $0x1df] sm:$0xff]
      %v1860 = vld [vmem:[%s523 + $0x1e7] sm:$0xff]
      %v1861 = vld [vmem:[%s523 + $0x1ef] sm:$0xff]
      %v1862 = vld [vmem:[%s523 + $0x1f7] sm:$0xff]
      %v1863 = vld [vmem:[%s523 + $0x1ff] sm:$0xff]
      %v1864 = vld [vmem:[%s523 + $0x207] sm:$0xff]
      %v1865 = vld [vmem:[%s523 + $0x20f] sm:$0xff]
      %v1866 = vld [vmem:[%s523 + $0x217] sm:$0xff]
      %v1867 = vld [vmem:[%s523 + $0x21f] sm:$0xff]
      %v1868 = vld [vmem:[%s523 + $0x227] sm:$0xff]
      %v1869 = vld [vmem:[%s523 + $0x22f] sm:$0xff]
      %v1870 = vld [vmem:[%s523 + $0x237] sm:$0xff]
      %v1871 = vld [vmem:[%s523 + $0x23f] sm:$0xff]
      %v1872 = vld [vmem:[%s523 + $0x247] sm:$0xff]
      %v1873 = vld [vmem:[%s523 + $0x24f] sm:$0xff]
      %v1874 = vld [vmem:[%s523 + $0x257] sm:$0xff]
      %v1875 = vld [vmem:[%s523 + $0x25f] sm:$0xff]
      %v1876 = vld [vmem:[%s523 + $0x267] sm:$0xff]
      %v1877 = vld [vmem:[%s523 + $0x26f] sm:$0xff]
      %v1878 = vld [vmem:[%s523 + $0x277] sm:$0xff]
      %v1879 = vld [vmem:[%s523 + $0x27f] sm:$0xff]
      %v1880 = vld [vmem:[%s523 + $0x287] sm:$0xff]
      %v1881 = vld [vmem:[%s523 + $0x28f] sm:$0xff]
      %v1882 = vld [vmem:[%s523 + $0x297] sm:$0xff]
      %v1883 = vpack.c.bf16 %v1803, %v1802
      %v1884 = vpack.c.bf16 %v1805, %v1804
      %v1885 = vpack.c.bf16 %v1807, %v1806
      %v1886 = vpack.c.bf16 %v1809, %v1808
      %v1887 = vpack.c.bf16 %v1811, %v1810
      %v1888 = vpack.c.bf16 %v1813, %v1812
      %v1889 = vpack.c.bf16 %v1815, %v1814
      %v1890 = vpack.c.bf16 %v1817, %v1816
      %v1891 = vpack.c.bf16 %v1819, %v1818
      %v1892 = vpack.c.bf16 %v1821, %v1820
      %v1893 = vpack.c.bf16 %v1823, %v1822
      %v1894 = vpack.c.bf16 %v1825, %v1824
      %v1895 = vpack.c.bf16 %v1827, %v1826
      %v1896 = vpack.c.bf16 %v1829, %v1828
      %v1897 = vpack.c.bf16 %v1831, %v1830
      %v1898 = vpack.c.bf16 %v1833, %v1832
      %v1899 = vpack.c.bf16 %v1835, %v1834
      %v1900 = vpack.c.bf16 %v1837, %v1836
      %v1901 = vpack.c.bf16 %v1839, %v1838
      %v1902 = vpack.c.bf16 %v1841, %v1840
      %v1903 = vpack.c.bf16 %v1843, %v1842
      %v1904 = vpack.c.bf16 %v1845, %v1844
      %v1905 = vpack.c.bf16 %v1847, %v1846
      %v1906 = vpack.c.bf16 %v1849, %v1848
      %v1907 = vpack.c.bf16 %v1851, %v1850
      %v1908 = vpack.c.bf16 %v1853, %v1852
      %v1909 = vpack.c.bf16 %v1855, %v1854
      %v1910 = vpack.c.bf16 %v1857, %v1856
      %v1911 = vpack.c.bf16 %v1859, %v1858
      %v1912 = vpack.c.bf16 %v1861, %v1860
      %v1913 = vpack.c.bf16 %v1863, %v1862
      %v1914 = vpack.c.bf16 %v1865, %v1864
      %v1915 = vpack.c.bf16 %v1867, %v1866
      %v1916 = vpack.c.bf16 %v1869, %v1868
      %v1917 = vpack.c.bf16 %v1871, %v1870
      %v1918 = vpack.c.bf16 %v1873, %v1872
      %v1919 = vpack.c.bf16 %v1875, %v1874
      %v1920 = vpack.c.bf16 %v1877, %v1876
      %v1921 = vpack.c.bf16 %v1879, %v1878
      %v1922 = vpack.c.bf16 %v1881, %v1880
      %v1923 = vpack.c.bf16 %v1882, %v1882
      %v1924 = vld [vmem:[%s329 + $0xc0] sm:$0xf]
      %v1925 = vld [vmem:[%s329 + $0xc4] sm:$0xf]
      %v1926 = vld [vmem:[%s329 + $0xc8] sm:$0xf]
      %v1927 = vld [vmem:[%s329 + $0xcc] sm:$0xf]
      %v1928 = vld [vmem:[%s329 + $0xd0] sm:$0xf]
      %v1929 = vld [vmem:[%s329 + $0xd4] sm:$0xf]
      %v1930 = vld [vmem:[%s329 + $0xd8] sm:$0xf]
      %v1931 = vld [vmem:[%s329 + $0xdc] sm:$0xf]
      %v1932 = vld [vmem:[%s329 + $0xe0] sm:$0xf]
      %v1933 = vld [vmem:[%s329 + $0xe4] sm:$0xf]
      %v1934 = vld [vmem:[%s329 + $0xe8] sm:$0xf]
      %v1935 = vld [vmem:[%s329 + $0xec] sm:$0xf]
      %v1936 = vld [vmem:[%s329 + $0xf0] sm:$0xf]
      %v1937 = vld [vmem:[%s329 + $0xf4] sm:$0xf]
      %v1938 = vld [vmem:[%s329 + $0xf8] sm:$0xf]
      %v1939 = vld [vmem:[%s329 + $0xfc] sm:$0xf]
      %v1956 = vunpack.c.l.b16 %v1924
      %v1957 = vunpack.c.l.b16 %v1925
      %v1958 = vunpack.c.l.b16 %v1926
      %v1959 = vunpack.c.l.b16 %v1927
      %v1960 = vunpack.c.l.b16 %v1928
      %v1961 = vunpack.c.l.b16 %v1929
      %v1962 = vunpack.c.l.b16 %v1930
      %v1963 = vunpack.c.l.b16 %v1931
      %v1964 = vunpack.c.l.b16 %v1932
      %v1965 = vunpack.c.l.b16 %v1933
      %v1966 = vunpack.c.l.b16 %v1934
      %v1967 = vunpack.c.l.b16 %v1935
      %v1968 = vunpack.c.l.b16 %v1936
      %v1969 = vunpack.c.l.b16 %v1937
      %v1970 = vunpack.c.l.b16 %v1938
      %v1971 = vunpack.c.l.b16 %v1939
      %v1972 = vpack.c.b16 %v1957, %v1956
      %v1973 = vpack.c.b16 %v1959, %v1958
      %v1974 = vpack.c.b16 %v1961, %v1960
      %v1975 = vpack.c.b16 %v1963, %v1962
      %v1976 = vpack.c.b16 %v1965, %v1964
      %v1977 = vpack.c.b16 %v1967, %v1966
      %v1978 = vpack.c.b16 %v1969, %v1968
      %v1979 = vpack.c.b16 %v1971, %v1970
      %1988 = vmatpush.bf16.msra.mxu0 %v1979
      %1989 = vmatpush.bf16.msra.mxu0 %v1978
      %1990 = vmatpush.bf16.msra.mxu0 %v1977
      %1991 = vmatpush.bf16.msra.mxu0 %v1976
      %1992 = vmatpush.bf16.msra.mxu0 %v1975
      %1993 = vmatpush.bf16.msra.mxu0 %v1974
      %1994 = vmatpush.bf16.msra.mxu0 %v1973
      %1995 = vmatpush.bf16.msra.mxu0 %v1972
      %1996 = vmatmul.bf16.gmra.mxu0 %v1883
      %v1997 = vpop.f32.mrf.mxu0
      %v1998 = vadd.f32 0.0, %v1997
      %v1999 = vpop.f32.mrf.mxu0
      %v2000 = vadd.f32 0.0, %v1999
      %2001 = vmatmul.bf16.gmra.mxu0 %v1884
      %v2002 = vpop.f32.mrf.mxu0
      %v2003 = vadd.f32 0.0, %v2002
      %v2004 = vpop.f32.mrf.mxu0
      %v2005 = vadd.f32 0.0, %v2004
      %2006 = vmatmul.bf16.gmra.mxu0 %v1885
      %v2007 = vpop.f32.mrf.mxu0
      %v2008 = vadd.f32 0.0, %v2007
      %v2009 = vpop.f32.mrf.mxu0
      %v2010 = vadd.f32 0.0, %v2009
      %2011 = vmatmul.bf16.gmra.mxu0 %v1886
      %v2012 = vpop.f32.mrf.mxu0
      %v2013 = vadd.f32 0.0, %v2012
      %v2014 = vpop.f32.mrf.mxu0
      %v2015 = vadd.f32 0.0, %v2014
      %2016 = vmatmul.bf16.gmra.mxu0 %v1887
      %v2017 = vpop.f32.mrf.mxu0
      %v2018 = vadd.f32 0.0, %v2017
      %v2019 = vpop.f32.mrf.mxu0
      %v2020 = vadd.f32 0.0, %v2019
      %2021 = vmatmul.bf16.gmra.mxu0 %v1888
      %v2022 = vpop.f32.mrf.mxu0
      %v2023 = vadd.f32 0.0, %v2022
      %v2024 = vpop.f32.mrf.mxu0
      %v2025 = vadd.f32 0.0, %v2024
      %2026 = vmatmul.bf16.gmra.mxu0 %v1889
      %v2027 = vpop.f32.mrf.mxu0
      %v2028 = vadd.f32 0.0, %v2027
      %v2029 = vpop.f32.mrf.mxu0
      %v2030 = vadd.f32 0.0, %v2029
      %2031 = vmatmul.bf16.gmra.mxu0 %v1890
      %v2032 = vpop.f32.mrf.mxu0
      %v2033 = vadd.f32 0.0, %v2032
      %v2034 = vpop.f32.mrf.mxu0
      %v2035 = vadd.f32 0.0, %v2034
      %2036 = vmatmul.bf16.gmra.mxu0 %v1891
      %v2037 = vpop.f32.mrf.mxu0
      %v2038 = vadd.f32 0.0, %v2037
      %v2039 = vpop.f32.mrf.mxu0
      %v2040 = vadd.f32 0.0, %v2039
      %2041 = vmatmul.bf16.gmra.mxu0 %v1892
      %v2042 = vpop.f32.mrf.mxu0
      %v2043 = vadd.f32 0.0, %v2042
      %v2044 = vpop.f32.mrf.mxu0
      %v2045 = vadd.f32 0.0, %v2044
      %2046 = vmatmul.bf16.gmra.mxu0 %v1893
      %v2047 = vpop.f32.mrf.mxu0
      %v2048 = vadd.f32 0.0, %v2047
      %v2049 = vpop.f32.mrf.mxu0
      %v2050 = vadd.f32 0.0, %v2049
      %2051 = vmatmul.bf16.gmra.mxu0 %v1894
      %v2052 = vpop.f32.mrf.mxu0
      %v2053 = vadd.f32 0.0, %v2052
      %v2054 = vpop.f32.mrf.mxu0
      %v2055 = vadd.f32 0.0, %v2054
      %2056 = vmatmul.bf16.gmra.mxu0 %v1895
      %v2057 = vpop.f32.mrf.mxu0
      %v2058 = vadd.f32 0.0, %v2057
      %v2059 = vpop.f32.mrf.mxu0
      %v2060 = vadd.f32 0.0, %v2059
      %2061 = vmatmul.bf16.gmra.mxu0 %v1896
      %v2062 = vpop.f32.mrf.mxu0
      %v2063 = vadd.f32 0.0, %v2062
      %v2064 = vpop.f32.mrf.mxu0
      %v2065 = vadd.f32 0.0, %v2064
      %2066 = vmatmul.bf16.gmra.mxu0 %v1897
      %v2067 = vpop.f32.mrf.mxu0
      %v2068 = vadd.f32 0.0, %v2067
      %v2069 = vpop.f32.mrf.mxu0
      %v2070 = vadd.f32 0.0, %v2069
      %2071 = vmatmul.bf16.gmra.mxu0 %v1898
      %v2072 = vpop.f32.mrf.mxu0
      %v2073 = vadd.f32 0.0, %v2072
      %v2074 = vpop.f32.mrf.mxu0
      %v2075 = vadd.f32 0.0, %v2074
      %2076 = vmatmul.bf16.gmra.mxu0 %v1899
      %v2077 = vpop.f32.mrf.mxu0
      %v2078 = vadd.f32 0.0, %v2077
      %v2079 = vpop.f32.mrf.mxu0
      %v2080 = vadd.f32 0.0, %v2079
      %2081 = vmatmul.bf16.gmra.mxu0 %v1900
      %v2082 = vpop.f32.mrf.mxu0
      %v2083 = vadd.f32 0.0, %v2082
      %v2084 = vpop.f32.mrf.mxu0
      %v2085 = vadd.f32 0.0, %v2084
      %2086 = vmatmul.bf16.gmra.mxu0 %v1901
      %v2087 = vpop.f32.mrf.mxu0
      %v2088 = vadd.f32 0.0, %v2087
      %v2089 = vpop.f32.mrf.mxu0
      %v2090 = vadd.f32 0.0, %v2089
      %2091 = vmatmul.bf16.gmra.mxu0 %v1902
      %v2092 = vpop.f32.mrf.mxu0
      %v2093 = vadd.f32 0.0, %v2092
      %v2094 = vpop.f32.mrf.mxu0
      %v2095 = vadd.f32 0.0, %v2094
      %2096 = vmatmul.bf16.gmra.mxu0 %v1903
      %v2097 = vpop.f32.mrf.mxu0
      %v2098 = vadd.f32 0.0, %v2097
      %v2099 = vpop.f32.mrf.mxu0
      %v2100 = vadd.f32 0.0, %v2099
      %2101 = vmatmul.bf16.gmra.mxu0 %v1904
      %v2102 = vpop.f32.mrf.mxu0
      %v2103 = vadd.f32 0.0, %v2102
      %v2104 = vpop.f32.mrf.mxu0
      %v2105 = vadd.f32 0.0, %v2104
      %2106 = vmatmul.bf16.gmra.mxu0 %v1905
      %v2107 = vpop.f32.mrf.mxu0
      %v2108 = vadd.f32 0.0, %v2107
      %v2109 = vpop.f32.mrf.mxu0
      %v2110 = vadd.f32 0.0, %v2109
      %2111 = vmatmul.bf16.gmra.mxu0 %v1906
      %v2112 = vpop.f32.mrf.mxu0
      %v2113 = vadd.f32 0.0, %v2112
      %v2114 = vpop.f32.mrf.mxu0
      %v2115 = vadd.f32 0.0, %v2114
      %2116 = vmatmul.bf16.gmra.mxu0 %v1907
      %v2117 = vpop.f32.mrf.mxu0
      %v2118 = vadd.f32 0.0, %v2117
      %v2119 = vpop.f32.mrf.mxu0
      %v2120 = vadd.f32 0.0, %v2119
      %2121 = vmatmul.bf16.gmra.mxu0 %v1908
      %v2122 = vpop.f32.mrf.mxu0
      %v2123 = vadd.f32 0.0, %v2122
      %v2124 = vpop.f32.mrf.mxu0
      %v2125 = vadd.f32 0.0, %v2124
      %2126 = vmatmul.bf16.gmra.mxu0 %v1909
      %v2127 = vpop.f32.mrf.mxu0
      %v2128 = vadd.f32 0.0, %v2127
      %v2129 = vpop.f32.mrf.mxu0
      %v2130 = vadd.f32 0.0, %v2129
      %2131 = vmatmul.bf16.gmra.mxu0 %v1910
      %v2132 = vpop.f32.mrf.mxu0
      %v2133 = vadd.f32 0.0, %v2132
      %v2134 = vpop.f32.mrf.mxu0
      %v2135 = vadd.f32 0.0, %v2134
      %2136 = vmatmul.bf16.gmra.mxu0 %v1911
      %v2137 = vpop.f32.mrf.mxu0
      %v2138 = vadd.f32 0.0, %v2137
      %v2139 = vpop.f32.mrf.mxu0
      %v2140 = vadd.f32 0.0, %v2139
      %2141 = vmatmul.bf16.gmra.mxu0 %v1912
      %v2142 = vpop.f32.mrf.mxu0
      %v2143 = vadd.f32 0.0, %v2142
      %v2144 = vpop.f32.mrf.mxu0
      %v2145 = vadd.f32 0.0, %v2144
      %2146 = vmatmul.bf16.gmra.mxu0 %v1913
      %v2147 = vpop.f32.mrf.mxu0
      %v2148 = vadd.f32 0.0, %v2147
      %v2149 = vpop.f32.mrf.mxu0
      %v2150 = vadd.f32 0.0, %v2149
      %2151 = vmatmul.bf16.gmra.mxu0 %v1914
      %v2152 = vpop.f32.mrf.mxu0
      %v2153 = vadd.f32 0.0, %v2152
      %v2154 = vpop.f32.mrf.mxu0
      %v2155 = vadd.f32 0.0, %v2154
      %2156 = vmatmul.bf16.gmra.mxu0 %v1915
      %v2157 = vpop.f32.mrf.mxu0
      %v2158 = vadd.f32 0.0, %v2157
      %v2159 = vpop.f32.mrf.mxu0
      %v2160 = vadd.f32 0.0, %v2159
      %2161 = vmatmul.bf16.gmra.mxu0 %v1916
      %v2162 = vpop.f32.mrf.mxu0
      %v2163 = vadd.f32 0.0, %v2162
      %v2164 = vpop.f32.mrf.mxu0
      %v2165 = vadd.f32 0.0, %v2164
      %2166 = vmatmul.bf16.gmra.mxu0 %v1917
      %v2167 = vpop.f32.mrf.mxu0
      %v2168 = vadd.f32 0.0, %v2167
      %v2169 = vpop.f32.mrf.mxu0
      %v2170 = vadd.f32 0.0, %v2169
      %2171 = vmatmul.bf16.gmra.mxu0 %v1918
      %v2172 = vpop.f32.mrf.mxu0
      %v2173 = vadd.f32 0.0, %v2172
      %v2174 = vpop.f32.mrf.mxu0
      %v2175 = vadd.f32 0.0, %v2174
      %2176 = vmatmul.bf16.gmra.mxu0 %v1919
      %v2177 = vpop.f32.mrf.mxu0
      %v2178 = vadd.f32 0.0, %v2177
      %v2179 = vpop.f32.mrf.mxu0
      %v2180 = vadd.f32 0.0, %v2179
      %2181 = vmatmul.bf16.gmra.mxu0 %v1920
      %v2182 = vpop.f32.mrf.mxu0
      %v2183 = vadd.f32 0.0, %v2182
      %v2184 = vpop.f32.mrf.mxu0
      %v2185 = vadd.f32 0.0, %v2184
      %2186 = vmatmul.bf16.gmra.mxu0 %v1921
      %v2187 = vpop.f32.mrf.mxu0
      %v2188 = vadd.f32 0.0, %v2187
      %v2189 = vpop.f32.mrf.mxu0
      %v2190 = vadd.f32 0.0, %v2189
      %2191 = vmatmul.bf16.gmra.mxu0 %v1922
      %v2192 = vpop.f32.mrf.mxu0
      %v2193 = vadd.f32 0.0, %v2192
      %v2194 = vpop.f32.mrf.mxu0
      %v2195 = vadd.f32 0.0, %v2194
      %2196 = vmatmul.bf16.gmra.mxu0 %v1923
      %v2197 = vpop.f32.mrf.mxu0
      %v2198 = vadd.f32 0.0, %v2197
      %v2199 = vpop.f32.mrf.mxu0
      %2200 = vdwg.mxu0
      %v2201 = vadd.f32 %v1721, %v1998
      %v2202 = vadd.f32 %v1722, %v2000
      %v2203 = vadd.f32 %v1723, %v2003
      %v2204 = vadd.f32 %v1724, %v2005
      %v2205 = vadd.f32 %v1725, %v2008
      %v2206 = vadd.f32 %v1726, %v2010
      %v2207 = vadd.f32 %v1727, %v2013
      %v2208 = vadd.f32 %v1728, %v2015
      %v2209 = vadd.f32 %v1729, %v2018
      %v2210 = vadd.f32 %v1730, %v2020
      %v2211 = vadd.f32 %v1731, %v2023
      %v2212 = vadd.f32 %v1732, %v2025
      %v2213 = vadd.f32 %v1733, %v2028
      %v2214 = vadd.f32 %v1734, %v2030
      %v2215 = vadd.f32 %v1735, %v2033
      %v2216 = vadd.f32 %v1736, %v2035
      %v2217 = vadd.f32 %v1737, %v2038
      %v2218 = vadd.f32 %v1738, %v2040
      %v2219 = vadd.f32 %v1739, %v2043
      %v2220 = vadd.f32 %v1740, %v2045
      %v2221 = vadd.f32 %v1741, %v2048
      %v2222 = vadd.f32 %v1742, %v2050
      %v2223 = vadd.f32 %v1743, %v2053
      %v2224 = vadd.f32 %v1744, %v2055
      %v2225 = vadd.f32 %v1745, %v2058
      %v2226 = vadd.f32 %v1746, %v2060
      %v2227 = vadd.f32 %v1747, %v2063
      %v2228 = vadd.f32 %v1748, %v2065
      %v2229 = vadd.f32 %v1749, %v2068
      %v2230 = vadd.f32 %v1750, %v2070
      %v2231 = vadd.f32 %v1751, %v2073
      %v2232 = vadd.f32 %v1752, %v2075
      %v2233 = vadd.f32 %v1753, %v2078
      %v2234 = vadd.f32 %v1754, %v2080
      %v2235 = vadd.f32 %v1755, %v2083
      %v2236 = vadd.f32 %v1756, %v2085
      %v2237 = vadd.f32 %v1757, %v2088
      %v2238 = vadd.f32 %v1758, %v2090
      %v2239 = vadd.f32 %v1759, %v2093
      %v2240 = vadd.f32 %v1760, %v2095
      %v2241 = vadd.f32 %v1761, %v2098
      %v2242 = vadd.f32 %v1762, %v2100
      %v2243 = vadd.f32 %v1763, %v2103
      %v2244 = vadd.f32 %v1764, %v2105
      %v2245 = vadd.f32 %v1765, %v2108
      %v2246 = vadd.f32 %v1766, %v2110
      %v2247 = vadd.f32 %v1767, %v2113
      %v2248 = vadd.f32 %v1768, %v2115
      %v2249 = vadd.f32 %v1769, %v2118
      %v2250 = vadd.f32 %v1770, %v2120
      %v2251 = vadd.f32 %v1771, %v2123
      %v2252 = vadd.f32 %v1772, %v2125
      %v2253 = vadd.f32 %v1773, %v2128
      %v2254 = vadd.f32 %v1774, %v2130
      %v2255 = vadd.f32 %v1775, %v2133
      %v2256 = vadd.f32 %v1776, %v2135
      %v2257 = vadd.f32 %v1777, %v2138
      %v2258 = vadd.f32 %v1778, %v2140
      %v2259 = vadd.f32 %v1779, %v2143
      %v2260 = vadd.f32 %v1780, %v2145
      %v2261 = vadd.f32 %v1781, %v2148
      %v2262 = vadd.f32 %v1782, %v2150
      %v2263 = vadd.f32 %v1783, %v2153
      %v2264 = vadd.f32 %v1784, %v2155
      %v2265 = vadd.f32 %v1785, %v2158
      %v2266 = vadd.f32 %v1786, %v2160
      %v2267 = vadd.f32 %v1787, %v2163
      %v2268 = vadd.f32 %v1788, %v2165
      %v2269 = vadd.f32 %v1789, %v2168
      %v2270 = vadd.f32 %v1790, %v2170
      %v2271 = vadd.f32 %v1791, %v2173
      %v2272 = vadd.f32 %v1792, %v2175
      %v2273 = vadd.f32 %v1793, %v2178
      %v2274 = vadd.f32 %v1794, %v2180
      %v2275 = vadd.f32 %v1795, %v2183
      %v2276 = vadd.f32 %v1796, %v2185
      %v2277 = vadd.f32 %v1797, %v2188
      %v2278 = vadd.f32 %v1798, %v2190
      %v2279 = vadd.f32 %v1799, %v2193
      %v2280 = vadd.f32 %v1800, %v2195
      %v2281 = vadd.f32 %v1801, %v2198
      %v2282 = vld [vmem:[%s523 + $0x18] sm:$0xff]
      %v2283 = vld [vmem:[%s523 + $0x20] sm:$0xff]
      %v2284 = vld [vmem:[%s523 + $0x28] sm:$0xff]
      %v2285 = vld [vmem:[%s523 + $0x30] sm:$0xff]
      %v2286 = vld [vmem:[%s523 + $0x38] sm:$0xff]
      %v2287 = vld [vmem:[%s523 + $0x40] sm:$0xff]
      %v2288 = vld [vmem:[%s523 + $0x48] sm:$0xff]
      %v2289 = vld [vmem:[%s523 + $0x50] sm:$0xff]
      %v2290 = vld [vmem:[%s523 + $0x58] sm:$0xff]
      %v2291 = vld [vmem:[%s523 + $0x60] sm:$0xff]
      %v2292 = vld [vmem:[%s523 + $0x68] sm:$0xff]
      %v2293 = vld [vmem:[%s523 + $0x70] sm:$0xff]
      %v2294 = vld [vmem:[%s523 + $0x78] sm:$0xff]
      %v2295 = vld [vmem:[%s523 + $0x80] sm:$0xff]
      %v2296 = vld [vmem:[%s523 + $0x88] sm:$0xff]
      %v2297 = vld [vmem:[%s523 + $0x90] sm:$0xff]
      %v2298 = vld [vmem:[%s523 + $0x98] sm:$0xff]
      %v2299 = vld [vmem:[%s523 + $0xa0] sm:$0xff]
      %v2300 = vld [vmem:[%s523 + $0xa8] sm:$0xff]
      %v2301 = vld [vmem:[%s523 + $0xb0] sm:$0xff]
      %v2302 = vld [vmem:[%s523 + $0xb8] sm:$0xff]
      %v2303 = vld [vmem:[%s523 + $0xc0] sm:$0xff]
      %v2304 = vld [vmem:[%s523 + $0xc8] sm:$0xff]
      %v2305 = vld [vmem:[%s523 + $0xd0] sm:$0xff]
      %v2306 = vld [vmem:[%s523 + $0xd8] sm:$0xff]
      %v2307 = vld [vmem:[%s523 + $0xe0] sm:$0xff]
      %v2308 = vld [vmem:[%s523 + $0xe8] sm:$0xff]
      %v2309 = vld [vmem:[%s523 + $0xf0] sm:$0xff]
      %v2310 = vld [vmem:[%s523 + $0xf8] sm:$0xff]
      %v2311 = vld [vmem:[%s523 + $0x100] sm:$0xff]
      %v2312 = vld [vmem:[%s523 + $0x108] sm:$0xff]
      %v2313 = vld [vmem:[%s523 + $0x110] sm:$0xff]
      %v2314 = vld [vmem:[%s523 + $0x118] sm:$0xff]
      %v2315 = vld [vmem:[%s523 + $0x120] sm:$0xff]
      %v2316 = vld [vmem:[%s523 + $0x128] sm:$0xff]
      %v2317 = vld [vmem:[%s523 + $0x130] sm:$0xff]
      %v2318 = vld [vmem:[%s523 + $0x138] sm:$0xff]
      %v2319 = vld [vmem:[%s523 + $0x140] sm:$0xff]
      %v2320 = vld [vmem:[%s523 + $0x148] sm:$0xff]
      %v2321 = vld [vmem:[%s523 + $0x150] sm:$0xff]
      %v2322 = vld [vmem:[%s523 + $0x158] sm:$0xff]
      %v2323 = vld [vmem:[%s523 + $0x160] sm:$0xff]
      %v2324 = vld [vmem:[%s523 + $0x168] sm:$0xff]
      %v2325 = vld [vmem:[%s523 + $0x170] sm:$0xff]
      %v2326 = vld [vmem:[%s523 + $0x178] sm:$0xff]
      %v2327 = vld [vmem:[%s523 + $0x180] sm:$0xff]
      %v2328 = vld [vmem:[%s523 + $0x188] sm:$0xff]
      %v2329 = vld [vmem:[%s523 + $0x190] sm:$0xff]
      %v2330 = vld [vmem:[%s523 + $0x198] sm:$0xff]
      %v2331 = vld [vmem:[%s523 + $0x1a0] sm:$0xff]
      %v2332 = vld [vmem:[%s523 + $0x1a8] sm:$0xff]
      %v2333 = vld [vmem:[%s523 + $0x1b0] sm:$0xff]
      %v2334 = vld [vmem:[%s523 + $0x1b8] sm:$0xff]
      %v2335 = vld [vmem:[%s523 + $0x1c0] sm:$0xff]
      %v2336 = vld [vmem:[%s523 + $0x1c8] sm:$0xff]
      %v2337 = vld [vmem:[%s523 + $0x1d0] sm:$0xff]
      %v2338 = vld [vmem:[%s523 + $0x1d8] sm:$0xff]
      %v2339 = vld [vmem:[%s523 + $0x1e0] sm:$0xff]
      %v2340 = vld [vmem:[%s523 + $0x1e8] sm:$0xff]
      %v2341 = vld [vmem:[%s523 + $0x1f0] sm:$0xff]
      %v2342 = vld [vmem:[%s523 + $0x1f8] sm:$0xff]
      %v2343 = vld [vmem:[%s523 + $0x200] sm:$0xff]
      %v2344 = vld [vmem:[%s523 + $0x208] sm:$0xff]
      %v2345 = vld [vmem:[%s523 + $0x210] sm:$0xff]
      %v2346 = vld [vmem:[%s523 + $0x218] sm:$0xff]
      %v2347 = vld [vmem:[%s523 + $0x220] sm:$0xff]
      %v2348 = vld [vmem:[%s523 + $0x228] sm:$0xff]
      %v2349 = vld [vmem:[%s523 + $0x230] sm:$0xff]
      %v2350 = vld [vmem:[%s523 + $0x238] sm:$0xff]
      %v2351 = vld [vmem:[%s523 + $0x240] sm:$0xff]
      %v2352 = vld [vmem:[%s523 + $0x248] sm:$0xff]
      %v2353 = vld [vmem:[%s523 + $0x250] sm:$0xff]
      %v2354 = vld [vmem:[%s523 + $0x258] sm:$0xff]
      %v2355 = vld [vmem:[%s523 + $0x260] sm:$0xff]
      %v2356 = vld [vmem:[%s523 + $0x268] sm:$0xff]
      %v2357 = vld [vmem:[%s523 + $0x270] sm:$0xff]
      %v2358 = vld [vmem:[%s523 + $0x278] sm:$0xff]
      %v2359 = vld [vmem:[%s523 + $0x280] sm:$0xff]
      %v2360 = vld [vmem:[%s523 + $0x288] sm:$0xff]
      %v2361 = vld [vmem:[%s523 + $0x290] sm:$0xff]
      %v2362 = vld [vmem:[%s523 + $0x298] sm:$0xff]
      %v2363 = vpack.c.bf16 %v2283, %v2282
      %v2364 = vpack.c.bf16 %v2285, %v2284
      %v2365 = vpack.c.bf16 %v2287, %v2286
      %v2366 = vpack.c.bf16 %v2289, %v2288
      %v2367 = vpack.c.bf16 %v2291, %v2290
      %v2368 = vpack.c.bf16 %v2293, %v2292
      %v2369 = vpack.c.bf16 %v2295, %v2294
      %v2370 = vpack.c.bf16 %v2297, %v2296
      %v2371 = vpack.c.bf16 %v2299, %v2298
      %v2372 = vpack.c.bf16 %v2301, %v2300
      %v2373 = vpack.c.bf16 %v2303, %v2302
      %v2374 = vpack.c.bf16 %v2305, %v2304
      %v2375 = vpack.c.bf16 %v2307, %v2306
      %v2376 = vpack.c.bf16 %v2309, %v2308
      %v2377 = vpack.c.bf16 %v2311, %v2310
      %v2378 = vpack.c.bf16 %v2313, %v2312
      %v2379 = vpack.c.bf16 %v2315, %v2314
      %v2380 = vpack.c.bf16 %v2317, %v2316
      %v2381 = vpack.c.bf16 %v2319, %v2318
      %v2382 = vpack.c.bf16 %v2321, %v2320
      %v2383 = vpack.c.bf16 %v2323, %v2322
      %v2384 = vpack.c.bf16 %v2325, %v2324
      %v2385 = vpack.c.bf16 %v2327, %v2326
      %v2386 = vpack.c.bf16 %v2329, %v2328
      %v2387 = vpack.c.bf16 %v2331, %v2330
      %v2388 = vpack.c.bf16 %v2333, %v2332
      %v2389 = vpack.c.bf16 %v2335, %v2334
      %v2390 = vpack.c.bf16 %v2337, %v2336
      %v2391 = vpack.c.bf16 %v2339, %v2338
      %v2392 = vpack.c.bf16 %v2341, %v2340
      %v2393 = vpack.c.bf16 %v2343, %v2342
      %v2394 = vpack.c.bf16 %v2345, %v2344
      %v2395 = vpack.c.bf16 %v2347, %v2346
      %v2396 = vpack.c.bf16 %v2349, %v2348
      %v2397 = vpack.c.bf16 %v2351, %v2350
      %v2398 = vpack.c.bf16 %v2353, %v2352
      %v2399 = vpack.c.bf16 %v2355, %v2354
      %v2400 = vpack.c.bf16 %v2357, %v2356
      %v2401 = vpack.c.bf16 %v2359, %v2358
      %v2402 = vpack.c.bf16 %v2361, %v2360
      %v2403 = vpack.c.bf16 %v2362, %v2362
      %v2404 = vld [vmem:[%s329 + $0x100] sm:$0xf]
      %v2405 = vld [vmem:[%s329 + $0x104] sm:$0xf]
      %v2406 = vld [vmem:[%s329 + $0x108] sm:$0xf]
      %v2407 = vld [vmem:[%s329 + $0x10c] sm:$0xf]
      %v2408 = vld [vmem:[%s329 + $0x110] sm:$0xf]
      %v2409 = vld [vmem:[%s329 + $0x114] sm:$0xf]
      %v2410 = vld [vmem:[%s329 + $0x118] sm:$0xf]
      %v2411 = vld [vmem:[%s329 + $0x11c] sm:$0xf]
      %v2412 = vld [vmem:[%s329 + $0x120] sm:$0xf]
      %v2413 = vld [vmem:[%s329 + $0x124] sm:$0xf]
      %v2414 = vld [vmem:[%s329 + $0x128] sm:$0xf]
      %v2415 = vld [vmem:[%s329 + $0x12c] sm:$0xf]
      %v2416 = vld [vmem:[%s329 + $0x130] sm:$0xf]
      %v2417 = vld [vmem:[%s329 + $0x134] sm:$0xf]
      %v2418 = vld [vmem:[%s329 + $0x138] sm:$0xf]
      %v2419 = vld [vmem:[%s329 + $0x13c] sm:$0xf]
      %v2436 = vunpack.c.l.b16 %v2404
      %v2437 = vunpack.c.l.b16 %v2405
      %v2438 = vunpack.c.l.b16 %v2406
      %v2439 = vunpack.c.l.b16 %v2407
      %v2440 = vunpack.c.l.b16 %v2408
      %v2441 = vunpack.c.l.b16 %v2409
      %v2442 = vunpack.c.l.b16 %v2410
      %v2443 = vunpack.c.l.b16 %v2411
      %v2444 = vunpack.c.l.b16 %v2412
      %v2445 = vunpack.c.l.b16 %v2413
      %v2446 = vunpack.c.l.b16 %v2414
      %v2447 = vunpack.c.l.b16 %v2415
      %v2448 = vunpack.c.l.b16 %v2416
      %v2449 = vunpack.c.l.b16 %v2417
      %v2450 = vunpack.c.l.b16 %v2418
      %v2451 = vunpack.c.l.b16 %v2419
      %v2452 = vpack.c.b16 %v2437, %v2436
      %v2453 = vpack.c.b16 %v2439, %v2438
      %v2454 = vpack.c.b16 %v2441, %v2440
      %v2455 = vpack.c.b16 %v2443, %v2442
      %v2456 = vpack.c.b16 %v2445, %v2444
      %v2457 = vpack.c.b16 %v2447, %v2446
      %v2458 = vpack.c.b16 %v2449, %v2448
      %v2459 = vpack.c.b16 %v2451, %v2450
      %2468 = vmatpush.bf16.msra.mxu0 %v2459
      %2469 = vmatpush.bf16.msra.mxu0 %v2458
      %2470 = vmatpush.bf16.msra.mxu0 %v2457
      %2471 = vmatpush.bf16.msra.mxu0 %v2456
      %2472 = vmatpush.bf16.msra.mxu0 %v2455
      %2473 = vmatpush.bf16.msra.mxu0 %v2454
      %2474 = vmatpush.bf16.msra.mxu0 %v2453
      %2475 = vmatpush.bf16.msra.mxu0 %v2452
      %2476 = vmatmul.bf16.gmra.mxu0 %v2363
      %v2477 = vpop.f32.mrf.mxu0
      %v2478 = vadd.f32 0.0, %v2477
      %v2479 = vpop.f32.mrf.mxu0
      %v2480 = vadd.f32 0.0, %v2479
      %2481 = vmatmul.bf16.gmra.mxu0 %v2364
      %v2482 = vpop.f32.mrf.mxu0
      %v2483 = vadd.f32 0.0, %v2482
      %v2484 = vpop.f32.mrf.mxu0
      %v2485 = vadd.f32 0.0, %v2484
      %2486 = vmatmul.bf16.gmra.mxu0 %v2365
      %v2487 = vpop.f32.mrf.mxu0
      %v2488 = vadd.f32 0.0, %v2487
      %v2489 = vpop.f32.mrf.mxu0
      %v2490 = vadd.f32 0.0, %v2489
      %2491 = vmatmul.bf16.gmra.mxu0 %v2366
      %v2492 = vpop.f32.mrf.mxu0
      %v2493 = vadd.f32 0.0, %v2492
      %v2494 = vpop.f32.mrf.mxu0
      %v2495 = vadd.f32 0.0, %v2494
      %2496 = vmatmul.bf16.gmra.mxu0 %v2367
      %v2497 = vpop.f32.mrf.mxu0
      %v2498 = vadd.f32 0.0, %v2497
      %v2499 = vpop.f32.mrf.mxu0
      %v2500 = vadd.f32 0.0, %v2499
      %2501 = vmatmul.bf16.gmra.mxu0 %v2368
      %v2502 = vpop.f32.mrf.mxu0
      %v2503 = vadd.f32 0.0, %v2502
      %v2504 = vpop.f32.mrf.mxu0
      %v2505 = vadd.f32 0.0, %v2504
      %2506 = vmatmul.bf16.gmra.mxu0 %v2369
      %v2507 = vpop.f32.mrf.mxu0
      %v2508 = vadd.f32 0.0, %v2507
      %v2509 = vpop.f32.mrf.mxu0
      %v2510 = vadd.f32 0.0, %v2509
      %2511 = vmatmul.bf16.gmra.mxu0 %v2370
      %v2512 = vpop.f32.mrf.mxu0
      %v2513 = vadd.f32 0.0, %v2512
      %v2514 = vpop.f32.mrf.mxu0
      %v2515 = vadd.f32 0.0, %v2514
      %2516 = vmatmul.bf16.gmra.mxu0 %v2371
      %v2517 = vpop.f32.mrf.mxu0
      %v2518 = vadd.f32 0.0, %v2517
      %v2519 = vpop.f32.mrf.mxu0
      %v2520 = vadd.f32 0.0, %v2519
      %2521 = vmatmul.bf16.gmra.mxu0 %v2372
      %v2522 = vpop.f32.mrf.mxu0
      %v2523 = vadd.f32 0.0, %v2522
      %v2524 = vpop.f32.mrf.mxu0
      %v2525 = vadd.f32 0.0, %v2524
      %2526 = vmatmul.bf16.gmra.mxu0 %v2373
      %v2527 = vpop.f32.mrf.mxu0
      %v2528 = vadd.f32 0.0, %v2527
      %v2529 = vpop.f32.mrf.mxu0
      %v2530 = vadd.f32 0.0, %v2529
      %2531 = vmatmul.bf16.gmra.mxu0 %v2374
      %v2532 = vpop.f32.mrf.mxu0
      %v2533 = vadd.f32 0.0, %v2532
      %v2534 = vpop.f32.mrf.mxu0
      %v2535 = vadd.f32 0.0, %v2534
      %2536 = vmatmul.bf16.gmra.mxu0 %v2375
      %v2537 = vpop.f32.mrf.mxu0
      %v2538 = vadd.f32 0.0, %v2537
      %v2539 = vpop.f32.mrf.mxu0
      %v2540 = vadd.f32 0.0, %v2539
      %2541 = vmatmul.bf16.gmra.mxu0 %v2376
      %v2542 = vpop.f32.mrf.mxu0
      %v2543 = vadd.f32 0.0, %v2542
      %v2544 = vpop.f32.mrf.mxu0
      %v2545 = vadd.f32 0.0, %v2544
      %2546 = vmatmul.bf16.gmra.mxu0 %v2377
      %v2547 = vpop.f32.mrf.mxu0
      %v2548 = vadd.f32 0.0, %v2547
      %v2549 = vpop.f32.mrf.mxu0
      %v2550 = vadd.f32 0.0, %v2549
      %2551 = vmatmul.bf16.gmra.mxu0 %v2378
      %v2552 = vpop.f32.mrf.mxu0
      %v2553 = vadd.f32 0.0, %v2552
      %v2554 = vpop.f32.mrf.mxu0
      %v2555 = vadd.f32 0.0, %v2554
      %2556 = vmatmul.bf16.gmra.mxu0 %v2379
      %v2557 = vpop.f32.mrf.mxu0
      %v2558 = vadd.f32 0.0, %v2557
      %v2559 = vpop.f32.mrf.mxu0
      %v2560 = vadd.f32 0.0, %v2559
      %2561 = vmatmul.bf16.gmra.mxu0 %v2380
      %v2562 = vpop.f32.mrf.mxu0
      %v2563 = vadd.f32 0.0, %v2562
      %v2564 = vpop.f32.mrf.mxu0
      %v2565 = vadd.f32 0.0, %v2564
      %2566 = vmatmul.bf16.gmra.mxu0 %v2381
      %v2567 = vpop.f32.mrf.mxu0
      %v2568 = vadd.f32 0.0, %v2567
      %v2569 = vpop.f32.mrf.mxu0
      %v2570 = vadd.f32 0.0, %v2569
      %2571 = vmatmul.bf16.gmra.mxu0 %v2382
      %v2572 = vpop.f32.mrf.mxu0
      %v2573 = vadd.f32 0.0, %v2572
      %v2574 = vpop.f32.mrf.mxu0
      %v2575 = vadd.f32 0.0, %v2574
      %2576 = vmatmul.bf16.gmra.mxu0 %v2383
      %v2577 = vpop.f32.mrf.mxu0
      %v2578 = vadd.f32 0.0, %v2577
      %v2579 = vpop.f32.mrf.mxu0
      %v2580 = vadd.f32 0.0, %v2579
      %2581 = vmatmul.bf16.gmra.mxu0 %v2384
      %v2582 = vpop.f32.mrf.mxu0
      %v2583 = vadd.f32 0.0, %v2582
      %v2584 = vpop.f32.mrf.mxu0
      %v2585 = vadd.f32 0.0, %v2584
      %2586 = vmatmul.bf16.gmra.mxu0 %v2385
      %v2587 = vpop.f32.mrf.mxu0
      %v2588 = vadd.f32 0.0, %v2587
      %v2589 = vpop.f32.mrf.mxu0
      %v2590 = vadd.f32 0.0, %v2589
      %2591 = vmatmul.bf16.gmra.mxu0 %v2386
      %v2592 = vpop.f32.mrf.mxu0
      %v2593 = vadd.f32 0.0, %v2592
      %v2594 = vpop.f32.mrf.mxu0
      %v2595 = vadd.f32 0.0, %v2594
      %2596 = vmatmul.bf16.gmra.mxu0 %v2387
      %v2597 = vpop.f32.mrf.mxu0
      %v2598 = vadd.f32 0.0, %v2597
      %v2599 = vpop.f32.mrf.mxu0
      %v2600 = vadd.f32 0.0, %v2599
      %2601 = vmatmul.bf16.gmra.mxu0 %v2388
      %v2602 = vpop.f32.mrf.mxu0
      %v2603 = vadd.f32 0.0, %v2602
      %v2604 = vpop.f32.mrf.mxu0
      %v2605 = vadd.f32 0.0, %v2604
      %2606 = vmatmul.bf16.gmra.mxu0 %v2389
      %v2607 = vpop.f32.mrf.mxu0
      %v2608 = vadd.f32 0.0, %v2607
      %v2609 = vpop.f32.mrf.mxu0
      %v2610 = vadd.f32 0.0, %v2609
      %2611 = vmatmul.bf16.gmra.mxu0 %v2390
      %v2612 = vpop.f32.mrf.mxu0
      %v2613 = vadd.f32 0.0, %v2612
      %v2614 = vpop.f32.mrf.mxu0
      %v2615 = vadd.f32 0.0, %v2614
      %2616 = vmatmul.bf16.gmra.mxu0 %v2391
      %v2617 = vpop.f32.mrf.mxu0
      %v2618 = vadd.f32 0.0, %v2617
      %v2619 = vpop.f32.mrf.mxu0
      %v2620 = vadd.f32 0.0, %v2619
      %2621 = vmatmul.bf16.gmra.mxu0 %v2392
      %v2622 = vpop.f32.mrf.mxu0
      %v2623 = vadd.f32 0.0, %v2622
      %v2624 = vpop.f32.mrf.mxu0
      %v2625 = vadd.f32 0.0, %v2624
      %2626 = vmatmul.bf16.gmra.mxu0 %v2393
      %v2627 = vpop.f32.mrf.mxu0
      %v2628 = vadd.f32 0.0, %v2627
      %v2629 = vpop.f32.mrf.mxu0
      %v2630 = vadd.f32 0.0, %v2629
      %2631 = vmatmul.bf16.gmra.mxu0 %v2394
      %v2632 = vpop.f32.mrf.mxu0
      %v2633 = vadd.f32 0.0, %v2632
      %v2634 = vpop.f32.mrf.mxu0
      %v2635 = vadd.f32 0.0, %v2634
      %2636 = vmatmul.bf16.gmra.mxu0 %v2395
      %v2637 = vpop.f32.mrf.mxu0
      %v2638 = vadd.f32 0.0, %v2637
      %v2639 = vpop.f32.mrf.mxu0
      %v2640 = vadd.f32 0.0, %v2639
      %2641 = vmatmul.bf16.gmra.mxu0 %v2396
      %v2642 = vpop.f32.mrf.mxu0
      %v2643 = vadd.f32 0.0, %v2642
      %v2644 = vpop.f32.mrf.mxu0
      %v2645 = vadd.f32 0.0, %v2644
      %2646 = vmatmul.bf16.gmra.mxu0 %v2397
      %v2647 = vpop.f32.mrf.mxu0
      %v2648 = vadd.f32 0.0, %v2647
      %v2649 = vpop.f32.mrf.mxu0
      %v2650 = vadd.f32 0.0, %v2649
      %2651 = vmatmul.bf16.gmra.mxu0 %v2398
      %v2652 = vpop.f32.mrf.mxu0
      %v2653 = vadd.f32 0.0, %v2652
      %v2654 = vpop.f32.mrf.mxu0
      %v2655 = vadd.f32 0.0, %v2654
      %2656 = vmatmul.bf16.gmra.mxu0 %v2399
      %v2657 = vpop.f32.mrf.mxu0
      %v2658 = vadd.f32 0.0, %v2657
      %v2659 = vpop.f32.mrf.mxu0
      %v2660 = vadd.f32 0.0, %v2659
      %2661 = vmatmul.bf16.gmra.mxu0 %v2400
      %v2662 = vpop.f32.mrf.mxu0
      %v2663 = vadd.f32 0.0, %v2662
      %v2664 = vpop.f32.mrf.mxu0
      %v2665 = vadd.f32 0.0, %v2664
      %2666 = vmatmul.bf16.gmra.mxu0 %v2401
      %v2667 = vpop.f32.mrf.mxu0
      %v2668 = vadd.f32 0.0, %v2667
      %v2669 = vpop.f32.mrf.mxu0
      %v2670 = vadd.f32 0.0, %v2669
      %2671 = vmatmul.bf16.gmra.mxu0 %v2402
      %v2672 = vpop.f32.mrf.mxu0
      %v2673 = vadd.f32 0.0, %v2672
      %v2674 = vpop.f32.mrf.mxu0
      %v2675 = vadd.f32 0.0, %v2674
      %2676 = vmatmul.bf16.gmra.mxu0 %v2403
      %v2677 = vpop.f32.mrf.mxu0
      %v2678 = vadd.f32 0.0, %v2677
      %v2679 = vpop.f32.mrf.mxu0
      %2680 = vdwg.mxu0
      %v2681 = vadd.f32 %v2201, %v2478
      %v2682 = vadd.f32 %v2202, %v2480
      %v2683 = vadd.f32 %v2203, %v2483
      %v2684 = vadd.f32 %v2204, %v2485
      %v2685 = vadd.f32 %v2205, %v2488
      %v2686 = vadd.f32 %v2206, %v2490
      %v2687 = vadd.f32 %v2207, %v2493
      %v2688 = vadd.f32 %v2208, %v2495
      %v2689 = vadd.f32 %v2209, %v2498
      %v2690 = vadd.f32 %v2210, %v2500
      %v2691 = vadd.f32 %v2211, %v2503
      %v2692 = vadd.f32 %v2212, %v2505
      %v2693 = vadd.f32 %v2213, %v2508
      %v2694 = vadd.f32 %v2214, %v2510
      %v2695 = vadd.f32 %v2215, %v2513
      %v2696 = vadd.f32 %v2216, %v2515
      %v2697 = vadd.f32 %v2217, %v2518
      %v2698 = vadd.f32 %v2218, %v2520
      %v2699 = vadd.f32 %v2219, %v2523
      %v2700 = vadd.f32 %v2220, %v2525
      %v2701 = vadd.f32 %v2221, %v2528
      %v2702 = vadd.f32 %v2222, %v2530
      %v2703 = vadd.f32 %v2223, %v2533
      %v2704 = vadd.f32 %v2224, %v2535
      %v2705 = vadd.f32 %v2225, %v2538
      %v2706 = vadd.f32 %v2226, %v2540
      %v2707 = vadd.f32 %v2227, %v2543
      %v2708 = vadd.f32 %v2228, %v2545
      %v2709 = vadd.f32 %v2229, %v2548
      %v2710 = vadd.f32 %v2230, %v2550
      %v2711 = vadd.f32 %v2231, %v2553
      %v2712 = vadd.f32 %v2232, %v2555
      %v2713 = vadd.f32 %v2233, %v2558
      %v2714 = vadd.f32 %v2234, %v2560
      %v2715 = vadd.f32 %v2235, %v2563
      %v2716 = vadd.f32 %v2236, %v2565
      %v2717 = vadd.f32 %v2237, %v2568
      %v2718 = vadd.f32 %v2238, %v2570
      %v2719 = vadd.f32 %v2239, %v2573
      %v2720 = vadd.f32 %v2240, %v2575
      %v2721 = vadd.f32 %v2241, %v2578
      %v2722 = vadd.f32 %v2242, %v2580
      %v2723 = vadd.f32 %v2243, %v2583
      %v2724 = vadd.f32 %v2244, %v2585
      %v2725 = vadd.f32 %v2245, %v2588
      %v2726 = vadd.f32 %v2246, %v2590
      %v2727 = vadd.f32 %v2247, %v2593
      %v2728 = vadd.f32 %v2248, %v2595
      %v2729 = vadd.f32 %v2249, %v2598
      %v2730 = vadd.f32 %v2250, %v2600
      %v2731 = vadd.f32 %v2251, %v2603
      %v2732 = vadd.f32 %v2252, %v2605
      %v2733 = vadd.f32 %v2253, %v2608
      %v2734 = vadd.f32 %v2254, %v2610
      %v2735 = vadd.f32 %v2255, %v2613
      %v2736 = vadd.f32 %v2256, %v2615
      %v2737 = vadd.f32 %v2257, %v2618
      %v2738 = vadd.f32 %v2258, %v2620
      %v2739 = vadd.f32 %v2259, %v2623
      %v2740 = vadd.f32 %v2260, %v2625
      %v2741 = vadd.f32 %v2261, %v2628
      %v2742 = vadd.f32 %v2262, %v2630
      %v2743 = vadd.f32 %v2263, %v2633
      %v2744 = vadd.f32 %v2264, %v2635
      %v2745 = vadd.f32 %v2265, %v2638
      %v2746 = vadd.f32 %v2266, %v2640
      %v2747 = vadd.f32 %v2267, %v2643
      %v2748 = vadd.f32 %v2268, %v2645
      %v2749 = vadd.f32 %v2269, %v2648
      %v2750 = vadd.f32 %v2270, %v2650
      %v2751 = vadd.f32 %v2271, %v2653
      %v2752 = vadd.f32 %v2272, %v2655
      %v2753 = vadd.f32 %v2273, %v2658
      %v2754 = vadd.f32 %v2274, %v2660
      %v2755 = vadd.f32 %v2275, %v2663
      %v2756 = vadd.f32 %v2276, %v2665
      %v2757 = vadd.f32 %v2277, %v2668
      %v2758 = vadd.f32 %v2278, %v2670
      %v2759 = vadd.f32 %v2279, %v2673
      %v2760 = vadd.f32 %v2280, %v2675
      %v2761 = vadd.f32 %v2281, %v2678
      %v2762 = vld [vmem:[%s523 + $0x19] sm:$0xff]
      %v2763 = vld [vmem:[%s523 + $0x21] sm:$0xff]
      %v2764 = vld [vmem:[%s523 + $0x29] sm:$0xff]
      %v2765 = vld [vmem:[%s523 + $0x31] sm:$0xff]
      %v2766 = vld [vmem:[%s523 + $0x39] sm:$0xff]
      %v2767 = vld [vmem:[%s523 + $0x41] sm:$0xff]
      %v2768 = vld [vmem:[%s523 + $0x49] sm:$0xff]
      %v2769 = vld [vmem:[%s523 + $0x51] sm:$0xff]
      %v2770 = vld [vmem:[%s523 + $0x59] sm:$0xff]
      %v2771 = vld [vmem:[%s523 + $0x61] sm:$0xff]
      %v2772 = vld [vmem:[%s523 + $0x69] sm:$0xff]
      %v2773 = vld [vmem:[%s523 + $0x71] sm:$0xff]
      %v2774 = vld [vmem:[%s523 + $0x79] sm:$0xff]
      %v2775 = vld [vmem:[%s523 + $0x81] sm:$0xff]
      %v2776 = vld [vmem:[%s523 + $0x89] sm:$0xff]
      %v2777 = vld [vmem:[%s523 + $0x91] sm:$0xff]
      %v2778 = vld [vmem:[%s523 + $0x99] sm:$0xff]
      %v2779 = vld [vmem:[%s523 + $0xa1] sm:$0xff]
      %v2780 = vld [vmem:[%s523 + $0xa9] sm:$0xff]
      %v2781 = vld [vmem:[%s523 + $0xb1] sm:$0xff]
      %v2782 = vld [vmem:[%s523 + $0xb9] sm:$0xff]
      %v2783 = vld [vmem:[%s523 + $0xc1] sm:$0xff]
      %v2784 = vld [vmem:[%s523 + $0xc9] sm:$0xff]
      %v2785 = vld [vmem:[%s523 + $0xd1] sm:$0xff]
      %v2786 = vld [vmem:[%s523 + $0xd9] sm:$0xff]
      %v2787 = vld [vmem:[%s523 + $0xe1] sm:$0xff]
      %v2788 = vld [vmem:[%s523 + $0xe9] sm:$0xff]
      %v2789 = vld [vmem:[%s523 + $0xf1] sm:$0xff]
      %v2790 = vld [vmem:[%s523 + $0xf9] sm:$0xff]
      %v2791 = vld [vmem:[%s523 + $0x101] sm:$0xff]
      %v2792 = vld [vmem:[%s523 + $0x109] sm:$0xff]
      %v2793 = vld [vmem:[%s523 + $0x111] sm:$0xff]
      %v2794 = vld [vmem:[%s523 + $0x119] sm:$0xff]
      %v2795 = vld [vmem:[%s523 + $0x121] sm:$0xff]
      %v2796 = vld [vmem:[%s523 + $0x129] sm:$0xff]
      %v2797 = vld [vmem:[%s523 + $0x131] sm:$0xff]
      %v2798 = vld [vmem:[%s523 + $0x139] sm:$0xff]
      %v2799 = vld [vmem:[%s523 + $0x141] sm:$0xff]
      %v2800 = vld [vmem:[%s523 + $0x149] sm:$0xff]
      %v2801 = vld [vmem:[%s523 + $0x151] sm:$0xff]
      %v2802 = vld [vmem:[%s523 + $0x159] sm:$0xff]
      %v2803 = vld [vmem:[%s523 + $0x161] sm:$0xff]
      %v2804 = vld [vmem:[%s523 + $0x169] sm:$0xff]
      %v2805 = vld [vmem:[%s523 + $0x171] sm:$0xff]
      %v2806 = vld [vmem:[%s523 + $0x179] sm:$0xff]
      %v2807 = vld [vmem:[%s523 + $0x181] sm:$0xff]
      %v2808 = vld [vmem:[%s523 + $0x189] sm:$0xff]
      %v2809 = vld [vmem:[%s523 + $0x191] sm:$0xff]
      %v2810 = vld [vmem:[%s523 + $0x199] sm:$0xff]
      %v2811 = vld [vmem:[%s523 + $0x1a1] sm:$0xff]
      %v2812 = vld [vmem:[%s523 + $0x1a9] sm:$0xff]
      %v2813 = vld [vmem:[%s523 + $0x1b1] sm:$0xff]
      %v2814 = vld [vmem:[%s523 + $0x1b9] sm:$0xff]
      %v2815 = vld [vmem:[%s523 + $0x1c1] sm:$0xff]
      %v2816 = vld [vmem:[%s523 + $0x1c9] sm:$0xff]
      %v2817 = vld [vmem:[%s523 + $0x1d1] sm:$0xff]
      %v2818 = vld [vmem:[%s523 + $0x1d9] sm:$0xff]
      %v2819 = vld [vmem:[%s523 + $0x1e1] sm:$0xff]
      %v2820 = vld [vmem:[%s523 + $0x1e9] sm:$0xff]
      %v2821 = vld [vmem:[%s523 + $0x1f1] sm:$0xff]
      %v2822 = vld [vmem:[%s523 + $0x1f9] sm:$0xff]
      %v2823 = vld [vmem:[%s523 + $0x201] sm:$0xff]
      %v2824 = vld [vmem:[%s523 + $0x209] sm:$0xff]
      %v2825 = vld [vmem:[%s523 + $0x211] sm:$0xff]
      %v2826 = vld [vmem:[%s523 + $0x219] sm:$0xff]
      %v2827 = vld [vmem:[%s523 + $0x221] sm:$0xff]
      %v2828 = vld [vmem:[%s523 + $0x229] sm:$0xff]
      %v2829 = vld [vmem:[%s523 + $0x231] sm:$0xff]
      %v2830 = vld [vmem:[%s523 + $0x239] sm:$0xff]
      %v2831 = vld [vmem:[%s523 + $0x241] sm:$0xff]
      %v2832 = vld [vmem:[%s523 + $0x249] sm:$0xff]
      %v2833 = vld [vmem:[%s523 + $0x251] sm:$0xff]
      %v2834 = vld [vmem:[%s523 + $0x259] sm:$0xff]
      %v2835 = vld [vmem:[%s523 + $0x261] sm:$0xff]
      %v2836 = vld [vmem:[%s523 + $0x269] sm:$0xff]
      %v2837 = vld [vmem:[%s523 + $0x271] sm:$0xff]
      %v2838 = vld [vmem:[%s523 + $0x279] sm:$0xff]
      %v2839 = vld [vmem:[%s523 + $0x281] sm:$0xff]
      %v2840 = vld [vmem:[%s523 + $0x289] sm:$0xff]
      %v2841 = vld [vmem:[%s523 + $0x291] sm:$0xff]
      %v2842 = vld [vmem:[%s523 + $0x299] sm:$0xff]
      %v2843 = vpack.c.bf16 %v2763, %v2762
      %v2844 = vpack.c.bf16 %v2765, %v2764
      %v2845 = vpack.c.bf16 %v2767, %v2766
      %v2846 = vpack.c.bf16 %v2769, %v2768
      %v2847 = vpack.c.bf16 %v2771, %v2770
      %v2848 = vpack.c.bf16 %v2773, %v2772
      %v2849 = vpack.c.bf16 %v2775, %v2774
      %v2850 = vpack.c.bf16 %v2777, %v2776
      %v2851 = vpack.c.bf16 %v2779, %v2778
      %v2852 = vpack.c.bf16 %v2781, %v2780
      %v2853 = vpack.c.bf16 %v2783, %v2782
      %v2854 = vpack.c.bf16 %v2785, %v2784
      %v2855 = vpack.c.bf16 %v2787, %v2786
      %v2856 = vpack.c.bf16 %v2789, %v2788
      %v2857 = vpack.c.bf16 %v2791, %v2790
      %v2858 = vpack.c.bf16 %v2793, %v2792
      %v2859 = vpack.c.bf16 %v2795, %v2794
      %v2860 = vpack.c.bf16 %v2797, %v2796
      %v2861 = vpack.c.bf16 %v2799, %v2798
      %v2862 = vpack.c.bf16 %v2801, %v2800
      %v2863 = vpack.c.bf16 %v2803, %v2802
      %v2864 = vpack.c.bf16 %v2805, %v2804
      %v2865 = vpack.c.bf16 %v2807, %v2806
      %v2866 = vpack.c.bf16 %v2809, %v2808
      %v2867 = vpack.c.bf16 %v2811, %v2810
      %v2868 = vpack.c.bf16 %v2813, %v2812
      %v2869 = vpack.c.bf16 %v2815, %v2814
      %v2870 = vpack.c.bf16 %v2817, %v2816
      %v2871 = vpack.c.bf16 %v2819, %v2818
      %v2872 = vpack.c.bf16 %v2821, %v2820
      %v2873 = vpack.c.bf16 %v2823, %v2822
      %v2874 = vpack.c.bf16 %v2825, %v2824
      %v2875 = vpack.c.bf16 %v2827, %v2826
      %v2876 = vpack.c.bf16 %v2829, %v2828
      %v2877 = vpack.c.bf16 %v2831, %v2830
      %v2878 = vpack.c.bf16 %v2833, %v2832
      %v2879 = vpack.c.bf16 %v2835, %v2834
      %v2880 = vpack.c.bf16 %v2837, %v2836
      %v2881 = vpack.c.bf16 %v2839, %v2838
      %v2882 = vpack.c.bf16 %v2841, %v2840
      %v2883 = vpack.c.bf16 %v2842, %v2842
      %v2884 = vld [vmem:[%s329 + $0x140] sm:$0xf]
      %v2885 = vld [vmem:[%s329 + $0x144] sm:$0xf]
      %v2886 = vld [vmem:[%s329 + $0x148] sm:$0xf]
      %v2887 = vld [vmem:[%s329 + $0x14c] sm:$0xf]
      %v2888 = vld [vmem:[%s329 + $0x150] sm:$0xf]
      %v2889 = vld [vmem:[%s329 + $0x154] sm:$0xf]
      %v2890 = vld [vmem:[%s329 + $0x158] sm:$0xf]
      %v2891 = vld [vmem:[%s329 + $0x15c] sm:$0xf]
      %v2892 = vld [vmem:[%s329 + $0x160] sm:$0xf]
      %v2893 = vld [vmem:[%s329 + $0x164] sm:$0xf]
      %v2894 = vld [vmem:[%s329 + $0x168] sm:$0xf]
      %v2895 = vld [vmem:[%s329 + $0x16c] sm:$0xf]
      %v2896 = vld [vmem:[%s329 + $0x170] sm:$0xf]
      %v2897 = vld [vmem:[%s329 + $0x174] sm:$0xf]
      %v2898 = vld [vmem:[%s329 + $0x178] sm:$0xf]
      %v2899 = vld [vmem:[%s329 + $0x17c] sm:$0xf]
      %v2916 = vunpack.c.l.b16 %v2884
      %v2917 = vunpack.c.l.b16 %v2885
      %v2918 = vunpack.c.l.b16 %v2886
      %v2919 = vunpack.c.l.b16 %v2887
      %v2920 = vunpack.c.l.b16 %v2888
      %v2921 = vunpack.c.l.b16 %v2889
      %v2922 = vunpack.c.l.b16 %v2890
      %v2923 = vunpack.c.l.b16 %v2891
      %v2924 = vunpack.c.l.b16 %v2892
      %v2925 = vunpack.c.l.b16 %v2893
      %v2926 = vunpack.c.l.b16 %v2894
      %v2927 = vunpack.c.l.b16 %v2895
      %v2928 = vunpack.c.l.b16 %v2896
      %v2929 = vunpack.c.l.b16 %v2897
      %v2930 = vunpack.c.l.b16 %v2898
      %v2931 = vunpack.c.l.b16 %v2899
      %v2932 = vpack.c.b16 %v2917, %v2916
      %v2933 = vpack.c.b16 %v2919, %v2918
      %v2934 = vpack.c.b16 %v2921, %v2920
      %v2935 = vpack.c.b16 %v2923, %v2922
      %v2936 = vpack.c.b16 %v2925, %v2924
      %v2937 = vpack.c.b16 %v2927, %v2926
      %v2938 = vpack.c.b16 %v2929, %v2928
      %v2939 = vpack.c.b16 %v2931, %v2930
      %2948 = vmatpush.bf16.msra.mxu0 %v2939
      %2949 = vmatpush.bf16.msra.mxu0 %v2938
      %2950 = vmatpush.bf16.msra.mxu0 %v2937
      %2951 = vmatpush.bf16.msra.mxu0 %v2936
      %2952 = vmatpush.bf16.msra.mxu0 %v2935
      %2953 = vmatpush.bf16.msra.mxu0 %v2934
      %2954 = vmatpush.bf16.msra.mxu0 %v2933
      %2955 = vmatpush.bf16.msra.mxu0 %v2932
      %2956 = vmatmul.bf16.gmra.mxu0 %v2843
      %v2957 = vpop.f32.mrf.mxu0
      %v2958 = vadd.f32 0.0, %v2957
      %v2959 = vpop.f32.mrf.mxu0
      %v2960 = vadd.f32 0.0, %v2959
      %2961 = vmatmul.bf16.gmra.mxu0 %v2844
      %v2962 = vpop.f32.mrf.mxu0
      %v2963 = vadd.f32 0.0, %v2962
      %v2964 = vpop.f32.mrf.mxu0
      %v2965 = vadd.f32 0.0, %v2964
      %2966 = vmatmul.bf16.gmra.mxu0 %v2845
      %v2967 = vpop.f32.mrf.mxu0
      %v2968 = vadd.f32 0.0, %v2967
      %v2969 = vpop.f32.mrf.mxu0
      %v2970 = vadd.f32 0.0, %v2969
      %2971 = vmatmul.bf16.gmra.mxu0 %v2846
      %v2972 = vpop.f32.mrf.mxu0
      %v2973 = vadd.f32 0.0, %v2972
      %v2974 = vpop.f32.mrf.mxu0
      %v2975 = vadd.f32 0.0, %v2974
      %2976 = vmatmul.bf16.gmra.mxu0 %v2847
      %v2977 = vpop.f32.mrf.mxu0
      %v2978 = vadd.f32 0.0, %v2977
      %v2979 = vpop.f32.mrf.mxu0
      %v2980 = vadd.f32 0.0, %v2979
      %2981 = vmatmul.bf16.gmra.mxu0 %v2848
      %v2982 = vpop.f32.mrf.mxu0
      %v2983 = vadd.f32 0.0, %v2982
      %v2984 = vpop.f32.mrf.mxu0
      %v2985 = vadd.f32 0.0, %v2984
      %2986 = vmatmul.bf16.gmra.mxu0 %v2849
      %v2987 = vpop.f32.mrf.mxu0
      %v2988 = vadd.f32 0.0, %v2987
      %v2989 = vpop.f32.mrf.mxu0
      %v2990 = vadd.f32 0.0, %v2989
      %2991 = vmatmul.bf16.gmra.mxu0 %v2850
      %v2992 = vpop.f32.mrf.mxu0
      %v2993 = vadd.f32 0.0, %v2992
      %v2994 = vpop.f32.mrf.mxu0
      %v2995 = vadd.f32 0.0, %v2994
      %2996 = vmatmul.bf16.gmra.mxu0 %v2851
      %v2997 = vpop.f32.mrf.mxu0
      %v2998 = vadd.f32 0.0, %v2997
      %v2999 = vpop.f32.mrf.mxu0
      %v3000 = vadd.f32 0.0, %v2999
      %3001 = vmatmul.bf16.gmra.mxu0 %v2852
      %v3002 = vpop.f32.mrf.mxu0
      %v3003 = vadd.f32 0.0, %v3002
      %v3004 = vpop.f32.mrf.mxu0
      %v3005 = vadd.f32 0.0, %v3004
      %3006 = vmatmul.bf16.gmra.mxu0 %v2853
      %v3007 = vpop.f32.mrf.mxu0
      %v3008 = vadd.f32 0.0, %v3007
      %v3009 = vpop.f32.mrf.mxu0
      %v3010 = vadd.f32 0.0, %v3009
      %3011 = vmatmul.bf16.gmra.mxu0 %v2854
      %v3012 = vpop.f32.mrf.mxu0
      %v3013 = vadd.f32 0.0, %v3012
      %v3014 = vpop.f32.mrf.mxu0
      %v3015 = vadd.f32 0.0, %v3014
      %3016 = vmatmul.bf16.gmra.mxu0 %v2855
      %v3017 = vpop.f32.mrf.mxu0
      %v3018 = vadd.f32 0.0, %v3017
      %v3019 = vpop.f32.mrf.mxu0
      %v3020 = vadd.f32 0.0, %v3019
      %3021 = vmatmul.bf16.gmra.mxu0 %v2856
      %v3022 = vpop.f32.mrf.mxu0
      %v3023 = vadd.f32 0.0, %v3022
      %v3024 = vpop.f32.mrf.mxu0
      %v3025 = vadd.f32 0.0, %v3024
      %3026 = vmatmul.bf16.gmra.mxu0 %v2857
      %v3027 = vpop.f32.mrf.mxu0
      %v3028 = vadd.f32 0.0, %v3027
      %v3029 = vpop.f32.mrf.mxu0
      %v3030 = vadd.f32 0.0, %v3029
      %3031 = vmatmul.bf16.gmra.mxu0 %v2858
      %v3032 = vpop.f32.mrf.mxu0
      %v3033 = vadd.f32 0.0, %v3032
      %v3034 = vpop.f32.mrf.mxu0
      %v3035 = vadd.f32 0.0, %v3034
      %3036 = vmatmul.bf16.gmra.mxu0 %v2859
      %v3037 = vpop.f32.mrf.mxu0
      %v3038 = vadd.f32 0.0, %v3037
      %v3039 = vpop.f32.mrf.mxu0
      %v3040 = vadd.f32 0.0, %v3039
      %3041 = vmatmul.bf16.gmra.mxu0 %v2860
      %v3042 = vpop.f32.mrf.mxu0
      %v3043 = vadd.f32 0.0, %v3042
      %v3044 = vpop.f32.mrf.mxu0
      %v3045 = vadd.f32 0.0, %v3044
      %3046 = vmatmul.bf16.gmra.mxu0 %v2861
      %v3047 = vpop.f32.mrf.mxu0
      %v3048 = vadd.f32 0.0, %v3047
      %v3049 = vpop.f32.mrf.mxu0
      %v3050 = vadd.f32 0.0, %v3049
      %3051 = vmatmul.bf16.gmra.mxu0 %v2862
      %v3052 = vpop.f32.mrf.mxu0
      %v3053 = vadd.f32 0.0, %v3052
      %v3054 = vpop.f32.mrf.mxu0
      %v3055 = vadd.f32 0.0, %v3054
      %3056 = vmatmul.bf16.gmra.mxu0 %v2863
      %v3057 = vpop.f32.mrf.mxu0
      %v3058 = vadd.f32 0.0, %v3057
      %v3059 = vpop.f32.mrf.mxu0
      %v3060 = vadd.f32 0.0, %v3059
      %3061 = vmatmul.bf16.gmra.mxu0 %v2864
      %v3062 = vpop.f32.mrf.mxu0
      %v3063 = vadd.f32 0.0, %v3062
      %v3064 = vpop.f32.mrf.mxu0
      %v3065 = vadd.f32 0.0, %v3064
      %3066 = vmatmul.bf16.gmra.mxu0 %v2865
      %v3067 = vpop.f32.mrf.mxu0
      %v3068 = vadd.f32 0.0, %v3067
      %v3069 = vpop.f32.mrf.mxu0
      %v3070 = vadd.f32 0.0, %v3069
      %3071 = vmatmul.bf16.gmra.mxu0 %v2866
      %v3072 = vpop.f32.mrf.mxu0
      %v3073 = vadd.f32 0.0, %v3072
      %v3074 = vpop.f32.mrf.mxu0
      %v3075 = vadd.f32 0.0, %v3074
      %3076 = vmatmul.bf16.gmra.mxu0 %v2867
      %v3077 = vpop.f32.mrf.mxu0
      %v3078 = vadd.f32 0.0, %v3077
      %v3079 = vpop.f32.mrf.mxu0
      %v3080 = vadd.f32 0.0, %v3079
      %3081 = vmatmul.bf16.gmra.mxu0 %v2868
      %v3082 = vpop.f32.mrf.mxu0
      %v3083 = vadd.f32 0.0, %v3082
      %v3084 = vpop.f32.mrf.mxu0
      %v3085 = vadd.f32 0.0, %v3084
      %3086 = vmatmul.bf16.gmra.mxu0 %v2869
      %v3087 = vpop.f32.mrf.mxu0
      %v3088 = vadd.f32 0.0, %v3087
      %v3089 = vpop.f32.mrf.mxu0
      %v3090 = vadd.f32 0.0, %v3089
      %3091 = vmatmul.bf16.gmra.mxu0 %v2870
      %v3092 = vpop.f32.mrf.mxu0
      %v3093 = vadd.f32 0.0, %v3092
      %v3094 = vpop.f32.mrf.mxu0
      %v3095 = vadd.f32 0.0, %v3094
      %3096 = vmatmul.bf16.gmra.mxu0 %v2871
      %v3097 = vpop.f32.mrf.mxu0
      %v3098 = vadd.f32 0.0, %v3097
      %v3099 = vpop.f32.mrf.mxu0
      %v3100 = vadd.f32 0.0, %v3099
      %3101 = vmatmul.bf16.gmra.mxu0 %v2872
      %v3102 = vpop.f32.mrf.mxu0
      %v3103 = vadd.f32 0.0, %v3102
      %v3104 = vpop.f32.mrf.mxu0
      %v3105 = vadd.f32 0.0, %v3104
      %3106 = vmatmul.bf16.gmra.mxu0 %v2873
      %v3107 = vpop.f32.mrf.mxu0
      %v3108 = vadd.f32 0.0, %v3107
      %v3109 = vpop.f32.mrf.mxu0
      %v3110 = vadd.f32 0.0, %v3109
      %3111 = vmatmul.bf16.gmra.mxu0 %v2874
      %v3112 = vpop.f32.mrf.mxu0
      %v3113 = vadd.f32 0.0, %v3112
      %v3114 = vpop.f32.mrf.mxu0
      %v3115 = vadd.f32 0.0, %v3114
      %3116 = vmatmul.bf16.gmra.mxu0 %v2875
      %v3117 = vpop.f32.mrf.mxu0
      %v3118 = vadd.f32 0.0, %v3117
      %v3119 = vpop.f32.mrf.mxu0
      %v3120 = vadd.f32 0.0, %v3119
      %3121 = vmatmul.bf16.gmra.mxu0 %v2876
      %v3122 = vpop.f32.mrf.mxu0
      %v3123 = vadd.f32 0.0, %v3122
      %v3124 = vpop.f32.mrf.mxu0
      %v3125 = vadd.f32 0.0, %v3124
      %3126 = vmatmul.bf16.gmra.mxu0 %v2877
      %v3127 = vpop.f32.mrf.mxu0
      %v3128 = vadd.f32 0.0, %v3127
      %v3129 = vpop.f32.mrf.mxu0
      %v3130 = vadd.f32 0.0, %v3129
      %3131 = vmatmul.bf16.gmra.mxu0 %v2878
      %v3132 = vpop.f32.mrf.mxu0
      %v3133 = vadd.f32 0.0, %v3132
      %v3134 = vpop.f32.mrf.mxu0
      %v3135 = vadd.f32 0.0, %v3134
      %3136 = vmatmul.bf16.gmra.mxu0 %v2879
      %v3137 = vpop.f32.mrf.mxu0
      %v3138 = vadd.f32 0.0, %v3137
      %v3139 = vpop.f32.mrf.mxu0
      %v3140 = vadd.f32 0.0, %v3139
      %3141 = vmatmul.bf16.gmra.mxu0 %v2880
      %v3142 = vpop.f32.mrf.mxu0
      %v3143 = vadd.f32 0.0, %v3142
      %v3144 = vpop.f32.mrf.mxu0
      %v3145 = vadd.f32 0.0, %v3144
      %3146 = vmatmul.bf16.gmra.mxu0 %v2881
      %v3147 = vpop.f32.mrf.mxu0
      %v3148 = vadd.f32 0.0, %v3147
      %v3149 = vpop.f32.mrf.mxu0
      %v3150 = vadd.f32 0.0, %v3149
      %3151 = vmatmul.bf16.gmra.mxu0 %v2882
      %v3152 = vpop.f32.mrf.mxu0
      %v3153 = vadd.f32 0.0, %v3152
      %v3154 = vpop.f32.mrf.mxu0
      %v3155 = vadd.f32 0.0, %v3154
      %3156 = vmatmul.bf16.gmra.mxu0 %v2883
      %v3157 = vpop.f32.mrf.mxu0
      %v3158 = vadd.f32 0.0, %v3157
      %v3159 = vpop.f32.mrf.mxu0
      %3160 = vdwg.mxu0
      %v3161 = vadd.f32 %v2681, %v2958
      %v3162 = vadd.f32 %v2682, %v2960
      %v3163 = vadd.f32 %v2683, %v2963
      %v3164 = vadd.f32 %v2684, %v2965
      %v3165 = vadd.f32 %v2685, %v2968
      %v3166 = vadd.f32 %v2686, %v2970
      %v3167 = vadd.f32 %v2687, %v2973
      %v3168 = vadd.f32 %v2688, %v2975
      %v3169 = vadd.f32 %v2689, %v2978
      %v3170 = vadd.f32 %v2690, %v2980
      %v3171 = vadd.f32 %v2691, %v2983
      %v3172 = vadd.f32 %v2692, %v2985
      %v3173 = vadd.f32 %v2693, %v2988
      %v3174 = vadd.f32 %v2694, %v2990
      %v3175 = vadd.f32 %v2695, %v2993
      %v3176 = vadd.f32 %v2696, %v2995
      %v3177 = vadd.f32 %v2697, %v2998
      %v3178 = vadd.f32 %v2698, %v3000
      %v3179 = vadd.f32 %v2699, %v3003
      %v3180 = vadd.f32 %v2700, %v3005
      %v3181 = vadd.f32 %v2701, %v3008
      %v3182 = vadd.f32 %v2702, %v3010
      %v3183 = vadd.f32 %v2703, %v3013
      %v3184 = vadd.f32 %v2704, %v3015
      %v3185 = vadd.f32 %v2705, %v3018
      %v3186 = vadd.f32 %v2706, %v3020
      %v3187 = vadd.f32 %v2707, %v3023
      %v3188 = vadd.f32 %v2708, %v3025
      %v3189 = vadd.f32 %v2709, %v3028
      %v3190 = vadd.f32 %v2710, %v3030
      %v3191 = vadd.f32 %v2711, %v3033
      %v3192 = vadd.f32 %v2712, %v3035
      %v3193 = vadd.f32 %v2713, %v3038
      %v3194 = vadd.f32 %v2714, %v3040
      %v3195 = vadd.f32 %v2715, %v3043
      %v3196 = vadd.f32 %v2716, %v3045
      %v3197 = vadd.f32 %v2717, %v3048
      %v3198 = vadd.f32 %v2718, %v3050
      %v3199 = vadd.f32 %v2719, %v3053
      %v3200 = vadd.f32 %v2720, %v3055
      %v3201 = vadd.f32 %v2721, %v3058
      %v3202 = vadd.f32 %v2722, %v3060
      %v3203 = vadd.f32 %v2723, %v3063
      %v3204 = vadd.f32 %v2724, %v3065
      %v3205 = vadd.f32 %v2725, %v3068
      %v3206 = vadd.f32 %v2726, %v3070
      %v3207 = vadd.f32 %v2727, %v3073
      %v3208 = vadd.f32 %v2728, %v3075
      %v3209 = vadd.f32 %v2729, %v3078
      %v3210 = vadd.f32 %v2730, %v3080
      %v3211 = vadd.f32 %v2731, %v3083
      %v3212 = vadd.f32 %v2732, %v3085
      %v3213 = vadd.f32 %v2733, %v3088
      %v3214 = vadd.f32 %v2734, %v3090
      %v3215 = vadd.f32 %v2735, %v3093
      %v3216 = vadd.f32 %v2736, %v3095
      %v3217 = vadd.f32 %v2737, %v3098
      %v3218 = vadd.f32 %v2738, %v3100
      %v3219 = vadd.f32 %v2739, %v3103
      %v3220 = vadd.f32 %v2740, %v3105
      %v3221 = vadd.f32 %v2741, %v3108
      %v3222 = vadd.f32 %v2742, %v3110
      %v3223 = vadd.f32 %v2743, %v3113
      %v3224 = vadd.f32 %v2744, %v3115
      %v3225 = vadd.f32 %v2745, %v3118
      %v3226 = vadd.f32 %v2746, %v3120
      %v3227 = vadd.f32 %v2747, %v3123
      %v3228 = vadd.f32 %v2748, %v3125
      %v3229 = vadd.f32 %v2749, %v3128
      %v3230 = vadd.f32 %v2750, %v3130
      %v3231 = vadd.f32 %v2751, %v3133
      %v3232 = vadd.f32 %v2752, %v3135
      %v3233 = vadd.f32 %v2753, %v3138
      %v3234 = vadd.f32 %v2754, %v3140
      %v3235 = vadd.f32 %v2755, %v3143
      %v3236 = vadd.f32 %v2756, %v3145
      %v3237 = vadd.f32 %v2757, %v3148
      %v3238 = vadd.f32 %v2758, %v3150
      %v3239 = vadd.f32 %v2759, %v3153
      %v3240 = vadd.f32 %v2760, %v3155
      %v3241 = vadd.f32 %v2761, %v3158
      %v3242 = vld [vmem:[%s523 + $0x29] sm:$0xff]
      %v3243 = vld [vmem:[%s523 + $0x31] sm:$0xff]
      %v3244 = vld [vmem:[%s523 + $0x39] sm:$0xff]
      %v3245 = vld [vmem:[%s523 + $0x41] sm:$0xff]
      %v3246 = vld [vmem:[%s523 + $0x49] sm:$0xff]
      %v3247 = vld [vmem:[%s523 + $0x51] sm:$0xff]
      %v3248 = vld [vmem:[%s523 + $0x59] sm:$0xff]
      %v3249 = vld [vmem:[%s523 + $0x61] sm:$0xff]
      %v3250 = vld [vmem:[%s523 + $0x69] sm:$0xff]
      %v3251 = vld [vmem:[%s523 + $0x71] sm:$0xff]
      %v3252 = vld [vmem:[%s523 + $0x79] sm:$0xff]
      %v3253 = vld [vmem:[%s523 + $0x81] sm:$0xff]
      %v3254 = vld [vmem:[%s523 + $0x89] sm:$0xff]
      %v3255 = vld [vmem:[%s523 + $0x91] sm:$0xff]
      %v3256 = vld [vmem:[%s523 + $0x99] sm:$0xff]
      %v3257 = vld [vmem:[%s523 + $0xa1] sm:$0xff]
      %v3258 = vld [vmem:[%s523 + $0xa9] sm:$0xff]
      %v3259 = vld [vmem:[%s523 + $0xb1] sm:$0xff]
      %v3260 = vld [vmem:[%s523 + $0xb9] sm:$0xff]
      %v3261 = vld [vmem:[%s523 + $0xc1] sm:$0xff]
      %v3262 = vld [vmem:[%s523 + $0xc9] sm:$0xff]
      %v3263 = vld [vmem:[%s523 + $0xd1] sm:$0xff]
      %v3264 = vld [vmem:[%s523 + $0xd9] sm:$0xff]
      %v3265 = vld [vmem:[%s523 + $0xe1] sm:$0xff]
      %v3266 = vld [vmem:[%s523 + $0xe9] sm:$0xff]
      %v3267 = vld [vmem:[%s523 + $0xf1] sm:$0xff]
      %v3268 = vld [vmem:[%s523 + $0xf9] sm:$0xff]
      %v3269 = vld [vmem:[%s523 + $0x101] sm:$0xff]
      %v3270 = vld [vmem:[%s523 + $0x109] sm:$0xff]
      %v3271 = vld [vmem:[%s523 + $0x111] sm:$0xff]
      %v3272 = vld [vmem:[%s523 + $0x119] sm:$0xff]
      %v3273 = vld [vmem:[%s523 + $0x121] sm:$0xff]
      %v3274 = vld [vmem:[%s523 + $0x129] sm:$0xff]
      %v3275 = vld [vmem:[%s523 + $0x131] sm:$0xff]
      %v3276 = vld [vmem:[%s523 + $0x139] sm:$0xff]
      %v3277 = vld [vmem:[%s523 + $0x141] sm:$0xff]
      %v3278 = vld [vmem:[%s523 + $0x149] sm:$0xff]
      %v3279 = vld [vmem:[%s523 + $0x151] sm:$0xff]
      %v3280 = vld [vmem:[%s523 + $0x159] sm:$0xff]
      %v3281 = vld [vmem:[%s523 + $0x161] sm:$0xff]
      %v3282 = vld [vmem:[%s523 + $0x169] sm:$0xff]
      %v3283 = vld [vmem:[%s523 + $0x171] sm:$0xff]
      %v3284 = vld [vmem:[%s523 + $0x179] sm:$0xff]
      %v3285 = vld [vmem:[%s523 + $0x181] sm:$0xff]
      %v3286 = vld [vmem:[%s523 + $0x189] sm:$0xff]
      %v3287 = vld [vmem:[%s523 + $0x191] sm:$0xff]
      %v3288 = vld [vmem:[%s523 + $0x199] sm:$0xff]
      %v3289 = vld [vmem:[%s523 + $0x1a1] sm:$0xff]
      %v3290 = vld [vmem:[%s523 + $0x1a9] sm:$0xff]
      %v3291 = vld [vmem:[%s523 + $0x1b1] sm:$0xff]
      %v3292 = vld [vmem:[%s523 + $0x1b9] sm:$0xff]
      %v3293 = vld [vmem:[%s523 + $0x1c1] sm:$0xff]
      %v3294 = vld [vmem:[%s523 + $0x1c9] sm:$0xff]
      %v3295 = vld [vmem:[%s523 + $0x1d1] sm:$0xff]
      %v3296 = vld [vmem:[%s523 + $0x1d9] sm:$0xff]
      %v3297 = vld [vmem:[%s523 + $0x1e1] sm:$0xff]
      %v3298 = vld [vmem:[%s523 + $0x1e9] sm:$0xff]
      %v3299 = vld [vmem:[%s523 + $0x1f1] sm:$0xff]
      %v3300 = vld [vmem:[%s523 + $0x1f9] sm:$0xff]
      %v3301 = vld [vmem:[%s523 + $0x201] sm:$0xff]
      %v3302 = vld [vmem:[%s523 + $0x209] sm:$0xff]
      %v3303 = vld [vmem:[%s523 + $0x211] sm:$0xff]
      %v3304 = vld [vmem:[%s523 + $0x219] sm:$0xff]
      %v3305 = vld [vmem:[%s523 + $0x221] sm:$0xff]
      %v3306 = vld [vmem:[%s523 + $0x229] sm:$0xff]
      %v3307 = vld [vmem:[%s523 + $0x231] sm:$0xff]
      %v3308 = vld [vmem:[%s523 + $0x239] sm:$0xff]
      %v3309 = vld [vmem:[%s523 + $0x241] sm:$0xff]
      %v3310 = vld [vmem:[%s523 + $0x249] sm:$0xff]
      %v3311 = vld [vmem:[%s523 + $0x251] sm:$0xff]
      %v3312 = vld [vmem:[%s523 + $0x259] sm:$0xff]
      %v3313 = vld [vmem:[%s523 + $0x261] sm:$0xff]
      %v3314 = vld [vmem:[%s523 + $0x269] sm:$0xff]
      %v3315 = vld [vmem:[%s523 + $0x271] sm:$0xff]
      %v3316 = vld [vmem:[%s523 + $0x279] sm:$0xff]
      %v3317 = vld [vmem:[%s523 + $0x281] sm:$0xff]
      %v3318 = vld [vmem:[%s523 + $0x289] sm:$0xff]
      %v3319 = vld [vmem:[%s523 + $0x291] sm:$0xff]
      %v3320 = vld [vmem:[%s523 + $0x299] sm:$0xff]
      %v3321 = vld [vmem:[%s523 + $0x2a1] sm:$0xff]
      %v3322 = vld [vmem:[%s523 + $0x2a9] sm:$0xff]
      %v3323 = vpack.c.bf16 %v3243, %v3242
      %v3324 = vpack.c.bf16 %v3245, %v3244
      %v3325 = vpack.c.bf16 %v3247, %v3246
      %v3326 = vpack.c.bf16 %v3249, %v3248
      %v3327 = vpack.c.bf16 %v3251, %v3250
      %v3328 = vpack.c.bf16 %v3253, %v3252
      %v3329 = vpack.c.bf16 %v3255, %v3254
      %v3330 = vpack.c.bf16 %v3257, %v3256
      %v3331 = vpack.c.bf16 %v3259, %v3258
      %v3332 = vpack.c.bf16 %v3261, %v3260
      %v3333 = vpack.c.bf16 %v3263, %v3262
      %v3334 = vpack.c.bf16 %v3265, %v3264
      %v3335 = vpack.c.bf16 %v3267, %v3266
      %v3336 = vpack.c.bf16 %v3269, %v3268
      %v3337 = vpack.c.bf16 %v3271, %v3270
      %v3338 = vpack.c.bf16 %v3273, %v3272
      %v3339 = vpack.c.bf16 %v3275, %v3274
      %v3340 = vpack.c.bf16 %v3277, %v3276
      %v3341 = vpack.c.bf16 %v3279, %v3278
      %v3342 = vpack.c.bf16 %v3281, %v3280
      %v3343 = vpack.c.bf16 %v3283, %v3282
      %v3344 = vpack.c.bf16 %v3285, %v3284
      %v3345 = vpack.c.bf16 %v3287, %v3286
      %v3346 = vpack.c.bf16 %v3289, %v3288
      %v3347 = vpack.c.bf16 %v3291, %v3290
      %v3348 = vpack.c.bf16 %v3293, %v3292
      %v3349 = vpack.c.bf16 %v3295, %v3294
      %v3350 = vpack.c.bf16 %v3297, %v3296
      %v3351 = vpack.c.bf16 %v3299, %v3298
      %v3352 = vpack.c.bf16 %v3301, %v3300
      %v3353 = vpack.c.bf16 %v3303, %v3302
      %v3354 = vpack.c.bf16 %v3305, %v3304
      %v3355 = vpack.c.bf16 %v3307, %v3306
      %v3356 = vpack.c.bf16 %v3309, %v3308
      %v3357 = vpack.c.bf16 %v3311, %v3310
      %v3358 = vpack.c.bf16 %v3313, %v3312
      %v3359 = vpack.c.bf16 %v3315, %v3314
      %v3360 = vpack.c.bf16 %v3317, %v3316
      %v3361 = vpack.c.bf16 %v3319, %v3318
      %v3362 = vpack.c.bf16 %v3321, %v3320
      %v3363 = vpack.c.bf16 %v3322, %v3322
      %v3364 = vld [vmem:[%s329 + $0x180] sm:$0xf]
      %v3365 = vld [vmem:[%s329 + $0x184] sm:$0xf]
      %v3366 = vld [vmem:[%s329 + $0x188] sm:$0xf]
      %v3367 = vld [vmem:[%s329 + $0x18c] sm:$0xf]
      %v3368 = vld [vmem:[%s329 + $0x190] sm:$0xf]
      %v3369 = vld [vmem:[%s329 + $0x194] sm:$0xf]
      %v3370 = vld [vmem:[%s329 + $0x198] sm:$0xf]
      %v3371 = vld [vmem:[%s329 + $0x19c] sm:$0xf]
      %v3372 = vld [vmem:[%s329 + $0x1a0] sm:$0xf]
      %v3373 = vld [vmem:[%s329 + $0x1a4] sm:$0xf]
      %v3374 = vld [vmem:[%s329 + $0x1a8] sm:$0xf]
      %v3375 = vld [vmem:[%s329 + $0x1ac] sm:$0xf]
      %v3376 = vld [vmem:[%s329 + $0x1b0] sm:$0xf]
      %v3377 = vld [vmem:[%s329 + $0x1b4] sm:$0xf]
      %v3378 = vld [vmem:[%s329 + $0x1b8] sm:$0xf]
      %v3379 = vld [vmem:[%s329 + $0x1bc] sm:$0xf]
      %v3396 = vunpack.c.l.b16 %v3364
      %v3397 = vunpack.c.l.b16 %v3365
      %v3398 = vunpack.c.l.b16 %v3366
      %v3399 = vunpack.c.l.b16 %v3367
      %v3400 = vunpack.c.l.b16 %v3368
      %v3401 = vunpack.c.l.b16 %v3369
      %v3402 = vunpack.c.l.b16 %v3370
      %v3403 = vunpack.c.l.b16 %v3371
      %v3404 = vunpack.c.l.b16 %v3372
      %v3405 = vunpack.c.l.b16 %v3373
      %v3406 = vunpack.c.l.b16 %v3374
      %v3407 = vunpack.c.l.b16 %v3375
      %v3408 = vunpack.c.l.b16 %v3376
      %v3409 = vunpack.c.l.b16 %v3377
      %v3410 = vunpack.c.l.b16 %v3378
      %v3411 = vunpack.c.l.b16 %v3379
      %v3412 = vpack.c.b16 %v3397, %v3396
      %v3413 = vpack.c.b16 %v3399, %v3398
      %v3414 = vpack.c.b16 %v3401, %v3400
      %v3415 = vpack.c.b16 %v3403, %v3402
      %v3416 = vpack.c.b16 %v3405, %v3404
      %v3417 = vpack.c.b16 %v3407, %v3406
      %v3418 = vpack.c.b16 %v3409, %v3408
      %v3419 = vpack.c.b16 %v3411, %v3410
      %3428 = vmatpush.bf16.msra.mxu0 %v3419
      %3429 = vmatpush.bf16.msra.mxu0 %v3418
      %3430 = vmatpush.bf16.msra.mxu0 %v3417
      %3431 = vmatpush.bf16.msra.mxu0 %v3416
      %3432 = vmatpush.bf16.msra.mxu0 %v3415
      %3433 = vmatpush.bf16.msra.mxu0 %v3414
      %3434 = vmatpush.bf16.msra.mxu0 %v3413
      %3435 = vmatpush.bf16.msra.mxu0 %v3412
      %3436 = vmatmul.bf16.gmra.mxu0 %v3323
      %v3437 = vpop.f32.mrf.mxu0
      %v3438 = vadd.f32 0.0, %v3437
      %v3439 = vpop.f32.mrf.mxu0
      %v3440 = vadd.f32 0.0, %v3439
      %3441 = vmatmul.bf16.gmra.mxu0 %v3324
      %v3442 = vpop.f32.mrf.mxu0
      %v3443 = vadd.f32 0.0, %v3442
      %v3444 = vpop.f32.mrf.mxu0
      %v3445 = vadd.f32 0.0, %v3444
      %3446 = vmatmul.bf16.gmra.mxu0 %v3325
      %v3447 = vpop.f32.mrf.mxu0
      %v3448 = vadd.f32 0.0, %v3447
      %v3449 = vpop.f32.mrf.mxu0
      %v3450 = vadd.f32 0.0, %v3449
      %3451 = vmatmul.bf16.gmra.mxu0 %v3326
      %v3452 = vpop.f32.mrf.mxu0
      %v3453 = vadd.f32 0.0, %v3452
      %v3454 = vpop.f32.mrf.mxu0
      %v3455 = vadd.f32 0.0, %v3454
      %3456 = vmatmul.bf16.gmra.mxu0 %v3327
      %v3457 = vpop.f32.mrf.mxu0
      %v3458 = vadd.f32 0.0, %v3457
      %v3459 = vpop.f32.mrf.mxu0
      %v3460 = vadd.f32 0.0, %v3459
      %3461 = vmatmul.bf16.gmra.mxu0 %v3328
      %v3462 = vpop.f32.mrf.mxu0
      %v3463 = vadd.f32 0.0, %v3462
      %v3464 = vpop.f32.mrf.mxu0
      %v3465 = vadd.f32 0.0, %v3464
      %3466 = vmatmul.bf16.gmra.mxu0 %v3329
      %v3467 = vpop.f32.mrf.mxu0
      %v3468 = vadd.f32 0.0, %v3467
      %v3469 = vpop.f32.mrf.mxu0
      %v3470 = vadd.f32 0.0, %v3469
      %3471 = vmatmul.bf16.gmra.mxu0 %v3330
      %v3472 = vpop.f32.mrf.mxu0
      %v3473 = vadd.f32 0.0, %v3472
      %v3474 = vpop.f32.mrf.mxu0
      %v3475 = vadd.f32 0.0, %v3474
      %3476 = vmatmul.bf16.gmra.mxu0 %v3331
      %v3477 = vpop.f32.mrf.mxu0
      %v3478 = vadd.f32 0.0, %v3477
      %v3479 = vpop.f32.mrf.mxu0
      %v3480 = vadd.f32 0.0, %v3479
      %3481 = vmatmul.bf16.gmra.mxu0 %v3332
      %v3482 = vpop.f32.mrf.mxu0
      %v3483 = vadd.f32 0.0, %v3482
      %v3484 = vpop.f32.mrf.mxu0
      %v3485 = vadd.f32 0.0, %v3484
      %3486 = vmatmul.bf16.gmra.mxu0 %v3333
      %v3487 = vpop.f32.mrf.mxu0
      %v3488 = vadd.f32 0.0, %v3487
      %v3489 = vpop.f32.mrf.mxu0
      %v3490 = vadd.f32 0.0, %v3489
      %3491 = vmatmul.bf16.gmra.mxu0 %v3334
      %v3492 = vpop.f32.mrf.mxu0
      %v3493 = vadd.f32 0.0, %v3492
      %v3494 = vpop.f32.mrf.mxu0
      %v3495 = vadd.f32 0.0, %v3494
      %3496 = vmatmul.bf16.gmra.mxu0 %v3335
      %v3497 = vpop.f32.mrf.mxu0
      %v3498 = vadd.f32 0.0, %v3497
      %v3499 = vpop.f32.mrf.mxu0
      %v3500 = vadd.f32 0.0, %v3499
      %3501 = vmatmul.bf16.gmra.mxu0 %v3336
      %v3502 = vpop.f32.mrf.mxu0
      %v3503 = vadd.f32 0.0, %v3502
      %v3504 = vpop.f32.mrf.mxu0
      %v3505 = vadd.f32 0.0, %v3504
      %3506 = vmatmul.bf16.gmra.mxu0 %v3337
      %v3507 = vpop.f32.mrf.mxu0
      %v3508 = vadd.f32 0.0, %v3507
      %v3509 = vpop.f32.mrf.mxu0
      %v3510 = vadd.f32 0.0, %v3509
      %3511 = vmatmul.bf16.gmra.mxu0 %v3338
      %v3512 = vpop.f32.mrf.mxu0
      %v3513 = vadd.f32 0.0, %v3512
      %v3514 = vpop.f32.mrf.mxu0
      %v3515 = vadd.f32 0.0, %v3514
      %3516 = vmatmul.bf16.gmra.mxu0 %v3339
      %v3517 = vpop.f32.mrf.mxu0
      %v3518 = vadd.f32 0.0, %v3517
      %v3519 = vpop.f32.mrf.mxu0
      %v3520 = vadd.f32 0.0, %v3519
      %3521 = vmatmul.bf16.gmra.mxu0 %v3340
      %v3522 = vpop.f32.mrf.mxu0
      %v3523 = vadd.f32 0.0, %v3522
      %v3524 = vpop.f32.mrf.mxu0
      %v3525 = vadd.f32 0.0, %v3524
      %3526 = vmatmul.bf16.gmra.mxu0 %v3341
      %v3527 = vpop.f32.mrf.mxu0
      %v3528 = vadd.f32 0.0, %v3527
      %v3529 = vpop.f32.mrf.mxu0
      %v3530 = vadd.f32 0.0, %v3529
      %3531 = vmatmul.bf16.gmra.mxu0 %v3342
      %v3532 = vpop.f32.mrf.mxu0
      %v3533 = vadd.f32 0.0, %v3532
      %v3534 = vpop.f32.mrf.mxu0
      %v3535 = vadd.f32 0.0, %v3534
      %3536 = vmatmul.bf16.gmra.mxu0 %v3343
      %v3537 = vpop.f32.mrf.mxu0
      %v3538 = vadd.f32 0.0, %v3537
      %v3539 = vpop.f32.mrf.mxu0
      %v3540 = vadd.f32 0.0, %v3539
      %3541 = vmatmul.bf16.gmra.mxu0 %v3344
      %v3542 = vpop.f32.mrf.mxu0
      %v3543 = vadd.f32 0.0, %v3542
      %v3544 = vpop.f32.mrf.mxu0
      %v3545 = vadd.f32 0.0, %v3544
      %3546 = vmatmul.bf16.gmra.mxu0 %v3345
      %v3547 = vpop.f32.mrf.mxu0
      %v3548 = vadd.f32 0.0, %v3547
      %v3549 = vpop.f32.mrf.mxu0
      %v3550 = vadd.f32 0.0, %v3549
      %3551 = vmatmul.bf16.gmra.mxu0 %v3346
      %v3552 = vpop.f32.mrf.mxu0
      %v3553 = vadd.f32 0.0, %v3552
      %v3554 = vpop.f32.mrf.mxu0
      %v3555 = vadd.f32 0.0, %v3554
      %3556 = vmatmul.bf16.gmra.mxu0 %v3347
      %v3557 = vpop.f32.mrf.mxu0
      %v3558 = vadd.f32 0.0, %v3557
      %v3559 = vpop.f32.mrf.mxu0
      %v3560 = vadd.f32 0.0, %v3559
      %3561 = vmatmul.bf16.gmra.mxu0 %v3348
      %v3562 = vpop.f32.mrf.mxu0
      %v3563 = vadd.f32 0.0, %v3562
      %v3564 = vpop.f32.mrf.mxu0
      %v3565 = vadd.f32 0.0, %v3564
      %3566 = vmatmul.bf16.gmra.mxu0 %v3349
      %v3567 = vpop.f32.mrf.mxu0
      %v3568 = vadd.f32 0.0, %v3567
      %v3569 = vpop.f32.mrf.mxu0
      %v3570 = vadd.f32 0.0, %v3569
      %3571 = vmatmul.bf16.gmra.mxu0 %v3350
      %v3572 = vpop.f32.mrf.mxu0
      %v3573 = vadd.f32 0.0, %v3572
      %v3574 = vpop.f32.mrf.mxu0
      %v3575 = vadd.f32 0.0, %v3574
      %3576 = vmatmul.bf16.gmra.mxu0 %v3351
      %v3577 = vpop.f32.mrf.mxu0
      %v3578 = vadd.f32 0.0, %v3577
      %v3579 = vpop.f32.mrf.mxu0
      %v3580 = vadd.f32 0.0, %v3579
      %3581 = vmatmul.bf16.gmra.mxu0 %v3352
      %v3582 = vpop.f32.mrf.mxu0
      %v3583 = vadd.f32 0.0, %v3582
      %v3584 = vpop.f32.mrf.mxu0
      %v3585 = vadd.f32 0.0, %v3584
      %3586 = vmatmul.bf16.gmra.mxu0 %v3353
      %v3587 = vpop.f32.mrf.mxu0
      %v3588 = vadd.f32 0.0, %v3587
      %v3589 = vpop.f32.mrf.mxu0
      %v3590 = vadd.f32 0.0, %v3589
      %3591 = vmatmul.bf16.gmra.mxu0 %v3354
      %v3592 = vpop.f32.mrf.mxu0
      %v3593 = vadd.f32 0.0, %v3592
      %v3594 = vpop.f32.mrf.mxu0
      %v3595 = vadd.f32 0.0, %v3594
      %3596 = vmatmul.bf16.gmra.mxu0 %v3355
      %v3597 = vpop.f32.mrf.mxu0
      %v3598 = vadd.f32 0.0, %v3597
      %v3599 = vpop.f32.mrf.mxu0
      %v3600 = vadd.f32 0.0, %v3599
      %3601 = vmatmul.bf16.gmra.mxu0 %v3356
      %v3602 = vpop.f32.mrf.mxu0
      %v3603 = vadd.f32 0.0, %v3602
      %v3604 = vpop.f32.mrf.mxu0
      %v3605 = vadd.f32 0.0, %v3604
      %3606 = vmatmul.bf16.gmra.mxu0 %v3357
      %v3607 = vpop.f32.mrf.mxu0
      %v3608 = vadd.f32 0.0, %v3607
      %v3609 = vpop.f32.mrf.mxu0
      %v3610 = vadd.f32 0.0, %v3609
      %3611 = vmatmul.bf16.gmra.mxu0 %v3358
      %v3612 = vpop.f32.mrf.mxu0
      %v3613 = vadd.f32 0.0, %v3612
      %v3614 = vpop.f32.mrf.mxu0
      %v3615 = vadd.f32 0.0, %v3614
      %3616 = vmatmul.bf16.gmra.mxu0 %v3359
      %v3617 = vpop.f32.mrf.mxu0
      %v3618 = vadd.f32 0.0, %v3617
      %v3619 = vpop.f32.mrf.mxu0
      %v3620 = vadd.f32 0.0, %v3619
      %3621 = vmatmul.bf16.gmra.mxu0 %v3360
      %v3622 = vpop.f32.mrf.mxu0
      %v3623 = vadd.f32 0.0, %v3622
      %v3624 = vpop.f32.mrf.mxu0
      %v3625 = vadd.f32 0.0, %v3624
      %3626 = vmatmul.bf16.gmra.mxu0 %v3361
      %v3627 = vpop.f32.mrf.mxu0
      %v3628 = vadd.f32 0.0, %v3627
      %v3629 = vpop.f32.mrf.mxu0
      %v3630 = vadd.f32 0.0, %v3629
      %3631 = vmatmul.bf16.gmra.mxu0 %v3362
      %v3632 = vpop.f32.mrf.mxu0
      %v3633 = vadd.f32 0.0, %v3632
      %v3634 = vpop.f32.mrf.mxu0
      %v3635 = vadd.f32 0.0, %v3634
      %3636 = vmatmul.bf16.gmra.mxu0 %v3363
      %v3637 = vpop.f32.mrf.mxu0
      %v3638 = vadd.f32 0.0, %v3637
      %v3639 = vpop.f32.mrf.mxu0
      %3640 = vdwg.mxu0
      %v3641 = vadd.f32 %v3161, %v3438
      %v3642 = vadd.f32 %v3162, %v3440
      %v3643 = vadd.f32 %v3163, %v3443
      %v3644 = vadd.f32 %v3164, %v3445
      %v3645 = vadd.f32 %v3165, %v3448
      %v3646 = vadd.f32 %v3166, %v3450
      %v3647 = vadd.f32 %v3167, %v3453
      %v3648 = vadd.f32 %v3168, %v3455
      %v3649 = vadd.f32 %v3169, %v3458
      %v3650 = vadd.f32 %v3170, %v3460
      %v3651 = vadd.f32 %v3171, %v3463
      %v3652 = vadd.f32 %v3172, %v3465
      %v3653 = vadd.f32 %v3173, %v3468
      %v3654 = vadd.f32 %v3174, %v3470
      %v3655 = vadd.f32 %v3175, %v3473
      %v3656 = vadd.f32 %v3176, %v3475
      %v3657 = vadd.f32 %v3177, %v3478
      %v3658 = vadd.f32 %v3178, %v3480
      %v3659 = vadd.f32 %v3179, %v3483
      %v3660 = vadd.f32 %v3180, %v3485
      %v3661 = vadd.f32 %v3181, %v3488
      %v3662 = vadd.f32 %v3182, %v3490
      %v3663 = vadd.f32 %v3183, %v3493
      %v3664 = vadd.f32 %v3184, %v3495
      %v3665 = vadd.f32 %v3185, %v3498
      %v3666 = vadd.f32 %v3186, %v3500
      %v3667 = vadd.f32 %v3187, %v3503
      %v3668 = vadd.f32 %v3188, %v3505
      %v3669 = vadd.f32 %v3189, %v3508
      %v3670 = vadd.f32 %v3190, %v3510
      %v3671 = vadd.f32 %v3191, %v3513
      %v3672 = vadd.f32 %v3192, %v3515
      %v3673 = vadd.f32 %v3193, %v3518
      %v3674 = vadd.f32 %v3194, %v3520
      %v3675 = vadd.f32 %v3195, %v3523
      %v3676 = vadd.f32 %v3196, %v3525
      %v3677 = vadd.f32 %v3197, %v3528
      %v3678 = vadd.f32 %v3198, %v3530
      %v3679 = vadd.f32 %v3199, %v3533
      %v3680 = vadd.f32 %v3200, %v3535
      %v3681 = vadd.f32 %v3201, %v3538
      %v3682 = vadd.f32 %v3202, %v3540
      %v3683 = vadd.f32 %v3203, %v3543
      %v3684 = vadd.f32 %v3204, %v3545
      %v3685 = vadd.f32 %v3205, %v3548
      %v3686 = vadd.f32 %v3206, %v3550
      %v3687 = vadd.f32 %v3207, %v3553
      %v3688 = vadd.f32 %v3208, %v3555
      %v3689 = vadd.f32 %v3209, %v3558
      %v3690 = vadd.f32 %v3210, %v3560
      %v3691 = vadd.f32 %v3211, %v3563
      %v3692 = vadd.f32 %v3212, %v3565
      %v3693 = vadd.f32 %v3213, %v3568
      %v3694 = vadd.f32 %v3214, %v3570
      %v3695 = vadd.f32 %v3215, %v3573
      %v3696 = vadd.f32 %v3216, %v3575
      %v3697 = vadd.f32 %v3217, %v3578
      %v3698 = vadd.f32 %v3218, %v3580
      %v3699 = vadd.f32 %v3219, %v3583
      %v3700 = vadd.f32 %v3220, %v3585
      %v3701 = vadd.f32 %v3221, %v3588
      %v3702 = vadd.f32 %v3222, %v3590
      %v3703 = vadd.f32 %v3223, %v3593
      %v3704 = vadd.f32 %v3224, %v3595
      %v3705 = vadd.f32 %v3225, %v3598
      %v3706 = vadd.f32 %v3226, %v3600
      %v3707 = vadd.f32 %v3227, %v3603
      %v3708 = vadd.f32 %v3228, %v3605
      %v3709 = vadd.f32 %v3229, %v3608
      %v3710 = vadd.f32 %v3230, %v3610
      %v3711 = vadd.f32 %v3231, %v3613
      %v3712 = vadd.f32 %v3232, %v3615
      %v3713 = vadd.f32 %v3233, %v3618
      %v3714 = vadd.f32 %v3234, %v3620
      %v3715 = vadd.f32 %v3235, %v3623
      %v3716 = vadd.f32 %v3236, %v3625
      %v3717 = vadd.f32 %v3237, %v3628
      %v3718 = vadd.f32 %v3238, %v3630
      %v3719 = vadd.f32 %v3239, %v3633
      %v3720 = vadd.f32 %v3240, %v3635
      %v3721 = vadd.f32 %v3241, %v3638
      %v3722 = vld [vmem:[%s523 + $0x2a] sm:$0xff]
      %v3723 = vld [vmem:[%s523 + $0x32] sm:$0xff]
      %v3724 = vld [vmem:[%s523 + $0x3a] sm:$0xff]
      %v3725 = vld [vmem:[%s523 + $0x42] sm:$0xff]
      %v3726 = vld [vmem:[%s523 + $0x4a] sm:$0xff]
      %v3727 = vld [vmem:[%s523 + $0x52] sm:$0xff]
      %v3728 = vld [vmem:[%s523 + $0x5a] sm:$0xff]
      %v3729 = vld [vmem:[%s523 + $0x62] sm:$0xff]
      %v3730 = vld [vmem:[%s523 + $0x6a] sm:$0xff]
      %v3731 = vld [vmem:[%s523 + $0x72] sm:$0xff]
      %v3732 = vld [vmem:[%s523 + $0x7a] sm:$0xff]
      %v3733 = vld [vmem:[%s523 + $0x82] sm:$0xff]
      %v3734 = vld [vmem:[%s523 + $0x8a] sm:$0xff]
      %v3735 = vld [vmem:[%s523 + $0x92] sm:$0xff]
      %v3736 = vld [vmem:[%s523 + $0x9a] sm:$0xff]
      %v3737 = vld [vmem:[%s523 + $0xa2] sm:$0xff]
      %v3738 = vld [vmem:[%s523 + $0xaa] sm:$0xff]
      %v3739 = vld [vmem:[%s523 + $0xb2] sm:$0xff]
      %v3740 = vld [vmem:[%s523 + $0xba] sm:$0xff]
      %v3741 = vld [vmem:[%s523 + $0xc2] sm:$0xff]
      %v3742 = vld [vmem:[%s523 + $0xca] sm:$0xff]
      %v3743 = vld [vmem:[%s523 + $0xd2] sm:$0xff]
      %v3744 = vld [vmem:[%s523 + $0xda] sm:$0xff]
      %v3745 = vld [vmem:[%s523 + $0xe2] sm:$0xff]
      %v3746 = vld [vmem:[%s523 + $0xea] sm:$0xff]
      %v3747 = vld [vmem:[%s523 + $0xf2] sm:$0xff]
      %v3748 = vld [vmem:[%s523 + $0xfa] sm:$0xff]
      %v3749 = vld [vmem:[%s523 + $0x102] sm:$0xff]
      %v3750 = vld [vmem:[%s523 + $0x10a] sm:$0xff]
      %v3751 = vld [vmem:[%s523 + $0x112] sm:$0xff]
      %v3752 = vld [vmem:[%s523 + $0x11a] sm:$0xff]
      %v3753 = vld [vmem:[%s523 + $0x122] sm:$0xff]
      %v3754 = vld [vmem:[%s523 + $0x12a] sm:$0xff]
      %v3755 = vld [vmem:[%s523 + $0x132] sm:$0xff]
      %v3756 = vld [vmem:[%s523 + $0x13a] sm:$0xff]
      %v3757 = vld [vmem:[%s523 + $0x142] sm:$0xff]
      %v3758 = vld [vmem:[%s523 + $0x14a] sm:$0xff]
      %v3759 = vld [vmem:[%s523 + $0x152] sm:$0xff]
      %v3760 = vld [vmem:[%s523 + $0x15a] sm:$0xff]
      %v3761 = vld [vmem:[%s523 + $0x162] sm:$0xff]
      %v3762 = vld [vmem:[%s523 + $0x16a] sm:$0xff]
      %v3763 = vld [vmem:[%s523 + $0x172] sm:$0xff]
      %v3764 = vld [vmem:[%s523 + $0x17a] sm:$0xff]
      %v3765 = vld [vmem:[%s523 + $0x182] sm:$0xff]
      %v3766 = vld [vmem:[%s523 + $0x18a] sm:$0xff]
      %v3767 = vld [vmem:[%s523 + $0x192] sm:$0xff]
      %v3768 = vld [vmem:[%s523 + $0x19a] sm:$0xff]
      %v3769 = vld [vmem:[%s523 + $0x1a2] sm:$0xff]
      %v3770 = vld [vmem:[%s523 + $0x1aa] sm:$0xff]
      %v3771 = vld [vmem:[%s523 + $0x1b2] sm:$0xff]
      %v3772 = vld [vmem:[%s523 + $0x1ba] sm:$0xff]
      %v3773 = vld [vmem:[%s523 + $0x1c2] sm:$0xff]
      %v3774 = vld [vmem:[%s523 + $0x1ca] sm:$0xff]
      %v3775 = vld [vmem:[%s523 + $0x1d2] sm:$0xff]
      %v3776 = vld [vmem:[%s523 + $0x1da] sm:$0xff]
      %v3777 = vld [vmem:[%s523 + $0x1e2] sm:$0xff]
      %v3778 = vld [vmem:[%s523 + $0x1ea] sm:$0xff]
      %v3779 = vld [vmem:[%s523 + $0x1f2] sm:$0xff]
      %v3780 = vld [vmem:[%s523 + $0x1fa] sm:$0xff]
      %v3781 = vld [vmem:[%s523 + $0x202] sm:$0xff]
      %v3782 = vld [vmem:[%s523 + $0x20a] sm:$0xff]
      %v3783 = vld [vmem:[%s523 + $0x212] sm:$0xff]
      %v3784 = vld [vmem:[%s523 + $0x21a] sm:$0xff]
      %v3785 = vld [vmem:[%s523 + $0x222] sm:$0xff]
      %v3786 = vld [vmem:[%s523 + $0x22a] sm:$0xff]
      %v3787 = vld [vmem:[%s523 + $0x232] sm:$0xff]
      %v3788 = vld [vmem:[%s523 + $0x23a] sm:$0xff]
      %v3789 = vld [vmem:[%s523 + $0x242] sm:$0xff]
      %v3790 = vld [vmem:[%s523 + $0x24a] sm:$0xff]
      %v3791 = vld [vmem:[%s523 + $0x252] sm:$0xff]
      %v3792 = vld [vmem:[%s523 + $0x25a] sm:$0xff]
      %v3793 = vld [vmem:[%s523 + $0x262] sm:$0xff]
      %v3794 = vld [vmem:[%s523 + $0x26a] sm:$0xff]
      %v3795 = vld [vmem:[%s523 + $0x272] sm:$0xff]
      %v3796 = vld [vmem:[%s523 + $0x27a] sm:$0xff]
      %v3797 = vld [vmem:[%s523 + $0x282] sm:$0xff]
      %v3798 = vld [vmem:[%s523 + $0x28a] sm:$0xff]
      %v3799 = vld [vmem:[%s523 + $0x292] sm:$0xff]
      %v3800 = vld [vmem:[%s523 + $0x29a] sm:$0xff]
      %v3801 = vld [vmem:[%s523 + $0x2a2] sm:$0xff]
      %v3802 = vld [vmem:[%s523 + $0x2aa] sm:$0xff]
      %v3803 = vpack.c.bf16 %v3723, %v3722
      %v3804 = vpack.c.bf16 %v3725, %v3724
      %v3805 = vpack.c.bf16 %v3727, %v3726
      %v3806 = vpack.c.bf16 %v3729, %v3728
      %v3807 = vpack.c.bf16 %v3731, %v3730
      %v3808 = vpack.c.bf16 %v3733, %v3732
      %v3809 = vpack.c.bf16 %v3735, %v3734
      %v3810 = vpack.c.bf16 %v3737, %v3736
      %v3811 = vpack.c.bf16 %v3739, %v3738
      %v3812 = vpack.c.bf16 %v3741, %v3740
      %v3813 = vpack.c.bf16 %v3743, %v3742
      %v3814 = vpack.c.bf16 %v3745, %v3744
      %v3815 = vpack.c.bf16 %v3747, %v3746
      %v3816 = vpack.c.bf16 %v3749, %v3748
      %v3817 = vpack.c.bf16 %v3751, %v3750
      %v3818 = vpack.c.bf16 %v3753, %v3752
      %v3819 = vpack.c.bf16 %v3755, %v3754
      %v3820 = vpack.c.bf16 %v3757, %v3756
      %v3821 = vpack.c.bf16 %v3759, %v3758
      %v3822 = vpack.c.bf16 %v3761, %v3760
      %v3823 = vpack.c.bf16 %v3763, %v3762
      %v3824 = vpack.c.bf16 %v3765, %v3764
      %v3825 = vpack.c.bf16 %v3767, %v3766
      %v3826 = vpack.c.bf16 %v3769, %v3768
      %v3827 = vpack.c.bf16 %v3771, %v3770
      %v3828 = vpack.c.bf16 %v3773, %v3772
      %v3829 = vpack.c.bf16 %v3775, %v3774
      %v3830 = vpack.c.bf16 %v3777, %v3776
      %v3831 = vpack.c.bf16 %v3779, %v3778
      %v3832 = vpack.c.bf16 %v3781, %v3780
      %v3833 = vpack.c.bf16 %v3783, %v3782
      %v3834 = vpack.c.bf16 %v3785, %v3784
      %v3835 = vpack.c.bf16 %v3787, %v3786
      %v3836 = vpack.c.bf16 %v3789, %v3788
      %v3837 = vpack.c.bf16 %v3791, %v3790
      %v3838 = vpack.c.bf16 %v3793, %v3792
      %v3839 = vpack.c.bf16 %v3795, %v3794
      %v3840 = vpack.c.bf16 %v3797, %v3796
      %v3841 = vpack.c.bf16 %v3799, %v3798
      %v3842 = vpack.c.bf16 %v3801, %v3800
      %v3843 = vpack.c.bf16 %v3802, %v3802
      %v3844 = vld [vmem:[%s329 + $0x1c0] sm:$0xf]
      %v3845 = vld [vmem:[%s329 + $0x1c4] sm:$0xf]
      %v3846 = vld [vmem:[%s329 + $0x1c8] sm:$0xf]
      %v3847 = vld [vmem:[%s329 + $0x1cc] sm:$0xf]
      %v3848 = vld [vmem:[%s329 + $0x1d0] sm:$0xf]
      %v3849 = vld [vmem:[%s329 + $0x1d4] sm:$0xf]
      %v3850 = vld [vmem:[%s329 + $0x1d8] sm:$0xf]
      %v3851 = vld [vmem:[%s329 + $0x1dc] sm:$0xf]
      %v3852 = vld [vmem:[%s329 + $0x1e0] sm:$0xf]
      %v3853 = vld [vmem:[%s329 + $0x1e4] sm:$0xf]
      %v3854 = vld [vmem:[%s329 + $0x1e8] sm:$0xf]
      %v3855 = vld [vmem:[%s329 + $0x1ec] sm:$0xf]
      %v3856 = vld [vmem:[%s329 + $0x1f0] sm:$0xf]
      %v3857 = vld [vmem:[%s329 + $0x1f4] sm:$0xf]
      %v3858 = vld [vmem:[%s329 + $0x1f8] sm:$0xf]
      %v3859 = vld [vmem:[%s329 + $0x1fc] sm:$0xf]
      %v3876 = vunpack.c.l.b16 %v3844
      %v3877 = vunpack.c.l.b16 %v3845
      %v3878 = vunpack.c.l.b16 %v3846
      %v3879 = vunpack.c.l.b16 %v3847
      %v3880 = vunpack.c.l.b16 %v3848
      %v3881 = vunpack.c.l.b16 %v3849
      %v3882 = vunpack.c.l.b16 %v3850
      %v3883 = vunpack.c.l.b16 %v3851
      %v3884 = vunpack.c.l.b16 %v3852
      %v3885 = vunpack.c.l.b16 %v3853
      %v3886 = vunpack.c.l.b16 %v3854
      %v3887 = vunpack.c.l.b16 %v3855
      %v3888 = vunpack.c.l.b16 %v3856
      %v3889 = vunpack.c.l.b16 %v3857
      %v3890 = vunpack.c.l.b16 %v3858
      %v3891 = vunpack.c.l.b16 %v3859
      %v3892 = vpack.c.b16 %v3877, %v3876
      %v3893 = vpack.c.b16 %v3879, %v3878
      %v3894 = vpack.c.b16 %v3881, %v3880
      %v3895 = vpack.c.b16 %v3883, %v3882
      %v3896 = vpack.c.b16 %v3885, %v3884
      %v3897 = vpack.c.b16 %v3887, %v3886
      %v3898 = vpack.c.b16 %v3889, %v3888
      %v3899 = vpack.c.b16 %v3891, %v3890
      %3908 = vmatpush.bf16.msra.mxu0 %v3899
      %3909 = vmatpush.bf16.msra.mxu0 %v3898
      %3910 = vmatpush.bf16.msra.mxu0 %v3897
      %3911 = vmatpush.bf16.msra.mxu0 %v3896
      %3912 = vmatpush.bf16.msra.mxu0 %v3895
      %3913 = vmatpush.bf16.msra.mxu0 %v3894
      %3914 = vmatpush.bf16.msra.mxu0 %v3893
      %3915 = vmatpush.bf16.msra.mxu0 %v3892
      %3916 = vmatmul.bf16.gmra.mxu0 %v3803
      %v3917 = vpop.f32.mrf.mxu0
      %v3918 = vadd.f32 0.0, %v3917
      %v3919 = vpop.f32.mrf.mxu0
      %v3920 = vadd.f32 0.0, %v3919
      %3921 = vmatmul.bf16.gmra.mxu0 %v3804
      %v3922 = vpop.f32.mrf.mxu0
      %v3923 = vadd.f32 0.0, %v3922
      %v3924 = vpop.f32.mrf.mxu0
      %v3925 = vadd.f32 0.0, %v3924
      %3926 = vmatmul.bf16.gmra.mxu0 %v3805
      %v3927 = vpop.f32.mrf.mxu0
      %v3928 = vadd.f32 0.0, %v3927
      %v3929 = vpop.f32.mrf.mxu0
      %v3930 = vadd.f32 0.0, %v3929
      %3931 = vmatmul.bf16.gmra.mxu0 %v3806
      %v3932 = vpop.f32.mrf.mxu0
      %v3933 = vadd.f32 0.0, %v3932
      %v3934 = vpop.f32.mrf.mxu0
      %v3935 = vadd.f32 0.0, %v3934
      %3936 = vmatmul.bf16.gmra.mxu0 %v3807
      %v3937 = vpop.f32.mrf.mxu0
      %v3938 = vadd.f32 0.0, %v3937
      %v3939 = vpop.f32.mrf.mxu0
      %v3940 = vadd.f32 0.0, %v3939
      %3941 = vmatmul.bf16.gmra.mxu0 %v3808
      %v3942 = vpop.f32.mrf.mxu0
      %v3943 = vadd.f32 0.0, %v3942
      %v3944 = vpop.f32.mrf.mxu0
      %v3945 = vadd.f32 0.0, %v3944
      %3946 = vmatmul.bf16.gmra.mxu0 %v3809
      %v3947 = vpop.f32.mrf.mxu0
      %v3948 = vadd.f32 0.0, %v3947
      %v3949 = vpop.f32.mrf.mxu0
      %v3950 = vadd.f32 0.0, %v3949
      %3951 = vmatmul.bf16.gmra.mxu0 %v3810
      %v3952 = vpop.f32.mrf.mxu0
      %v3953 = vadd.f32 0.0, %v3952
      %v3954 = vpop.f32.mrf.mxu0
      %v3955 = vadd.f32 0.0, %v3954
      %3956 = vmatmul.bf16.gmra.mxu0 %v3811
      %v3957 = vpop.f32.mrf.mxu0
      %v3958 = vadd.f32 0.0, %v3957
      %v3959 = vpop.f32.mrf.mxu0
      %v3960 = vadd.f32 0.0, %v3959
      %3961 = vmatmul.bf16.gmra.mxu0 %v3812
      %v3962 = vpop.f32.mrf.mxu0
      %v3963 = vadd.f32 0.0, %v3962
      %v3964 = vpop.f32.mrf.mxu0
      %v3965 = vadd.f32 0.0, %v3964
      %3966 = vmatmul.bf16.gmra.mxu0 %v3813
      %v3967 = vpop.f32.mrf.mxu0
      %v3968 = vadd.f32 0.0, %v3967
      %v3969 = vpop.f32.mrf.mxu0
      %v3970 = vadd.f32 0.0, %v3969
      %3971 = vmatmul.bf16.gmra.mxu0 %v3814
      %v3972 = vpop.f32.mrf.mxu0
      %v3973 = vadd.f32 0.0, %v3972
      %v3974 = vpop.f32.mrf.mxu0
      %v3975 = vadd.f32 0.0, %v3974
      %3976 = vmatmul.bf16.gmra.mxu0 %v3815
      %v3977 = vpop.f32.mrf.mxu0
      %v3978 = vadd.f32 0.0, %v3977
      %v3979 = vpop.f32.mrf.mxu0
      %v3980 = vadd.f32 0.0, %v3979
      %3981 = vmatmul.bf16.gmra.mxu0 %v3816
      %v3982 = vpop.f32.mrf.mxu0
      %v3983 = vadd.f32 0.0, %v3982
      %v3984 = vpop.f32.mrf.mxu0
      %v3985 = vadd.f32 0.0, %v3984
      %3986 = vmatmul.bf16.gmra.mxu0 %v3817
      %v3987 = vpop.f32.mrf.mxu0
      %v3988 = vadd.f32 0.0, %v3987
      %v3989 = vpop.f32.mrf.mxu0
      %v3990 = vadd.f32 0.0, %v3989
      %3991 = vmatmul.bf16.gmra.mxu0 %v3818
      %v3992 = vpop.f32.mrf.mxu0
      %v3993 = vadd.f32 0.0, %v3992
      %v3994 = vpop.f32.mrf.mxu0
      %v3995 = vadd.f32 0.0, %v3994
      %3996 = vmatmul.bf16.gmra.mxu0 %v3819
      %v3997 = vpop.f32.mrf.mxu0
      %v3998 = vadd.f32 0.0, %v3997
      %v3999 = vpop.f32.mrf.mxu0
      %v4000 = vadd.f32 0.0, %v3999
      %4001 = vmatmul.bf16.gmra.mxu0 %v3820
      %v4002 = vpop.f32.mrf.mxu0
      %v4003 = vadd.f32 0.0, %v4002
      %v4004 = vpop.f32.mrf.mxu0
      %v4005 = vadd.f32 0.0, %v4004
      %4006 = vmatmul.bf16.gmra.mxu0 %v3821
      %v4007 = vpop.f32.mrf.mxu0
      %v4008 = vadd.f32 0.0, %v4007
      %v4009 = vpop.f32.mrf.mxu0
      %v4010 = vadd.f32 0.0, %v4009
      %4011 = vmatmul.bf16.gmra.mxu0 %v3822
      %v4012 = vpop.f32.mrf.mxu0
      %v4013 = vadd.f32 0.0, %v4012
      %v4014 = vpop.f32.mrf.mxu0
      %v4015 = vadd.f32 0.0, %v4014
      %4016 = vmatmul.bf16.gmra.mxu0 %v3823
      %v4017 = vpop.f32.mrf.mxu0
      %v4018 = vadd.f32 0.0, %v4017
      %v4019 = vpop.f32.mrf.mxu0
      %v4020 = vadd.f32 0.0, %v4019
      %4021 = vmatmul.bf16.gmra.mxu0 %v3824
      %v4022 = vpop.f32.mrf.mxu0
      %v4023 = vadd.f32 0.0, %v4022
      %v4024 = vpop.f32.mrf.mxu0
      %v4025 = vadd.f32 0.0, %v4024
      %4026 = vmatmul.bf16.gmra.mxu0 %v3825
      %v4027 = vpop.f32.mrf.mxu0
      %v4028 = vadd.f32 0.0, %v4027
      %v4029 = vpop.f32.mrf.mxu0
      %v4030 = vadd.f32 0.0, %v4029
      %4031 = vmatmul.bf16.gmra.mxu0 %v3826
      %v4032 = vpop.f32.mrf.mxu0
      %v4033 = vadd.f32 0.0, %v4032
      %v4034 = vpop.f32.mrf.mxu0
      %v4035 = vadd.f32 0.0, %v4034
      %4036 = vmatmul.bf16.gmra.mxu0 %v3827
      %v4037 = vpop.f32.mrf.mxu0
      %v4038 = vadd.f32 0.0, %v4037
      %v4039 = vpop.f32.mrf.mxu0
      %v4040 = vadd.f32 0.0, %v4039
      %4041 = vmatmul.bf16.gmra.mxu0 %v3828
      %v4042 = vpop.f32.mrf.mxu0
      %v4043 = vadd.f32 0.0, %v4042
      %v4044 = vpop.f32.mrf.mxu0
      %v4045 = vadd.f32 0.0, %v4044
      %4046 = vmatmul.bf16.gmra.mxu0 %v3829
      %v4047 = vpop.f32.mrf.mxu0
      %v4048 = vadd.f32 0.0, %v4047
      %v4049 = vpop.f32.mrf.mxu0
      %v4050 = vadd.f32 0.0, %v4049
      %4051 = vmatmul.bf16.gmra.mxu0 %v3830
      %v4052 = vpop.f32.mrf.mxu0
      %v4053 = vadd.f32 0.0, %v4052
      %v4054 = vpop.f32.mrf.mxu0
      %v4055 = vadd.f32 0.0, %v4054
      %4056 = vmatmul.bf16.gmra.mxu0 %v3831
      %v4057 = vpop.f32.mrf.mxu0
      %v4058 = vadd.f32 0.0, %v4057
      %v4059 = vpop.f32.mrf.mxu0
      %v4060 = vadd.f32 0.0, %v4059
      %4061 = vmatmul.bf16.gmra.mxu0 %v3832
      %v4062 = vpop.f32.mrf.mxu0
      %v4063 = vadd.f32 0.0, %v4062
      %v4064 = vpop.f32.mrf.mxu0
      %v4065 = vadd.f32 0.0, %v4064
      %4066 = vmatmul.bf16.gmra.mxu0 %v3833
      %v4067 = vpop.f32.mrf.mxu0
      %v4068 = vadd.f32 0.0, %v4067
      %v4069 = vpop.f32.mrf.mxu0
      %v4070 = vadd.f32 0.0, %v4069
      %4071 = vmatmul.bf16.gmra.mxu0 %v3834
      %v4072 = vpop.f32.mrf.mxu0
      %v4073 = vadd.f32 0.0, %v4072
      %v4074 = vpop.f32.mrf.mxu0
      %v4075 = vadd.f32 0.0, %v4074
      %4076 = vmatmul.bf16.gmra.mxu0 %v3835
      %v4077 = vpop.f32.mrf.mxu0
      %v4078 = vadd.f32 0.0, %v4077
      %v4079 = vpop.f32.mrf.mxu0
      %v4080 = vadd.f32 0.0, %v4079
      %4081 = vmatmul.bf16.gmra.mxu0 %v3836
      %v4082 = vpop.f32.mrf.mxu0
      %v4083 = vadd.f32 0.0, %v4082
      %v4084 = vpop.f32.mrf.mxu0
      %v4085 = vadd.f32 0.0, %v4084
      %4086 = vmatmul.bf16.gmra.mxu0 %v3837
      %v4087 = vpop.f32.mrf.mxu0
      %v4088 = vadd.f32 0.0, %v4087
      %v4089 = vpop.f32.mrf.mxu0
      %v4090 = vadd.f32 0.0, %v4089
      %4091 = vmatmul.bf16.gmra.mxu0 %v3838
      %v4092 = vpop.f32.mrf.mxu0
      %v4093 = vadd.f32 0.0, %v4092
      %v4094 = vpop.f32.mrf.mxu0
      %v4095 = vadd.f32 0.0, %v4094
      %4096 = vmatmul.bf16.gmra.mxu0 %v3839
      %v4097 = vpop.f32.mrf.mxu0
      %v4098 = vadd.f32 0.0, %v4097
      %v4099 = vpop.f32.mrf.mxu0
      %v4100 = vadd.f32 0.0, %v4099
      %4101 = vmatmul.bf16.gmra.mxu0 %v3840
      %v4102 = vpop.f32.mrf.mxu0
      %v4103 = vadd.f32 0.0, %v4102
      %v4104 = vpop.f32.mrf.mxu0
      %v4105 = vadd.f32 0.0, %v4104
      %4106 = vmatmul.bf16.gmra.mxu0 %v3841
      %v4107 = vpop.f32.mrf.mxu0
      %v4108 = vadd.f32 0.0, %v4107
      %v4109 = vpop.f32.mrf.mxu0
      %v4110 = vadd.f32 0.0, %v4109
      %4111 = vmatmul.bf16.gmra.mxu0 %v3842
      %v4112 = vpop.f32.mrf.mxu0
      %v4113 = vadd.f32 0.0, %v4112
      %v4114 = vpop.f32.mrf.mxu0
      %v4115 = vadd.f32 0.0, %v4114
      %4116 = vmatmul.bf16.gmra.mxu0 %v3843
      %v4117 = vpop.f32.mrf.mxu0
      %v4118 = vadd.f32 0.0, %v4117
      %v4119 = vpop.f32.mrf.mxu0
      %4120 = vdwg.mxu0
      %v4121 = vadd.f32 %v3641, %v3918
      %v4122 = vadd.f32 %v3642, %v3920
      %v4123 = vadd.f32 %v3643, %v3923
      %v4124 = vadd.f32 %v3644, %v3925
      %v4125 = vadd.f32 %v3645, %v3928
      %v4126 = vadd.f32 %v3646, %v3930
      %v4127 = vadd.f32 %v3647, %v3933
      %v4128 = vadd.f32 %v3648, %v3935
      %v4129 = vadd.f32 %v3649, %v3938
      %v4130 = vadd.f32 %v3650, %v3940
      %v4131 = vadd.f32 %v3651, %v3943
      %v4132 = vadd.f32 %v3652, %v3945
      %v4133 = vadd.f32 %v3653, %v3948
      %v4134 = vadd.f32 %v3654, %v3950
      %v4135 = vadd.f32 %v3655, %v3953
      %v4136 = vadd.f32 %v3656, %v3955
      %v4137 = vadd.f32 %v3657, %v3958
      %v4138 = vadd.f32 %v3658, %v3960
      %v4139 = vadd.f32 %v3659, %v3963
      %v4140 = vadd.f32 %v3660, %v3965
      %v4141 = vadd.f32 %v3661, %v3968
      %v4142 = vadd.f32 %v3662, %v3970
      %v4143 = vadd.f32 %v3663, %v3973
      %v4144 = vadd.f32 %v3664, %v3975
      %v4145 = vadd.f32 %v3665, %v3978
      %v4146 = vadd.f32 %v3666, %v3980
      %v4147 = vadd.f32 %v3667, %v3983
      %v4148 = vadd.f32 %v3668, %v3985
      %v4149 = vadd.f32 %v3669, %v3988
      %v4150 = vadd.f32 %v3670, %v3990
      %v4151 = vadd.f32 %v3671, %v3993
      %v4152 = vadd.f32 %v3672, %v3995
      %v4153 = vadd.f32 %v3673, %v3998
      %v4154 = vadd.f32 %v3674, %v4000
      %v4155 = vadd.f32 %v3675, %v4003
      %v4156 = vadd.f32 %v3676, %v4005
      %v4157 = vadd.f32 %v3677, %v4008
      %v4158 = vadd.f32 %v3678, %v4010
      %v4159 = vadd.f32 %v3679, %v4013
      %v4160 = vadd.f32 %v3680, %v4015
      %v4161 = vadd.f32 %v3681, %v4018
      %v4162 = vadd.f32 %v3682, %v4020
      %v4163 = vadd.f32 %v3683, %v4023
      %v4164 = vadd.f32 %v3684, %v4025
      %v4165 = vadd.f32 %v3685, %v4028
      %v4166 = vadd.f32 %v3686, %v4030
      %v4167 = vadd.f32 %v3687, %v4033
      %v4168 = vadd.f32 %v3688, %v4035
      %v4169 = vadd.f32 %v3689, %v4038
      %v4170 = vadd.f32 %v3690, %v4040
      %v4171 = vadd.f32 %v3691, %v4043
      %v4172 = vadd.f32 %v3692, %v4045
      %v4173 = vadd.f32 %v3693, %v4048
      %v4174 = vadd.f32 %v3694, %v4050
      %v4175 = vadd.f32 %v3695, %v4053
      %v4176 = vadd.f32 %v3696, %v4055
      %v4177 = vadd.f32 %v3697, %v4058
      %v4178 = vadd.f32 %v3698, %v4060
      %v4179 = vadd.f32 %v3699, %v4063
      %v4180 = vadd.f32 %v3700, %v4065
      %v4181 = vadd.f32 %v3701, %v4068
      %v4182 = vadd.f32 %v3702, %v4070
      %v4183 = vadd.f32 %v3703, %v4073
      %v4184 = vadd.f32 %v3704, %v4075
      %v4185 = vadd.f32 %v3705, %v4078
      %v4186 = vadd.f32 %v3706, %v4080
      %v4187 = vadd.f32 %v3707, %v4083
      %v4188 = vadd.f32 %v3708, %v4085
      %v4189 = vadd.f32 %v3709, %v4088
      %v4190 = vadd.f32 %v3710, %v4090
      %v4191 = vadd.f32 %v3711, %v4093
      %v4192 = vadd.f32 %v3712, %v4095
      %v4193 = vadd.f32 %v3713, %v4098
      %v4194 = vadd.f32 %v3714, %v4100
      %v4195 = vadd.f32 %v3715, %v4103
      %v4196 = vadd.f32 %v3716, %v4105
      %v4197 = vadd.f32 %v3717, %v4108
      %v4198 = vadd.f32 %v3718, %v4110
      %v4199 = vadd.f32 %v3719, %v4113
      %v4200 = vadd.f32 %v3720, %v4115
      %v4201 = vadd.f32 %v3721, %v4118
      %v4202 = vld [vmem:[%s523 + $0x2b] sm:$0xff]
      %v4203 = vld [vmem:[%s523 + $0x33] sm:$0xff]
      %v4204 = vld [vmem:[%s523 + $0x3b] sm:$0xff]
      %v4205 = vld [vmem:[%s523 + $0x43] sm:$0xff]
      %v4206 = vld [vmem:[%s523 + $0x4b] sm:$0xff]
      %v4207 = vld [vmem:[%s523 + $0x53] sm:$0xff]
      %v4208 = vld [vmem:[%s523 + $0x5b] sm:$0xff]
      %v4209 = vld [vmem:[%s523 + $0x63] sm:$0xff]
      %v4210 = vld [vmem:[%s523 + $0x6b] sm:$0xff]
      %v4211 = vld [vmem:[%s523 + $0x73] sm:$0xff]
      %v4212 = vld [vmem:[%s523 + $0x7b] sm:$0xff]
      %v4213 = vld [vmem:[%s523 + $0x83] sm:$0xff]
      %v4214 = vld [vmem:[%s523 + $0x8b] sm:$0xff]
      %v4215 = vld [vmem:[%s523 + $0x93] sm:$0xff]
      %v4216 = vld [vmem:[%s523 + $0x9b] sm:$0xff]
      %v4217 = vld [vmem:[%s523 + $0xa3] sm:$0xff]
      %v4218 = vld [vmem:[%s523 + $0xab] sm:$0xff]
      %v4219 = vld [vmem:[%s523 + $0xb3] sm:$0xff]
      %v4220 = vld [vmem:[%s523 + $0xbb] sm:$0xff]
      %v4221 = vld [vmem:[%s523 + $0xc3] sm:$0xff]
      %v4222 = vld [vmem:[%s523 + $0xcb] sm:$0xff]
      %v4223 = vld [vmem:[%s523 + $0xd3] sm:$0xff]
      %v4224 = vld [vmem:[%s523 + $0xdb] sm:$0xff]
      %v4225 = vld [vmem:[%s523 + $0xe3] sm:$0xff]
      %v4226 = vld [vmem:[%s523 + $0xeb] sm:$0xff]
      %v4227 = vld [vmem:[%s523 + $0xf3] sm:$0xff]
      %v4228 = vld [vmem:[%s523 + $0xfb] sm:$0xff]
      %v4229 = vld [vmem:[%s523 + $0x103] sm:$0xff]
      %v4230 = vld [vmem:[%s523 + $0x10b] sm:$0xff]
      %v4231 = vld [vmem:[%s523 + $0x113] sm:$0xff]
      %v4232 = vld [vmem:[%s523 + $0x11b] sm:$0xff]
      %v4233 = vld [vmem:[%s523 + $0x123] sm:$0xff]
      %v4234 = vld [vmem:[%s523 + $0x12b] sm:$0xff]
      %v4235 = vld [vmem:[%s523 + $0x133] sm:$0xff]
      %v4236 = vld [vmem:[%s523 + $0x13b] sm:$0xff]
      %v4237 = vld [vmem:[%s523 + $0x143] sm:$0xff]
      %v4238 = vld [vmem:[%s523 + $0x14b] sm:$0xff]
      %v4239 = vld [vmem:[%s523 + $0x153] sm:$0xff]
      %v4240 = vld [vmem:[%s523 + $0x15b] sm:$0xff]
      %v4241 = vld [vmem:[%s523 + $0x163] sm:$0xff]
      %v4242 = vld [vmem:[%s523 + $0x16b] sm:$0xff]
      %v4243 = vld [vmem:[%s523 + $0x173] sm:$0xff]
      %v4244 = vld [vmem:[%s523 + $0x17b] sm:$0xff]
      %v4245 = vld [vmem:[%s523 + $0x183] sm:$0xff]
      %v4246 = vld [vmem:[%s523 + $0x18b] sm:$0xff]
      %v4247 = vld [vmem:[%s523 + $0x193] sm:$0xff]
      %v4248 = vld [vmem:[%s523 + $0x19b] sm:$0xff]
      %v4249 = vld [vmem:[%s523 + $0x1a3] sm:$0xff]
      %v4250 = vld [vmem:[%s523 + $0x1ab] sm:$0xff]
      %v4251 = vld [vmem:[%s523 + $0x1b3] sm:$0xff]
      %v4252 = vld [vmem:[%s523 + $0x1bb] sm:$0xff]
      %v4253 = vld [vmem:[%s523 + $0x1c3] sm:$0xff]
      %v4254 = vld [vmem:[%s523 + $0x1cb] sm:$0xff]
      %v4255 = vld [vmem:[%s523 + $0x1d3] sm:$0xff]
      %v4256 = vld [vmem:[%s523 + $0x1db] sm:$0xff]
      %v4257 = vld [vmem:[%s523 + $0x1e3] sm:$0xff]
      %v4258 = vld [vmem:[%s523 + $0x1eb] sm:$0xff]
      %v4259 = vld [vmem:[%s523 + $0x1f3] sm:$0xff]
      %v4260 = vld [vmem:[%s523 + $0x1fb] sm:$0xff]
      %v4261 = vld [vmem:[%s523 + $0x203] sm:$0xff]
      %v4262 = vld [vmem:[%s523 + $0x20b] sm:$0xff]
      %v4263 = vld [vmem:[%s523 + $0x213] sm:$0xff]
      %v4264 = vld [vmem:[%s523 + $0x21b] sm:$0xff]
      %v4265 = vld [vmem:[%s523 + $0x223] sm:$0xff]
      %v4266 = vld [vmem:[%s523 + $0x22b] sm:$0xff]
      %v4267 = vld [vmem:[%s523 + $0x233] sm:$0xff]
      %v4268 = vld [vmem:[%s523 + $0x23b] sm:$0xff]
      %v4269 = vld [vmem:[%s523 + $0x243] sm:$0xff]
      %v4270 = vld [vmem:[%s523 + $0x24b] sm:$0xff]
      %v4271 = vld [vmem:[%s523 + $0x253] sm:$0xff]
      %v4272 = vld [vmem:[%s523 + $0x25b] sm:$0xff]
      %v4273 = vld [vmem:[%s523 + $0x263] sm:$0xff]
      %v4274 = vld [vmem:[%s523 + $0x26b] sm:$0xff]
      %v4275 = vld [vmem:[%s523 + $0x273] sm:$0xff]
      %v4276 = vld [vmem:[%s523 + $0x27b] sm:$0xff]
      %v4277 = vld [vmem:[%s523 + $0x283] sm:$0xff]
      %v4278 = vld [vmem:[%s523 + $0x28b] sm:$0xff]
      %v4279 = vld [vmem:[%s523 + $0x293] sm:$0xff]
      %v4280 = vld [vmem:[%s523 + $0x29b] sm:$0xff]
      %v4281 = vld [vmem:[%s523 + $0x2a3] sm:$0xff]
      %v4282 = vld [vmem:[%s523 + $0x2ab] sm:$0xff]
      %v4283 = vpack.c.bf16 %v4203, %v4202
      %v4284 = vpack.c.bf16 %v4205, %v4204
      %v4285 = vpack.c.bf16 %v4207, %v4206
      %v4286 = vpack.c.bf16 %v4209, %v4208
      %v4287 = vpack.c.bf16 %v4211, %v4210
      %v4288 = vpack.c.bf16 %v4213, %v4212
      %v4289 = vpack.c.bf16 %v4215, %v4214
      %v4290 = vpack.c.bf16 %v4217, %v4216
      %v4291 = vpack.c.bf16 %v4219, %v4218
      %v4292 = vpack.c.bf16 %v4221, %v4220
      %v4293 = vpack.c.bf16 %v4223, %v4222
      %v4294 = vpack.c.bf16 %v4225, %v4224
      %v4295 = vpack.c.bf16 %v4227, %v4226
      %v4296 = vpack.c.bf16 %v4229, %v4228
      %v4297 = vpack.c.bf16 %v4231, %v4230
      %v4298 = vpack.c.bf16 %v4233, %v4232
      %v4299 = vpack.c.bf16 %v4235, %v4234
      %v4300 = vpack.c.bf16 %v4237, %v4236
      %v4301 = vpack.c.bf16 %v4239, %v4238
      %v4302 = vpack.c.bf16 %v4241, %v4240
      %v4303 = vpack.c.bf16 %v4243, %v4242
      %v4304 = vpack.c.bf16 %v4245, %v4244
      %v4305 = vpack.c.bf16 %v4247, %v4246
      %v4306 = vpack.c.bf16 %v4249, %v4248
      %v4307 = vpack.c.bf16 %v4251, %v4250
      %v4308 = vpack.c.bf16 %v4253, %v4252
      %v4309 = vpack.c.bf16 %v4255, %v4254
      %v4310 = vpack.c.bf16 %v4257, %v4256
      %v4311 = vpack.c.bf16 %v4259, %v4258
      %v4312 = vpack.c.bf16 %v4261, %v4260
      %v4313 = vpack.c.bf16 %v4263, %v4262
      %v4314 = vpack.c.bf16 %v4265, %v4264
      %v4315 = vpack.c.bf16 %v4267, %v4266
      %v4316 = vpack.c.bf16 %v4269, %v4268
      %v4317 = vpack.c.bf16 %v4271, %v4270
      %v4318 = vpack.c.bf16 %v4273, %v4272
      %v4319 = vpack.c.bf16 %v4275, %v4274
      %v4320 = vpack.c.bf16 %v4277, %v4276
      %v4321 = vpack.c.bf16 %v4279, %v4278
      %v4322 = vpack.c.bf16 %v4281, %v4280
      %v4323 = vpack.c.bf16 %v4282, %v4282
      %v4324 = vld [vmem:[%s329 + $0x200] sm:$0xf]
      %v4325 = vld [vmem:[%s329 + $0x204] sm:$0xf]
      %v4326 = vld [vmem:[%s329 + $0x208] sm:$0xf]
      %v4327 = vld [vmem:[%s329 + $0x20c] sm:$0xf]
      %v4328 = vld [vmem:[%s329 + $0x210] sm:$0xf]
      %v4329 = vld [vmem:[%s329 + $0x214] sm:$0xf]
      %v4330 = vld [vmem:[%s329 + $0x218] sm:$0xf]
      %v4331 = vld [vmem:[%s329 + $0x21c] sm:$0xf]
      %v4332 = vld [vmem:[%s329 + $0x220] sm:$0xf]
      %v4333 = vld [vmem:[%s329 + $0x224] sm:$0xf]
      %v4334 = vld [vmem:[%s329 + $0x228] sm:$0xf]
      %v4335 = vld [vmem:[%s329 + $0x22c] sm:$0xf]
      %v4336 = vld [vmem:[%s329 + $0x230] sm:$0xf]
      %v4337 = vld [vmem:[%s329 + $0x234] sm:$0xf]
      %v4338 = vld [vmem:[%s329 + $0x238] sm:$0xf]
      %v4339 = vld [vmem:[%s329 + $0x23c] sm:$0xf]
      %v4356 = vunpack.c.l.b16 %v4324
      %v4357 = vunpack.c.l.b16 %v4325
      %v4358 = vunpack.c.l.b16 %v4326
      %v4359 = vunpack.c.l.b16 %v4327
      %v4360 = vunpack.c.l.b16 %v4328
      %v4361 = vunpack.c.l.b16 %v4329
      %v4362 = vunpack.c.l.b16 %v4330
      %v4363 = vunpack.c.l.b16 %v4331
      %v4364 = vunpack.c.l.b16 %v4332
      %v4365 = vunpack.c.l.b16 %v4333
      %v4366 = vunpack.c.l.b16 %v4334
      %v4367 = vunpack.c.l.b16 %v4335
      %v4368 = vunpack.c.l.b16 %v4336
      %v4369 = vunpack.c.l.b16 %v4337
      %v4370 = vunpack.c.l.b16 %v4338
      %v4371 = vunpack.c.l.b16 %v4339
      %v4372 = vpack.c.b16 %v4357, %v4356
      %v4373 = vpack.c.b16 %v4359, %v4358
      %v4374 = vpack.c.b16 %v4361, %v4360
      %v4375 = vpack.c.b16 %v4363, %v4362
      %v4376 = vpack.c.b16 %v4365, %v4364
      %v4377 = vpack.c.b16 %v4367, %v4366
      %v4378 = vpack.c.b16 %v4369, %v4368
      %v4379 = vpack.c.b16 %v4371, %v4370
      %4388 = vmatpush.bf16.msra.mxu0 %v4379
      %4389 = vmatpush.bf16.msra.mxu0 %v4378
      %4390 = vmatpush.bf16.msra.mxu0 %v4377
      %4391 = vmatpush.bf16.msra.mxu0 %v4376
      %4392 = vmatpush.bf16.msra.mxu0 %v4375
      %4393 = vmatpush.bf16.msra.mxu0 %v4374
      %4394 = vmatpush.bf16.msra.mxu0 %v4373
      %4395 = vmatpush.bf16.msra.mxu0 %v4372
      %4396 = vmatmul.bf16.gmra.mxu0 %v4283
      %v4397 = vpop.f32.mrf.mxu0
      %v4398 = vadd.f32 0.0, %v4397
      %v4399 = vpop.f32.mrf.mxu0
      %v4400 = vadd.f32 0.0, %v4399
      %4401 = vmatmul.bf16.gmra.mxu0 %v4284
      %v4402 = vpop.f32.mrf.mxu0
      %v4403 = vadd.f32 0.0, %v4402
      %v4404 = vpop.f32.mrf.mxu0
      %v4405 = vadd.f32 0.0, %v4404
      %4406 = vmatmul.bf16.gmra.mxu0 %v4285
      %v4407 = vpop.f32.mrf.mxu0
      %v4408 = vadd.f32 0.0, %v4407
      %v4409 = vpop.f32.mrf.mxu0
      %v4410 = vadd.f32 0.0, %v4409
      %4411 = vmatmul.bf16.gmra.mxu0 %v4286
      %v4412 = vpop.f32.mrf.mxu0
      %v4413 = vadd.f32 0.0, %v4412
      %v4414 = vpop.f32.mrf.mxu0
      %v4415 = vadd.f32 0.0, %v4414
      %4416 = vmatmul.bf16.gmra.mxu0 %v4287
      %v4417 = vpop.f32.mrf.mxu0
      %v4418 = vadd.f32 0.0, %v4417
      %v4419 = vpop.f32.mrf.mxu0
      %v4420 = vadd.f32 0.0, %v4419
      %4421 = vmatmul.bf16.gmra.mxu0 %v4288
      %v4422 = vpop.f32.mrf.mxu0
      %v4423 = vadd.f32 0.0, %v4422
      %v4424 = vpop.f32.mrf.mxu0
      %v4425 = vadd.f32 0.0, %v4424
      %4426 = vmatmul.bf16.gmra.mxu0 %v4289
      %v4427 = vpop.f32.mrf.mxu0
      %v4428 = vadd.f32 0.0, %v4427
      %v4429 = vpop.f32.mrf.mxu0
      %v4430 = vadd.f32 0.0, %v4429
      %4431 = vmatmul.bf16.gmra.mxu0 %v4290
      %v4432 = vpop.f32.mrf.mxu0
      %v4433 = vadd.f32 0.0, %v4432
      %v4434 = vpop.f32.mrf.mxu0
      %v4435 = vadd.f32 0.0, %v4434
      %4436 = vmatmul.bf16.gmra.mxu0 %v4291
      %v4437 = vpop.f32.mrf.mxu0
      %v4438 = vadd.f32 0.0, %v4437
      %v4439 = vpop.f32.mrf.mxu0
      %v4440 = vadd.f32 0.0, %v4439
      %4441 = vmatmul.bf16.gmra.mxu0 %v4292
      %v4442 = vpop.f32.mrf.mxu0
      %v4443 = vadd.f32 0.0, %v4442
      %v4444 = vpop.f32.mrf.mxu0
      %v4445 = vadd.f32 0.0, %v4444
      %4446 = vmatmul.bf16.gmra.mxu0 %v4293
      %v4447 = vpop.f32.mrf.mxu0
      %v4448 = vadd.f32 0.0, %v4447
      %v4449 = vpop.f32.mrf.mxu0
      %v4450 = vadd.f32 0.0, %v4449
      %4451 = vmatmul.bf16.gmra.mxu0 %v4294
      %v4452 = vpop.f32.mrf.mxu0
      %v4453 = vadd.f32 0.0, %v4452
      %v4454 = vpop.f32.mrf.mxu0
      %v4455 = vadd.f32 0.0, %v4454
      %4456 = vmatmul.bf16.gmra.mxu0 %v4295
      %v4457 = vpop.f32.mrf.mxu0
      %v4458 = vadd.f32 0.0, %v4457
      %v4459 = vpop.f32.mrf.mxu0
      %v4460 = vadd.f32 0.0, %v4459
      %4461 = vmatmul.bf16.gmra.mxu0 %v4296
      %v4462 = vpop.f32.mrf.mxu0
      %v4463 = vadd.f32 0.0, %v4462
      %v4464 = vpop.f32.mrf.mxu0
      %v4465 = vadd.f32 0.0, %v4464
      %4466 = vmatmul.bf16.gmra.mxu0 %v4297
      %v4467 = vpop.f32.mrf.mxu0
      %v4468 = vadd.f32 0.0, %v4467
      %v4469 = vpop.f32.mrf.mxu0
      %v4470 = vadd.f32 0.0, %v4469
      %4471 = vmatmul.bf16.gmra.mxu0 %v4298
      %v4472 = vpop.f32.mrf.mxu0
      %v4473 = vadd.f32 0.0, %v4472
      %v4474 = vpop.f32.mrf.mxu0
      %v4475 = vadd.f32 0.0, %v4474
      %4476 = vmatmul.bf16.gmra.mxu0 %v4299
      %v4477 = vpop.f32.mrf.mxu0
      %v4478 = vadd.f32 0.0, %v4477
      %v4479 = vpop.f32.mrf.mxu0
      %v4480 = vadd.f32 0.0, %v4479
      %4481 = vmatmul.bf16.gmra.mxu0 %v4300
      %v4482 = vpop.f32.mrf.mxu0
      %v4483 = vadd.f32 0.0, %v4482
      %v4484 = vpop.f32.mrf.mxu0
      %v4485 = vadd.f32 0.0, %v4484
      %4486 = vmatmul.bf16.gmra.mxu0 %v4301
      %v4487 = vpop.f32.mrf.mxu0
      %v4488 = vadd.f32 0.0, %v4487
      %v4489 = vpop.f32.mrf.mxu0
      %v4490 = vadd.f32 0.0, %v4489
      %4491 = vmatmul.bf16.gmra.mxu0 %v4302
      %v4492 = vpop.f32.mrf.mxu0
      %v4493 = vadd.f32 0.0, %v4492
      %v4494 = vpop.f32.mrf.mxu0
      %v4495 = vadd.f32 0.0, %v4494
      %4496 = vmatmul.bf16.gmra.mxu0 %v4303
      %v4497 = vpop.f32.mrf.mxu0
      %v4498 = vadd.f32 0.0, %v4497
      %v4499 = vpop.f32.mrf.mxu0
      %v4500 = vadd.f32 0.0, %v4499
      %4501 = vmatmul.bf16.gmra.mxu0 %v4304
      %v4502 = vpop.f32.mrf.mxu0
      %v4503 = vadd.f32 0.0, %v4502
      %v4504 = vpop.f32.mrf.mxu0
      %v4505 = vadd.f32 0.0, %v4504
      %4506 = vmatmul.bf16.gmra.mxu0 %v4305
      %v4507 = vpop.f32.mrf.mxu0
      %v4508 = vadd.f32 0.0, %v4507
      %v4509 = vpop.f32.mrf.mxu0
      %v4510 = vadd.f32 0.0, %v4509
      %4511 = vmatmul.bf16.gmra.mxu0 %v4306
      %v4512 = vpop.f32.mrf.mxu0
      %v4513 = vadd.f32 0.0, %v4512
      %v4514 = vpop.f32.mrf.mxu0
      %v4515 = vadd.f32 0.0, %v4514
      %4516 = vmatmul.bf16.gmra.mxu0 %v4307
      %v4517 = vpop.f32.mrf.mxu0
      %v4518 = vadd.f32 0.0, %v4517
      %v4519 = vpop.f32.mrf.mxu0
      %v4520 = vadd.f32 0.0, %v4519
      %4521 = vmatmul.bf16.gmra.mxu0 %v4308
      %v4522 = vpop.f32.mrf.mxu0
      %v4523 = vadd.f32 0.0, %v4522
      %v4524 = vpop.f32.mrf.mxu0
      %v4525 = vadd.f32 0.0, %v4524
      %4526 = vmatmul.bf16.gmra.mxu0 %v4309
      %v4527 = vpop.f32.mrf.mxu0
      %v4528 = vadd.f32 0.0, %v4527
      %v4529 = vpop.f32.mrf.mxu0
      %v4530 = vadd.f32 0.0, %v4529
      %4531 = vmatmul.bf16.gmra.mxu0 %v4310
      %v4532 = vpop.f32.mrf.mxu0
      %v4533 = vadd.f32 0.0, %v4532
      %v4534 = vpop.f32.mrf.mxu0
      %v4535 = vadd.f32 0.0, %v4534
      %4536 = vmatmul.bf16.gmra.mxu0 %v4311
      %v4537 = vpop.f32.mrf.mxu0
      %v4538 = vadd.f32 0.0, %v4537
      %v4539 = vpop.f32.mrf.mxu0
      %v4540 = vadd.f32 0.0, %v4539
      %4541 = vmatmul.bf16.gmra.mxu0 %v4312
      %v4542 = vpop.f32.mrf.mxu0
      %v4543 = vadd.f32 0.0, %v4542
      %v4544 = vpop.f32.mrf.mxu0
      %v4545 = vadd.f32 0.0, %v4544
      %4546 = vmatmul.bf16.gmra.mxu0 %v4313
      %v4547 = vpop.f32.mrf.mxu0
      %v4548 = vadd.f32 0.0, %v4547
      %v4549 = vpop.f32.mrf.mxu0
      %v4550 = vadd.f32 0.0, %v4549
      %4551 = vmatmul.bf16.gmra.mxu0 %v4314
      %v4552 = vpop.f32.mrf.mxu0
      %v4553 = vadd.f32 0.0, %v4552
      %v4554 = vpop.f32.mrf.mxu0
      %v4555 = vadd.f32 0.0, %v4554
      %4556 = vmatmul.bf16.gmra.mxu0 %v4315
      %v4557 = vpop.f32.mrf.mxu0
      %v4558 = vadd.f32 0.0, %v4557
      %v4559 = vpop.f32.mrf.mxu0
      %v4560 = vadd.f32 0.0, %v4559
      %4561 = vmatmul.bf16.gmra.mxu0 %v4316
      %v4562 = vpop.f32.mrf.mxu0
      %v4563 = vadd.f32 0.0, %v4562
      %v4564 = vpop.f32.mrf.mxu0
      %v4565 = vadd.f32 0.0, %v4564
      %4566 = vmatmul.bf16.gmra.mxu0 %v4317
      %v4567 = vpop.f32.mrf.mxu0
      %v4568 = vadd.f32 0.0, %v4567
      %v4569 = vpop.f32.mrf.mxu0
      %v4570 = vadd.f32 0.0, %v4569
      %4571 = vmatmul.bf16.gmra.mxu0 %v4318
      %v4572 = vpop.f32.mrf.mxu0
      %v4573 = vadd.f32 0.0, %v4572
      %v4574 = vpop.f32.mrf.mxu0
      %v4575 = vadd.f32 0.0, %v4574
      %4576 = vmatmul.bf16.gmra.mxu0 %v4319
      %v4577 = vpop.f32.mrf.mxu0
      %v4578 = vadd.f32 0.0, %v4577
      %v4579 = vpop.f32.mrf.mxu0
      %v4580 = vadd.f32 0.0, %v4579
      %4581 = vmatmul.bf16.gmra.mxu0 %v4320
      %v4582 = vpop.f32.mrf.mxu0
      %v4583 = vadd.f32 0.0, %v4582
      %v4584 = vpop.f32.mrf.mxu0
      %v4585 = vadd.f32 0.0, %v4584
      %4586 = vmatmul.bf16.gmra.mxu0 %v4321
      %v4587 = vpop.f32.mrf.mxu0
      %v4588 = vadd.f32 0.0, %v4587
      %v4589 = vpop.f32.mrf.mxu0
      %v4590 = vadd.f32 0.0, %v4589
      %4591 = vmatmul.bf16.gmra.mxu0 %v4322
      %v4592 = vpop.f32.mrf.mxu0
      %v4593 = vadd.f32 0.0, %v4592
      %v4594 = vpop.f32.mrf.mxu0
      %v4595 = vadd.f32 0.0, %v4594
      %4596 = vmatmul.bf16.gmra.mxu0 %v4323
      %v4597 = vpop.f32.mrf.mxu0
      %v4598 = vadd.f32 0.0, %v4597
      %v4599 = vpop.f32.mrf.mxu0
      %4600 = vdwg.mxu0
      %v4601 = vadd.f32 %v4121, %v4398
      %v4602 = vadd.f32 %v4122, %v4400
      %v4603 = vadd.f32 %v4123, %v4403
      %v4604 = vadd.f32 %v4124, %v4405
      %v4605 = vadd.f32 %v4125, %v4408
      %v4606 = vadd.f32 %v4126, %v4410
      %v4607 = vadd.f32 %v4127, %v4413
      %v4608 = vadd.f32 %v4128, %v4415
      %v4609 = vadd.f32 %v4129, %v4418
      %v4610 = vadd.f32 %v4130, %v4420
      %v4611 = vadd.f32 %v4131, %v4423
      %v4612 = vadd.f32 %v4132, %v4425
      %v4613 = vadd.f32 %v4133, %v4428
      %v4614 = vadd.f32 %v4134, %v4430
      %v4615 = vadd.f32 %v4135, %v4433
      %v4616 = vadd.f32 %v4136, %v4435
      %v4617 = vadd.f32 %v4137, %v4438
      %v4618 = vadd.f32 %v4138, %v4440
      %v4619 = vadd.f32 %v4139, %v4443
      %v4620 = vadd.f32 %v4140, %v4445
      %v4621 = vadd.f32 %v4141, %v4448
      %v4622 = vadd.f32 %v4142, %v4450
      %v4623 = vadd.f32 %v4143, %v4453
      %v4624 = vadd.f32 %v4144, %v4455
      %v4625 = vadd.f32 %v4145, %v4458
      %v4626 = vadd.f32 %v4146, %v4460
      %v4627 = vadd.f32 %v4147, %v4463
      %v4628 = vadd.f32 %v4148, %v4465
      %v4629 = vadd.f32 %v4149, %v4468
      %v4630 = vadd.f32 %v4150, %v4470
      %v4631 = vadd.f32 %v4151, %v4473
      %v4632 = vadd.f32 %v4152, %v4475
      %v4633 = vadd.f32 %v4153, %v4478
      %v4634 = vadd.f32 %v4154, %v4480
      %v4635 = vadd.f32 %v4155, %v4483
      %v4636 = vadd.f32 %v4156, %v4485
      %v4637 = vadd.f32 %v4157, %v4488
      %v4638 = vadd.f32 %v4158, %v4490
      %v4639 = vadd.f32 %v4159, %v4493
      %v4640 = vadd.f32 %v4160, %v4495
      %v4641 = vadd.f32 %v4161, %v4498
      %v4642 = vadd.f32 %v4162, %v4500
      %v4643 = vadd.f32 %v4163, %v4503
      %v4644 = vadd.f32 %v4164, %v4505
      %v4645 = vadd.f32 %v4165, %v4508
      %v4646 = vadd.f32 %v4166, %v4510
      %v4647 = vadd.f32 %v4167, %v4513
      %v4648 = vadd.f32 %v4168, %v4515
      %v4649 = vadd.f32 %v4169, %v4518
      %v4650 = vadd.f32 %v4170, %v4520
      %v4651 = vadd.f32 %v4171, %v4523
      %v4652 = vadd.f32 %v4172, %v4525
      %v4653 = vadd.f32 %v4173, %v4528
      %v4654 = vadd.f32 %v4174, %v4530
      %v4655 = vadd.f32 %v4175, %v4533
      %v4656 = vadd.f32 %v4176, %v4535
      %v4657 = vadd.f32 %v4177, %v4538
      %v4658 = vadd.f32 %v4178, %v4540
      %v4659 = vadd.f32 %v4179, %v4543
      %v4660 = vadd.f32 %v4180, %v4545
      %v4661 = vadd.f32 %v4181, %v4548
      %v4662 = vadd.f32 %v4182, %v4550
      %v4663 = vadd.f32 %v4183, %v4553
      %v4664 = vadd.f32 %v4184, %v4555
      %v4665 = vadd.f32 %v4185, %v4558
      %v4666 = vadd.f32 %v4186, %v4560
      %v4667 = vadd.f32 %v4187, %v4563
      %v4668 = vadd.f32 %v4188, %v4565
      %v4669 = vadd.f32 %v4189, %v4568
      %v4670 = vadd.f32 %v4190, %v4570
      %v4671 = vadd.f32 %v4191, %v4573
      %v4672 = vadd.f32 %v4192, %v4575
      %v4673 = vadd.f32 %v4193, %v4578
      %v4674 = vadd.f32 %v4194, %v4580
      %v4675 = vadd.f32 %v4195, %v4583
      %v4676 = vadd.f32 %v4196, %v4585
      %v4677 = vadd.f32 %v4197, %v4588
      %v4678 = vadd.f32 %v4198, %v4590
      %v4679 = vadd.f32 %v4199, %v4593
      %v4680 = vadd.f32 %v4200, %v4595
      %v4681 = vadd.f32 %v4201, %v4598
      %v4682 = vld [vmem:[%s333] sm:$0x1]
      %v4684 = vperm.slane %v4682, 0
      %v4686 = vadd.f32 %v4601, %v4684
      %v4687 = vadd.f32 %v4602, %v4684
      %v4688 = vadd.f32 %v4603, %v4684
      %v4689 = vadd.f32 %v4604, %v4684
      %v4690 = vadd.f32 %v4605, %v4684
      %v4691 = vadd.f32 %v4606, %v4684
      %v4692 = vadd.f32 %v4607, %v4684
      %v4693 = vadd.f32 %v4608, %v4684
      %v4694 = vadd.f32 %v4609, %v4684
      %v4695 = vadd.f32 %v4610, %v4684
      %v4696 = vadd.f32 %v4611, %v4684
      %v4697 = vadd.f32 %v4612, %v4684
      %v4698 = vadd.f32 %v4613, %v4684
      %v4699 = vadd.f32 %v4614, %v4684
      %v4700 = vadd.f32 %v4615, %v4684
      %v4701 = vadd.f32 %v4616, %v4684
      %v4702 = vadd.f32 %v4617, %v4684
      %v4703 = vadd.f32 %v4618, %v4684
      %v4704 = vadd.f32 %v4619, %v4684
      %v4705 = vadd.f32 %v4620, %v4684
      %v4706 = vadd.f32 %v4621, %v4684
      %v4707 = vadd.f32 %v4622, %v4684
      %v4708 = vadd.f32 %v4623, %v4684
      %v4709 = vadd.f32 %v4624, %v4684
      %v4710 = vadd.f32 %v4625, %v4684
      %v4711 = vadd.f32 %v4626, %v4684
      %v4712 = vadd.f32 %v4627, %v4684
      %v4713 = vadd.f32 %v4628, %v4684
      %v4714 = vadd.f32 %v4629, %v4684
      %v4715 = vadd.f32 %v4630, %v4684
      %v4716 = vadd.f32 %v4631, %v4684
      %v4717 = vadd.f32 %v4632, %v4684
      %v4718 = vadd.f32 %v4633, %v4684
      %v4719 = vadd.f32 %v4634, %v4684
      %v4720 = vadd.f32 %v4635, %v4684
      %v4721 = vadd.f32 %v4636, %v4684
      %v4722 = vadd.f32 %v4637, %v4684
      %v4723 = vadd.f32 %v4638, %v4684
      %v4724 = vadd.f32 %v4639, %v4684
      %v4725 = vadd.f32 %v4640, %v4684
      %v4726 = vadd.f32 %v4641, %v4684
      %v4727 = vadd.f32 %v4642, %v4684
      %v4728 = vadd.f32 %v4643, %v4684
      %v4729 = vadd.f32 %v4644, %v4684
      %v4730 = vadd.f32 %v4645, %v4684
      %v4731 = vadd.f32 %v4646, %v4684
      %v4732 = vadd.f32 %v4647, %v4684
      %v4733 = vadd.f32 %v4648, %v4684
      %v4734 = vadd.f32 %v4649, %v4684
      %v4735 = vadd.f32 %v4650, %v4684
      %v4736 = vadd.f32 %v4651, %v4684
      %v4737 = vadd.f32 %v4652, %v4684
      %v4738 = vadd.f32 %v4653, %v4684
      %v4739 = vadd.f32 %v4654, %v4684
      %v4740 = vadd.f32 %v4655, %v4684
      %v4741 = vadd.f32 %v4656, %v4684
      %v4742 = vadd.f32 %v4657, %v4684
      %v4743 = vadd.f32 %v4658, %v4684
      %v4744 = vadd.f32 %v4659, %v4684
      %v4745 = vadd.f32 %v4660, %v4684
      %v4746 = vadd.f32 %v4661, %v4684
      %v4747 = vadd.f32 %v4662, %v4684
      %v4748 = vadd.f32 %v4663, %v4684
      %v4749 = vadd.f32 %v4664, %v4684
      %v4750 = vadd.f32 %v4665, %v4684
      %v4751 = vadd.f32 %v4666, %v4684
      %v4752 = vadd.f32 %v4667, %v4684
      %v4753 = vadd.f32 %v4668, %v4684
      %v4754 = vadd.f32 %v4669, %v4684
      %v4755 = vadd.f32 %v4670, %v4684
      %v4756 = vadd.f32 %v4671, %v4684
      %v4757 = vadd.f32 %v4672, %v4684
      %v4758 = vadd.f32 %v4673, %v4684
      %v4759 = vadd.f32 %v4674, %v4684
      %v4760 = vadd.f32 %v4675, %v4684
      %v4761 = vadd.f32 %v4676, %v4684
      %v4762 = vadd.f32 %v4677, %v4684
      %v4763 = vadd.f32 %v4678, %v4684
      %v4764 = vadd.f32 %v4679, %v4684
      %v4765 = vadd.f32 %v4680, %v4684
      %v4766 = vadd.f32 %v4681, %v4684
      %v4767 = vmax.f32 %v4686, 0.0
      %v4768 = vmax.f32 %v4687, 0.0
      %v4769 = vmax.f32 %v4688, 0.0
      %v4770 = vmax.f32 %v4689, 0.0
      %v4771 = vmax.f32 %v4690, 0.0
      %v4772 = vmax.f32 %v4691, 0.0
      %v4773 = vmax.f32 %v4692, 0.0
      %v4774 = vmax.f32 %v4693, 0.0
      %v4775 = vmax.f32 %v4694, 0.0
      %v4776 = vmax.f32 %v4695, 0.0
      %v4777 = vmax.f32 %v4696, 0.0
      %v4778 = vmax.f32 %v4697, 0.0
      %v4779 = vmax.f32 %v4698, 0.0
      %v4780 = vmax.f32 %v4699, 0.0
      %v4781 = vmax.f32 %v4700, 0.0
      %v4782 = vmax.f32 %v4701, 0.0
      %v4783 = vmax.f32 %v4702, 0.0
      %v4784 = vmax.f32 %v4703, 0.0
      %v4785 = vmax.f32 %v4704, 0.0
      %v4786 = vmax.f32 %v4705, 0.0
      %v4787 = vmax.f32 %v4706, 0.0
      %v4788 = vmax.f32 %v4707, 0.0
      %v4789 = vmax.f32 %v4708, 0.0
      %v4790 = vmax.f32 %v4709, 0.0
      %v4791 = vmax.f32 %v4710, 0.0
      %v4792 = vmax.f32 %v4711, 0.0
      %v4793 = vmax.f32 %v4712, 0.0
      %v4794 = vmax.f32 %v4713, 0.0
      %v4795 = vmax.f32 %v4714, 0.0
      %v4796 = vmax.f32 %v4715, 0.0
      %v4797 = vmax.f32 %v4716, 0.0
      %v4798 = vmax.f32 %v4717, 0.0
      %v4799 = vmax.f32 %v4718, 0.0
      %v4800 = vmax.f32 %v4719, 0.0
      %v4801 = vmax.f32 %v4720, 0.0
      %v4802 = vmax.f32 %v4721, 0.0
      %v4803 = vmax.f32 %v4722, 0.0
      %v4804 = vmax.f32 %v4723, 0.0
      %v4805 = vmax.f32 %v4724, 0.0
      %v4806 = vmax.f32 %v4725, 0.0
      %v4807 = vmax.f32 %v4726, 0.0
      %v4808 = vmax.f32 %v4727, 0.0
      %v4809 = vmax.f32 %v4728, 0.0
      %v4810 = vmax.f32 %v4729, 0.0
      %v4811 = vmax.f32 %v4730, 0.0
      %v4812 = vmax.f32 %v4731, 0.0
      %v4813 = vmax.f32 %v4732, 0.0
      %v4814 = vmax.f32 %v4733, 0.0
      %v4815 = vmax.f32 %v4734, 0.0
      %v4816 = vmax.f32 %v4735, 0.0
      %v4817 = vmax.f32 %v4736, 0.0
      %v4818 = vmax.f32 %v4737, 0.0
      %v4819 = vmax.f32 %v4738, 0.0
      %v4820 = vmax.f32 %v4739, 0.0
      %v4821 = vmax.f32 %v4740, 0.0
      %v4822 = vmax.f32 %v4741, 0.0
      %v4823 = vmax.f32 %v4742, 0.0
      %v4824 = vmax.f32 %v4743, 0.0
      %v4825 = vmax.f32 %v4744, 0.0
      %v4826 = vmax.f32 %v4745, 0.0
      %v4827 = vmax.f32 %v4746, 0.0
      %v4828 = vmax.f32 %v4747, 0.0
      %v4829 = vmax.f32 %v4748, 0.0
      %v4830 = vmax.f32 %v4749, 0.0
      %v4831 = vmax.f32 %v4750, 0.0
      %v4832 = vmax.f32 %v4751, 0.0
      %v4833 = vmax.f32 %v4752, 0.0
      %v4834 = vmax.f32 %v4753, 0.0
      %v4835 = vmax.f32 %v4754, 0.0
      %v4836 = vmax.f32 %v4755, 0.0
      %v4837 = vmax.f32 %v4756, 0.0
      %v4838 = vmax.f32 %v4757, 0.0
      %v4839 = vmax.f32 %v4758, 0.0
      %v4840 = vmax.f32 %v4759, 0.0
      %v4841 = vmax.f32 %v4760, 0.0
      %v4842 = vmax.f32 %v4761, 0.0
      %v4843 = vmax.f32 %v4762, 0.0
      %v4844 = vmax.f32 %v4763, 0.0
      %v4845 = vmax.f32 %v4764, 0.0
      %v4846 = vmax.f32 %v4765, 0.0
      %v4847 = vmax.f32 %v4766, 0.0
      %v4848 = vld [vmem:[%s3] sm:$0xff]
      %v4849 = vld [vmem:[%s3 + $0x8] sm:$0xff]
      %v4850 = vld [vmem:[%s3 + $0x10] sm:$0xff]
      %v4851 = vld [vmem:[%s3 + $0x18] sm:$0xff]
      %v4852 = vld [vmem:[%s3 + $0x20] sm:$0xff]
      %v4853 = vld [vmem:[%s3 + $0x28] sm:$0xff]
      %v4854 = vld [vmem:[%s3 + $0x30] sm:$0xff]
      %v4855 = vld [vmem:[%s3 + $0x38] sm:$0xff]
      %v4856 = vld [vmem:[%s3 + $0x40] sm:$0xff]
      %v4857 = vld [vmem:[%s3 + $0x48] sm:$0xff]
      %v4858 = vld [vmem:[%s3 + $0x50] sm:$0xff]
      %v4859 = vld [vmem:[%s3 + $0x58] sm:$0xff]
      %v4860 = vld [vmem:[%s3 + $0x60] sm:$0xff]
      %v4861 = vld [vmem:[%s3 + $0x68] sm:$0xff]
      %v4862 = vld [vmem:[%s3 + $0x70] sm:$0xff]
      %v4863 = vld [vmem:[%s3 + $0x78] sm:$0xff]
      %v4864 = vld [vmem:[%s3 + $0x80] sm:$0xff]
      %v4865 = vld [vmem:[%s3 + $0x88] sm:$0xff]
      %v4866 = vld [vmem:[%s3 + $0x90] sm:$0xff]
      %v4867 = vld [vmem:[%s3 + $0x98] sm:$0xff]
      %v4868 = vld [vmem:[%s3 + $0xa0] sm:$0xff]
      %v4869 = vld [vmem:[%s3 + $0xa8] sm:$0xff]
      %v4870 = vld [vmem:[%s3 + $0xb0] sm:$0xff]
      %v4871 = vld [vmem:[%s3 + $0xb8] sm:$0xff]
      %v4872 = vld [vmem:[%s3 + $0xc0] sm:$0xff]
      %v4873 = vld [vmem:[%s3 + $0xc8] sm:$0xff]
      %v4874 = vld [vmem:[%s3 + $0xd0] sm:$0xff]
      %v4875 = vld [vmem:[%s3 + $0xd8] sm:$0xff]
      %v4876 = vld [vmem:[%s3 + $0xe0] sm:$0xff]
      %v4877 = vld [vmem:[%s3 + $0xe8] sm:$0xff]
      %v4878 = vld [vmem:[%s3 + $0xf0] sm:$0xff]
      %v4879 = vld [vmem:[%s3 + $0xf8] sm:$0xff]
      %v4880 = vld [vmem:[%s3 + $0x100] sm:$0xff]
      %v4881 = vld [vmem:[%s3 + $0x108] sm:$0xff]
      %v4882 = vld [vmem:[%s3 + $0x110] sm:$0xff]
      %v4883 = vld [vmem:[%s3 + $0x118] sm:$0xff]
      %v4884 = vld [vmem:[%s3 + $0x120] sm:$0xff]
      %v4885 = vld [vmem:[%s3 + $0x128] sm:$0xff]
      %v4886 = vld [vmem:[%s3 + $0x130] sm:$0xff]
      %v4887 = vld [vmem:[%s3 + $0x138] sm:$0xff]
      %v4888 = vld [vmem:[%s3 + $0x140] sm:$0xff]
      %v4889 = vld [vmem:[%s3 + $0x148] sm:$0xff]
      %v4890 = vld [vmem:[%s3 + $0x150] sm:$0xff]
      %v4891 = vld [vmem:[%s3 + $0x158] sm:$0xff]
      %v4892 = vld [vmem:[%s3 + $0x160] sm:$0xff]
      %v4893 = vld [vmem:[%s3 + $0x168] sm:$0xff]
      %v4894 = vld [vmem:[%s3 + $0x170] sm:$0xff]
      %v4895 = vld [vmem:[%s3 + $0x178] sm:$0xff]
      %v4896 = vld [vmem:[%s3 + $0x180] sm:$0xff]
      %v4897 = vld [vmem:[%s3 + $0x188] sm:$0xff]
      %v4898 = vld [vmem:[%s3 + $0x190] sm:$0xff]
      %v4899 = vld [vmem:[%s3 + $0x198] sm:$0xff]
      %v4900 = vld [vmem:[%s3 + $0x1a0] sm:$0xff]
      %v4901 = vld [vmem:[%s3 + $0x1a8] sm:$0xff]
      %v4902 = vld [vmem:[%s3 + $0x1b0] sm:$0xff]
      %v4903 = vld [vmem:[%s3 + $0x1b8] sm:$0xff]
      %v4904 = vld [vmem:[%s3 + $0x1c0] sm:$0xff]
      %v4905 = vld [vmem:[%s3 + $0x1c8] sm:$0xff]
      %v4906 = vld [vmem:[%s3 + $0x1d0] sm:$0xff]
      %v4907 = vld [vmem:[%s3 + $0x1d8] sm:$0xff]
      %v4908 = vld [vmem:[%s3 + $0x1e0] sm:$0xff]
      %v4909 = vld [vmem:[%s3 + $0x1e8] sm:$0xff]
      %v4910 = vld [vmem:[%s3 + $0x1f0] sm:$0xff]
      %v4911 = vld [vmem:[%s3 + $0x1f8] sm:$0xff]
      %v4912 = vld [vmem:[%s3 + $0x200] sm:$0xff]
      %v4913 = vld [vmem:[%s3 + $0x208] sm:$0xff]
      %v4914 = vld [vmem:[%s3 + $0x210] sm:$0xff]
      %v4915 = vld [vmem:[%s3 + $0x218] sm:$0xff]
      %v4916 = vld [vmem:[%s3 + $0x220] sm:$0xff]
      %v4917 = vld [vmem:[%s3 + $0x228] sm:$0xff]
      %v4918 = vld [vmem:[%s3 + $0x230] sm:$0xff]
      %v4919 = vld [vmem:[%s3 + $0x238] sm:$0xff]
      %v4920 = vld [vmem:[%s3 + $0x240] sm:$0xff]
      %v4921 = vld [vmem:[%s3 + $0x248] sm:$0xff]
      %v4922 = vld [vmem:[%s3 + $0x250] sm:$0xff]
      %v4923 = vld [vmem:[%s3 + $0x258] sm:$0xff]
      %v4924 = vld [vmem:[%s3 + $0x260] sm:$0xff]
      %v4925 = vld [vmem:[%s3 + $0x268] sm:$0xff]
      %v4926 = vld [vmem:[%s3 + $0x270] sm:$0xff]
      %v4927 = vld [vmem:[%s3 + $0x278] sm:$0xff]
      %v4928 = vld [vmem:[%s3 + $0x280] sm:$0xff]
      %4930 = vset.pattern.permute.xlu0 0
      %4931 = vperm.xlu0 %4930, %v4848
      %v4932 = vpop.permute.xlu0 %4931
      %4935 = vset.pattern.permute.xlu0 0
      %4936 = vperm.xlu0 %4935, %v4849
      %v4937 = vpop.permute.xlu0 %4936
      %4940 = vset.pattern.permute.xlu0 0
      %4941 = vperm.xlu0 %4940, %v4850
      %v4942 = vpop.permute.xlu0 %4941
      %4945 = vset.pattern.permute.xlu0 0
      %4946 = vperm.xlu0 %4945, %v4851
      %v4947 = vpop.permute.xlu0 %4946
      %4950 = vset.pattern.permute.xlu0 0
      %4951 = vperm.xlu0 %4950, %v4852
      %v4952 = vpop.permute.xlu0 %4951
      %4955 = vset.pattern.permute.xlu0 0
      %4956 = vperm.xlu0 %4955, %v4853
      %v4957 = vpop.permute.xlu0 %4956
      %4960 = vset.pattern.permute.xlu0 0
      %4961 = vperm.xlu0 %4960, %v4854
      %v4962 = vpop.permute.xlu0 %4961
      %4965 = vset.pattern.permute.xlu0 0
      %4966 = vperm.xlu0 %4965, %v4855
      %v4967 = vpop.permute.xlu0 %4966
      %4970 = vset.pattern.permute.xlu0 0
      %4971 = vperm.xlu0 %4970, %v4856
      %v4972 = vpop.permute.xlu0 %4971
      %4975 = vset.pattern.permute.xlu0 0
      %4976 = vperm.xlu0 %4975, %v4857
      %v4977 = vpop.permute.xlu0 %4976
      %4980 = vset.pattern.permute.xlu0 0
      %4981 = vperm.xlu0 %4980, %v4858
      %v4982 = vpop.permute.xlu0 %4981
      %4985 = vset.pattern.permute.xlu0 0
      %4986 = vperm.xlu0 %4985, %v4859
      %v4987 = vpop.permute.xlu0 %4986
      %4990 = vset.pattern.permute.xlu0 0
      %4991 = vperm.xlu0 %4990, %v4860
      %v4992 = vpop.permute.xlu0 %4991
      %4995 = vset.pattern.permute.xlu0 0
      %4996 = vperm.xlu0 %4995, %v4861
      %v4997 = vpop.permute.xlu0 %4996
      %5000 = vset.pattern.permute.xlu0 0
      %5001 = vperm.xlu0 %5000, %v4862
      %v5002 = vpop.permute.xlu0 %5001
      %5005 = vset.pattern.permute.xlu0 0
      %5006 = vperm.xlu0 %5005, %v4863
      %v5007 = vpop.permute.xlu0 %5006
      %5010 = vset.pattern.permute.xlu0 0
      %5011 = vperm.xlu0 %5010, %v4864
      %v5012 = vpop.permute.xlu0 %5011
      %5015 = vset.pattern.permute.xlu0 0
      %5016 = vperm.xlu0 %5015, %v4865
      %v5017 = vpop.permute.xlu0 %5016
      %5020 = vset.pattern.permute.xlu0 0
      %5021 = vperm.xlu0 %5020, %v4866
      %v5022 = vpop.permute.xlu0 %5021
      %5025 = vset.pattern.permute.xlu0 0
      %5026 = vperm.xlu0 %5025, %v4867
      %v5027 = vpop.permute.xlu0 %5026
      %5030 = vset.pattern.permute.xlu0 0
      %5031 = vperm.xlu0 %5030, %v4868
      %v5032 = vpop.permute.xlu0 %5031
      %5035 = vset.pattern.permute.xlu0 0
      %5036 = vperm.xlu0 %5035, %v4869
      %v5037 = vpop.permute.xlu0 %5036
      %5040 = vset.pattern.permute.xlu0 0
      %5041 = vperm.xlu0 %5040, %v4870
      %v5042 = vpop.permute.xlu0 %5041
      %5045 = vset.pattern.permute.xlu0 0
      %5046 = vperm.xlu0 %5045, %v4871
      %v5047 = vpop.permute.xlu0 %5046
      %5050 = vset.pattern.permute.xlu0 0
      %5051 = vperm.xlu0 %5050, %v4872
      %v5052 = vpop.permute.xlu0 %5051
      %5055 = vset.pattern.permute.xlu0 0
      %5056 = vperm.xlu0 %5055, %v4873
      %v5057 = vpop.permute.xlu0 %5056
      %5060 = vset.pattern.permute.xlu0 0
      %5061 = vperm.xlu0 %5060, %v4874
      %v5062 = vpop.permute.xlu0 %5061
      %5065 = vset.pattern.permute.xlu0 0
      %5066 = vperm.xlu0 %5065, %v4875
      %v5067 = vpop.permute.xlu0 %5066
      %5070 = vset.pattern.permute.xlu0 0
      %5071 = vperm.xlu0 %5070, %v4876
      %v5072 = vpop.permute.xlu0 %5071
      %5075 = vset.pattern.permute.xlu0 0
      %5076 = vperm.xlu0 %5075, %v4877
      %v5077 = vpop.permute.xlu0 %5076
      %5080 = vset.pattern.permute.xlu0 0
      %5081 = vperm.xlu0 %5080, %v4878
      %v5082 = vpop.permute.xlu0 %5081
      %5085 = vset.pattern.permute.xlu0 0
      %5086 = vperm.xlu0 %5085, %v4879
      %v5087 = vpop.permute.xlu0 %5086
      %5090 = vset.pattern.permute.xlu0 0
      %5091 = vperm.xlu0 %5090, %v4880
      %v5092 = vpop.permute.xlu0 %5091
      %5095 = vset.pattern.permute.xlu0 0
      %5096 = vperm.xlu0 %5095, %v4881
      %v5097 = vpop.permute.xlu0 %5096
      %5100 = vset.pattern.permute.xlu0 0
      %5101 = vperm.xlu0 %5100, %v4882
      %v5102 = vpop.permute.xlu0 %5101
      %5105 = vset.pattern.permute.xlu0 0
      %5106 = vperm.xlu0 %5105, %v4883
      %v5107 = vpop.permute.xlu0 %5106
      %5110 = vset.pattern.permute.xlu0 0
      %5111 = vperm.xlu0 %5110, %v4884
      %v5112 = vpop.permute.xlu0 %5111
      %5115 = vset.pattern.permute.xlu0 0
      %5116 = vperm.xlu0 %5115, %v4885
      %v5117 = vpop.permute.xlu0 %5116
      %5120 = vset.pattern.permute.xlu0 0
      %5121 = vperm.xlu0 %5120, %v4886
      %v5122 = vpop.permute.xlu0 %5121
      %5125 = vset.pattern.permute.xlu0 0
      %5126 = vperm.xlu0 %5125, %v4887
      %v5127 = vpop.permute.xlu0 %5126
      %5130 = vset.pattern.permute.xlu0 0
      %5131 = vperm.xlu0 %5130, %v4888
      %v5132 = vpop.permute.xlu0 %5131
      %5135 = vset.pattern.permute.xlu0 0
      %5136 = vperm.xlu0 %5135, %v4889
      %v5137 = vpop.permute.xlu0 %5136
      %5140 = vset.pattern.permute.xlu0 0
      %5141 = vperm.xlu0 %5140, %v4890
      %v5142 = vpop.permute.xlu0 %5141
      %5145 = vset.pattern.permute.xlu0 0
      %5146 = vperm.xlu0 %5145, %v4891
      %v5147 = vpop.permute.xlu0 %5146
      %5150 = vset.pattern.permute.xlu0 0
      %5151 = vperm.xlu0 %5150, %v4892
      %v5152 = vpop.permute.xlu0 %5151
      %5155 = vset.pattern.permute.xlu0 0
      %5156 = vperm.xlu0 %5155, %v4893
      %v5157 = vpop.permute.xlu0 %5156
      %5160 = vset.pattern.permute.xlu0 0
      %5161 = vperm.xlu0 %5160, %v4894
      %v5162 = vpop.permute.xlu0 %5161
      %5165 = vset.pattern.permute.xlu0 0
      %5166 = vperm.xlu0 %5165, %v4895
      %v5167 = vpop.permute.xlu0 %5166
      %5170 = vset.pattern.permute.xlu0 0
      %5171 = vperm.xlu0 %5170, %v4896
      %v5172 = vpop.permute.xlu0 %5171
      %5175 = vset.pattern.permute.xlu0 0
      %5176 = vperm.xlu0 %5175, %v4897
      %v5177 = vpop.permute.xlu0 %5176
      %5180 = vset.pattern.permute.xlu0 0
      %5181 = vperm.xlu0 %5180, %v4898
      %v5182 = vpop.permute.xlu0 %5181
      %5185 = vset.pattern.permute.xlu0 0
      %5186 = vperm.xlu0 %5185, %v4899
      %v5187 = vpop.permute.xlu0 %5186
      %5190 = vset.pattern.permute.xlu0 0
      %5191 = vperm.xlu0 %5190, %v4900
      %v5192 = vpop.permute.xlu0 %5191
      %5195 = vset.pattern.permute.xlu0 0
      %5196 = vperm.xlu0 %5195, %v4901
      %v5197 = vpop.permute.xlu0 %5196
      %5200 = vset.pattern.permute.xlu0 0
      %5201 = vperm.xlu0 %5200, %v4902
      %v5202 = vpop.permute.xlu0 %5201
      %5205 = vset.pattern.permute.xlu0 0
      %5206 = vperm.xlu0 %5205, %v4903
      %v5207 = vpop.permute.xlu0 %5206
      %5210 = vset.pattern.permute.xlu0 0
      %5211 = vperm.xlu0 %5210, %v4904
      %v5212 = vpop.permute.xlu0 %5211
      %5215 = vset.pattern.permute.xlu0 0
      %5216 = vperm.xlu0 %5215, %v4905
      %v5217 = vpop.permute.xlu0 %5216
      %5220 = vset.pattern.permute.xlu0 0
      %5221 = vperm.xlu0 %5220, %v4906
      %v5222 = vpop.permute.xlu0 %5221
      %5225 = vset.pattern.permute.xlu0 0
      %5226 = vperm.xlu0 %5225, %v4907
      %v5227 = vpop.permute.xlu0 %5226
      %5230 = vset.pattern.permute.xlu0 0
      %5231 = vperm.xlu0 %5230, %v4908
      %v5232 = vpop.permute.xlu0 %5231
      %5235 = vset.pattern.permute.xlu0 0
      %5236 = vperm.xlu0 %5235, %v4909
      %v5237 = vpop.permute.xlu0 %5236
      %5240 = vset.pattern.permute.xlu0 0
      %5241 = vperm.xlu0 %5240, %v4910
      %v5242 = vpop.permute.xlu0 %5241
      %5245 = vset.pattern.permute.xlu0 0
      %5246 = vperm.xlu0 %5245, %v4911
      %v5247 = vpop.permute.xlu0 %5246
      %5250 = vset.pattern.permute.xlu0 0
      %5251 = vperm.xlu0 %5250, %v4912
      %v5252 = vpop.permute.xlu0 %5251
      %5255 = vset.pattern.permute.xlu0 0
      %5256 = vperm.xlu0 %5255, %v4913
      %v5257 = vpop.permute.xlu0 %5256
      %5260 = vset.pattern.permute.xlu0 0
      %5261 = vperm.xlu0 %5260, %v4914
      %v5262 = vpop.permute.xlu0 %5261
      %5265 = vset.pattern.permute.xlu0 0
      %5266 = vperm.xlu0 %5265, %v4915
      %v5267 = vpop.permute.xlu0 %5266
      %5270 = vset.pattern.permute.xlu0 0
      %5271 = vperm.xlu0 %5270, %v4916
      %v5272 = vpop.permute.xlu0 %5271
      %5275 = vset.pattern.permute.xlu0 0
      %5276 = vperm.xlu0 %5275, %v4917
      %v5277 = vpop.permute.xlu0 %5276
      %5280 = vset.pattern.permute.xlu0 0
      %5281 = vperm.xlu0 %5280, %v4918
      %v5282 = vpop.permute.xlu0 %5281
      %5285 = vset.pattern.permute.xlu0 0
      %5286 = vperm.xlu0 %5285, %v4919
      %v5287 = vpop.permute.xlu0 %5286
      %5290 = vset.pattern.permute.xlu0 0
      %5291 = vperm.xlu0 %5290, %v4920
      %v5292 = vpop.permute.xlu0 %5291
      %5295 = vset.pattern.permute.xlu0 0
      %5296 = vperm.xlu0 %5295, %v4921
      %v5297 = vpop.permute.xlu0 %5296
      %5300 = vset.pattern.permute.xlu0 0
      %5301 = vperm.xlu0 %5300, %v4922
      %v5302 = vpop.permute.xlu0 %5301
      %5305 = vset.pattern.permute.xlu0 0
      %5306 = vperm.xlu0 %5305, %v4923
      %v5307 = vpop.permute.xlu0 %5306
      %5310 = vset.pattern.permute.xlu0 0
      %5311 = vperm.xlu0 %5310, %v4924
      %v5312 = vpop.permute.xlu0 %5311
      %5315 = vset.pattern.permute.xlu0 0
      %5316 = vperm.xlu0 %5315, %v4925
      %v5317 = vpop.permute.xlu0 %5316
      %5320 = vset.pattern.permute.xlu0 0
      %5321 = vperm.xlu0 %5320, %v4926
      %v5322 = vpop.permute.xlu0 %5321
      %5325 = vset.pattern.permute.xlu0 0
      %5326 = vperm.xlu0 %5325, %v4927
      %v5327 = vpop.permute.xlu0 %5326
      %5330 = vset.pattern.permute.xlu0 0
      %5331 = vperm.xlu0 %5330, %v4928
      %v5332 = vpop.permute.xlu0 %5331
      %v5334 = vmul.f32 %v4767, %v4932
      %v5335 = vmul.f32 %v4768, %v4937
      %v5336 = vmul.f32 %v4769, %v4942
      %v5337 = vmul.f32 %v4770, %v4947
      %v5338 = vmul.f32 %v4771, %v4952
      %v5339 = vmul.f32 %v4772, %v4957
      %v5340 = vmul.f32 %v4773, %v4962
      %v5341 = vmul.f32 %v4774, %v4967
      %v5342 = vmul.f32 %v4775, %v4972
      %v5343 = vmul.f32 %v4776, %v4977
      %v5344 = vmul.f32 %v4777, %v4982
      %v5345 = vmul.f32 %v4778, %v4987
      %v5346 = vmul.f32 %v4779, %v4992
      %v5347 = vmul.f32 %v4780, %v4997
      %v5348 = vmul.f32 %v4781, %v5002
      %v5349 = vmul.f32 %v4782, %v5007
      %v5350 = vmul.f32 %v4783, %v5012
      %v5351 = vmul.f32 %v4784, %v5017
      %v5352 = vmul.f32 %v4785, %v5022
      %v5353 = vmul.f32 %v4786, %v5027
      %v5354 = vmul.f32 %v4787, %v5032
      %v5355 = vmul.f32 %v4788, %v5037
      %v5356 = vmul.f32 %v4789, %v5042
      %v5357 = vmul.f32 %v4790, %v5047
      %v5358 = vmul.f32 %v4791, %v5052
      %v5359 = vmul.f32 %v4792, %v5057
      %v5360 = vmul.f32 %v4793, %v5062
      %v5361 = vmul.f32 %v4794, %v5067
      %v5362 = vmul.f32 %v4795, %v5072
      %v5363 = vmul.f32 %v4796, %v5077
      %v5364 = vmul.f32 %v4797, %v5082
      %v5365 = vmul.f32 %v4798, %v5087
      %v5366 = vmul.f32 %v4799, %v5092
      %v5367 = vmul.f32 %v4800, %v5097
      %v5368 = vmul.f32 %v4801, %v5102
      %v5369 = vmul.f32 %v4802, %v5107
      %v5370 = vmul.f32 %v4803, %v5112
      %v5371 = vmul.f32 %v4804, %v5117
      %v5372 = vmul.f32 %v4805, %v5122
      %v5373 = vmul.f32 %v4806, %v5127
      %v5374 = vmul.f32 %v4807, %v5132
      %v5375 = vmul.f32 %v4808, %v5137
      %v5376 = vmul.f32 %v4809, %v5142
      %v5377 = vmul.f32 %v4810, %v5147
      %v5378 = vmul.f32 %v4811, %v5152
      %v5379 = vmul.f32 %v4812, %v5157
      %v5380 = vmul.f32 %v4813, %v5162
      %v5381 = vmul.f32 %v4814, %v5167
      %v5382 = vmul.f32 %v4815, %v5172
      %v5383 = vmul.f32 %v4816, %v5177
      %v5384 = vmul.f32 %v4817, %v5182
      %v5385 = vmul.f32 %v4818, %v5187
      %v5386 = vmul.f32 %v4819, %v5192
      %v5387 = vmul.f32 %v4820, %v5197
      %v5388 = vmul.f32 %v4821, %v5202
      %v5389 = vmul.f32 %v4822, %v5207
      %v5390 = vmul.f32 %v4823, %v5212
      %v5391 = vmul.f32 %v4824, %v5217
      %v5392 = vmul.f32 %v4825, %v5222
      %v5393 = vmul.f32 %v4826, %v5227
      %v5394 = vmul.f32 %v4827, %v5232
      %v5395 = vmul.f32 %v4828, %v5237
      %v5396 = vmul.f32 %v4829, %v5242
      %v5397 = vmul.f32 %v4830, %v5247
      %v5398 = vmul.f32 %v4831, %v5252
      %v5399 = vmul.f32 %v4832, %v5257
      %v5400 = vmul.f32 %v4833, %v5262
      %v5401 = vmul.f32 %v4834, %v5267
      %v5402 = vmul.f32 %v4835, %v5272
      %v5403 = vmul.f32 %v4836, %v5277
      %v5404 = vmul.f32 %v4837, %v5282
      %v5405 = vmul.f32 %v4838, %v5287
      %v5406 = vmul.f32 %v4839, %v5292
      %v5407 = vmul.f32 %v4840, %v5297
      %v5408 = vmul.f32 %v4841, %v5302
      %v5409 = vmul.f32 %v4842, %v5307
      %v5410 = vmul.f32 %v4843, %v5312
      %v5411 = vmul.f32 %v4844, %v5317
      %v5412 = vmul.f32 %v4845, %v5322
      %v5413 = vmul.f32 %v4846, %v5327
      %v5414 = vmul.f32 %v4847, %v5332
      %p5415 = scmp.lt.s32.totalorder %s20, 4
      // Predicated region
      $region61: #{classifier_net_forward.1} parent=55 // pred_check
        %p5416 = pneg %p5415
      $region62: #{classifier_net_forward.1} parent=55 // pred_check_branch
        %5418 = sbr.rel (%p5416) target = $region64
      $region63: #{classifier_net_forward.1} parent=55 // pred_region
        %s5419 = sand.u32 %s20, 1
        %s5420 = smul.u32 %s5419, 696
        %s5421 = scalar_lea.vmem [#allocation2], %s5420
        %5422 = vst [vmem:[%s5421 + $0x18] sm:$0xff] %v5334
        %5423 = vst [vmem:[%s5421 + $0x20] sm:$0xff] %v5335
        %5424 = vst [vmem:[%s5421 + $0x28] sm:$0xff] %v5336
        %5425 = vst [vmem:[%s5421 + $0x30] sm:$0xff] %v5337
        %5426 = vst [vmem:[%s5421 + $0x38] sm:$0xff] %v5338
        %5427 = vst [vmem:[%s5421 + $0x40] sm:$0xff] %v5339
        %5428 = vst [vmem:[%s5421 + $0x48] sm:$0xff] %v5340
        %5429 = vst [vmem:[%s5421 + $0x50] sm:$0xff] %v5341
        %5430 = vst [vmem:[%s5421 + $0x58] sm:$0xff] %v5342
        %5431 = vst [vmem:[%s5421 + $0x60] sm:$0xff] %v5343
        %5432 = vst [vmem:[%s5421 + $0x68] sm:$0xff] %v5344
        %5433 = vst [vmem:[%s5421 + $0x70] sm:$0xff] %v5345
        %5434 = vst [vmem:[%s5421 + $0x78] sm:$0xff] %v5346
        %5435 = vst [vmem:[%s5421 + $0x80] sm:$0xff] %v5347
        %5436 = vst [vmem:[%s5421 + $0x88] sm:$0xff] %v5348
        %5437 = vst [vmem:[%s5421 + $0x90] sm:$0xff] %v5349
        %5438 = vst [vmem:[%s5421 + $0x98] sm:$0xff] %v5350
        %5439 = vst [vmem:[%s5421 + $0xa0] sm:$0xff] %v5351
        %5440 = vst [vmem:[%s5421 + $0xa8] sm:$0xff] %v5352
        %5441 = vst [vmem:[%s5421 + $0xb0] sm:$0xff] %v5353
        %5442 = vst [vmem:[%s5421 + $0xb8] sm:$0xff] %v5354
        %5443 = vst [vmem:[%s5421 + $0xc0] sm:$0xff] %v5355
        %5444 = vst [vmem:[%s5421 + $0xc8] sm:$0xff] %v5356
        %5445 = vst [vmem:[%s5421 + $0xd0] sm:$0xff] %v5357
        %5446 = vst [vmem:[%s5421 + $0xd8] sm:$0xff] %v5358
        %5447 = vst [vmem:[%s5421 + $0xe0] sm:$0xff] %v5359
        %5448 = vst [vmem:[%s5421 + $0xe8] sm:$0xff] %v5360
        %5449 = vst [vmem:[%s5421 + $0xf0] sm:$0xff] %v5361
        %5450 = vst [vmem:[%s5421 + $0xf8] sm:$0xff] %v5362
        %5451 = vst [vmem:[%s5421 + $0x100] sm:$0xff] %v5363
        %5452 = vst [vmem:[%s5421 + $0x108] sm:$0xff] %v5364
        %5453 = vst [vmem:[%s5421 + $0x110] sm:$0xff] %v5365
        %5454 = vst [vmem:[%s5421 + $0x118] sm:$0xff] %v5366
        %5455 = vst [vmem:[%s5421 + $0x120] sm:$0xff] %v5367
        %5456 = vst [vmem:[%s5421 + $0x128] sm:$0xff] %v5368
        %5457 = vst [vmem:[%s5421 + $0x130] sm:$0xff] %v5369
        %5458 = vst [vmem:[%s5421 + $0x138] sm:$0xff] %v5370
        %5459 = vst [vmem:[%s5421 + $0x140] sm:$0xff] %v5371
        %5460 = vst [vmem:[%s5421 + $0x148] sm:$0xff] %v5372
        %5461 = vst [vmem:[%s5421 + $0x150] sm:$0xff] %v5373
        %5462 = vst [vmem:[%s5421 + $0x158] sm:$0xff] %v5374
        %5463 = vst [vmem:[%s5421 + $0x160] sm:$0xff] %v5375
        %5464 = vst [vmem:[%s5421 + $0x168] sm:$0xff] %v5376
        %5465 = vst [vmem:[%s5421 + $0x170] sm:$0xff] %v5377
        %5466 = vst [vmem:[%s5421 + $0x178] sm:$0xff] %v5378
        %5467 = vst [vmem:[%s5421 + $0x180] sm:$0xff] %v5379
        %5468 = vst [vmem:[%s5421 + $0x188] sm:$0xff] %v5380
        %5469 = vst [vmem:[%s5421 + $0x190] sm:$0xff] %v5381
        %5470 = vst [vmem:[%s5421 + $0x198] sm:$0xff] %v5382
        %5471 = vst [vmem:[%s5421 + $0x1a0] sm:$0xff] %v5383
        %5472 = vst [vmem:[%s5421 + $0x1a8] sm:$0xff] %v5384
        %5473 = vst [vmem:[%s5421 + $0x1b0] sm:$0xff] %v5385
        %5474 = vst [vmem:[%s5421 + $0x1b8] sm:$0xff] %v5386
        %5475 = vst [vmem:[%s5421 + $0x1c0] sm:$0xff] %v5387
        %5476 = vst [vmem:[%s5421 + $0x1c8] sm:$0xff] %v5388
        %5477 = vst [vmem:[%s5421 + $0x1d0] sm:$0xff] %v5389
        %5478 = vst [vmem:[%s5421 + $0x1d8] sm:$0xff] %v5390
        %5479 = vst [vmem:[%s5421 + $0x1e0] sm:$0xff] %v5391
        %5480 = vst [vmem:[%s5421 + $0x1e8] sm:$0xff] %v5392
        %5481 = vst [vmem:[%s5421 + $0x1f0] sm:$0xff] %v5393
        %5482 = vst [vmem:[%s5421 + $0x1f8] sm:$0xff] %v5394
        %5483 = vst [vmem:[%s5421 + $0x200] sm:$0xff] %v5395
        %5484 = vst [vmem:[%s5421 + $0x208] sm:$0xff] %v5396
        %5485 = vst [vmem:[%s5421 + $0x210] sm:$0xff] %v5397
        %5486 = vst [vmem:[%s5421 + $0x218] sm:$0xff] %v5398
        %5487 = vst [vmem:[%s5421 + $0x220] sm:$0xff] %v5399
        %5488 = vst [vmem:[%s5421 + $0x228] sm:$0xff] %v5400
        %5489 = vst [vmem:[%s5421 + $0x230] sm:$0xff] %v5401
        %5490 = vst [vmem:[%s5421 + $0x238] sm:$0xff] %v5402
        %5491 = vst [vmem:[%s5421 + $0x240] sm:$0xff] %v5403
        %5492 = vst [vmem:[%s5421 + $0x248] sm:$0xff] %v5404
        %5493 = vst [vmem:[%s5421 + $0x250] sm:$0xff] %v5405
        %5494 = vst [vmem:[%s5421 + $0x258] sm:$0xff] %v5406
        %5495 = vst [vmem:[%s5421 + $0x260] sm:$0xff] %v5407
        %5496 = vst [vmem:[%s5421 + $0x268] sm:$0xff] %v5408
        %5497 = vst [vmem:[%s5421 + $0x270] sm:$0xff] %v5409
        %5498 = vst [vmem:[%s5421 + $0x278] sm:$0xff] %v5410
        %5499 = vst [vmem:[%s5421 + $0x280] sm:$0xff] %v5411
        %5500 = vst [vmem:[%s5421 + $0x288] sm:$0xff] %v5412
        %5501 = vst [vmem:[%s5421 + $0x290] sm:$0xff] %v5413
        %5502 = vst [vmem:[%s5421 + $0x298] sm:$0xff] %v5414
      $region64: #{classifier_net_forward.1} parent=55 // pred_fallthru
        _
      %p5503 = scmp.eq.s32.totalorder %s20, 4
      // Predicated region
      $region65: #{classifier_net_forward.1} parent=55 // pred_check
        %p5504 = pneg %p5503
      $region66: #{classifier_net_forward.1} parent=55 // pred_check_branch
        %5506 = sbr.rel (%p5504) target = $region68
      $region67: #{classifier_net_forward.1} parent=55 // pred_region
        %v5507 = vld [vmem:[%s4] sm:$0xff]
        %v5508 = vld [vmem:[%s4 + $0x8] sm:$0xff]
        %v5509 = vld [vmem:[%s4 + $0x10] sm:$0xff]
        %v5510 = vpack.c.bf16 %v5335, %v5334
        %v5511 = vpack.c.bf16 %v5337, %v5336
        %v5512 = vpack.c.bf16 %v5339, %v5338
        %v5513 = vpack.c.bf16 %v5341, %v5340
        %v5514 = vpack.c.bf16 %v5343, %v5342
        %v5515 = vpack.c.bf16 %v5345, %v5344
        %v5516 = vpack.c.bf16 %v5347, %v5346
        %v5517 = vpack.c.bf16 %v5349, %v5348
        %v5518 = vpack.c.bf16 %v5351, %v5350
        %v5519 = vpack.c.bf16 %v5353, %v5352
        %v5520 = vpack.c.bf16 %v5355, %v5354
        %v5521 = vpack.c.bf16 %v5357, %v5356
        %v5522 = vpack.c.bf16 %v5359, %v5358
        %v5523 = vpack.c.bf16 %v5361, %v5360
        %v5524 = vpack.c.bf16 %v5363, %v5362
        %v5525 = vpack.c.bf16 %v5365, %v5364
        %v5526 = vpack.c.bf16 %v5367, %v5366
        %v5527 = vpack.c.bf16 %v5369, %v5368
        %v5528 = vpack.c.bf16 %v5371, %v5370
        %v5529 = vpack.c.bf16 %v5373, %v5372
        %v5530 = vpack.c.bf16 %v5375, %v5374
        %v5531 = vpack.c.bf16 %v5377, %v5376
        %v5532 = vpack.c.bf16 %v5379, %v5378
        %v5533 = vpack.c.bf16 %v5381, %v5380
        %v5534 = vpack.c.bf16 %v5383, %v5382
        %v5535 = vpack.c.bf16 %v5385, %v5384
        %v5536 = vpack.c.bf16 %v5387, %v5386
        %v5537 = vpack.c.bf16 %v5389, %v5388
        %v5538 = vpack.c.bf16 %v5391, %v5390
        %v5539 = vpack.c.bf16 %v5393, %v5392
        %v5540 = vpack.c.bf16 %v5395, %v5394
        %v5541 = vpack.c.bf16 %v5397, %v5396
        %v5542 = vpack.c.bf16 %v5399, %v5398
        %v5543 = vpack.c.bf16 %v5401, %v5400
        %v5544 = vpack.c.bf16 %v5403, %v5402
        %v5545 = vpack.c.bf16 %v5405, %v5404
        %v5546 = vpack.c.bf16 %v5407, %v5406
        %v5547 = vpack.c.bf16 %v5409, %v5408
        %v5548 = vpack.c.bf16 %v5411, %v5410
        %v5549 = vpack.c.bf16 %v5413, %v5412
        %v5550 = vpack.c.bf16 %v5414, %v5414
        %v5554 = vunpack.c.l.b16 %v5507
        %v5555 = vunpack.c.h.b16 %v5507
        %v5556 = vunpack.c.l.b16 %v5508
        %v5557 = vunpack.c.h.b16 %v5508
        %v5558 = vunpack.c.l.b16 %v5509
        %v5559 = vunpack.c.h.b16 %v5509
        %v5560 = vpack.c.b16 %v5554, %v5554
        %v5561 = vpack.c.b16 %v5555, %v5555
        %v5562 = vpack.c.b16 %v5556, %v5556
        %v5563 = vpack.c.b16 %v5557, %v5557
        %v5564 = vpack.c.b16 %v5558, %v5558
        %v5565 = vpack.c.b16 %v5559, %v5559
        %vm5571 = vcmask 64512
        %v5573 = vsel %vm5571, %v5565, 0
        %vm5575 = vcmask 1043456
        %v5577 = vsel %vm5575, %v5550, 0
        %5579 = vmatpush.bf16.msra.mxu0 %v5517
        %5580 = vmatpush.bf16.msra.mxu0 %v5516
        %5581 = vmatpush.bf16.msra.mxu0 %v5515
        %5582 = vmatpush.bf16.msra.mxu0 %v5514
        %5583 = vmatpush.bf16.msra.mxu0 %v5513
        %5584 = vmatpush.bf16.msra.mxu0 %v5512
        %5585 = vmatpush.bf16.msra.mxu0 %v5511
        %5586 = vmatpush.bf16.msra.mxu0 %v5510
        %5587 = vmatmul.bf16.gmra.mxu0 %v5560
        %v5588 = vpop.f32.mrf.mxu0
        %v5589 = vadd.f32 0.0, %v5588
        %v5590 = vpop.f32.mrf.mxu0
        %5591 = vdwg.mxu0
        %5592 = vmatpush.bf16.msra.mxu0 %v5525
        %5593 = vmatpush.bf16.msra.mxu0 %v5524
        %5594 = vmatpush.bf16.msra.mxu0 %v5523
        %5595 = vmatpush.bf16.msra.mxu0 %v5522
        %5596 = vmatpush.bf16.msra.mxu0 %v5521
        %5597 = vmatpush.bf16.msra.mxu0 %v5520
        %5598 = vmatpush.bf16.msra.mxu0 %v5519
        %5599 = vmatpush.bf16.msra.mxu0 %v5518
        %5600 = vmatmul.bf16.gmra.mxu0 %v5561
        %v5601 = vpop.f32.mrf.mxu0
        %v5602 = vadd.f32 %v5589, %v5601
        %v5603 = vpop.f32.mrf.mxu0
        %5604 = vdwg.mxu0
        %5605 = vmatpush.bf16.msra.mxu0 %v5533
        %5606 = vmatpush.bf16.msra.mxu0 %v5532
        %5607 = vmatpush.bf16.msra.mxu0 %v5531
        %5608 = vmatpush.bf16.msra.mxu0 %v5530
        %5609 = vmatpush.bf16.msra.mxu0 %v5529
        %5610 = vmatpush.bf16.msra.mxu0 %v5528
        %5611 = vmatpush.bf16.msra.mxu0 %v5527
        %5612 = vmatpush.bf16.msra.mxu0 %v5526
        %5613 = vmatmul.bf16.gmra.mxu0 %v5562
        %v5614 = vpop.f32.mrf.mxu0
        %v5615 = vadd.f32 %v5602, %v5614
        %v5616 = vpop.f32.mrf.mxu0
        %5617 = vdwg.mxu0
        %5618 = vmatpush.bf16.msra.mxu0 %v5541
        %5619 = vmatpush.bf16.msra.mxu0 %v5540
        %5620 = vmatpush.bf16.msra.mxu0 %v5539
        %5621 = vmatpush.bf16.msra.mxu0 %v5538
        %5622 = vmatpush.bf16.msra.mxu0 %v5537
        %5623 = vmatpush.bf16.msra.mxu0 %v5536
        %5624 = vmatpush.bf16.msra.mxu0 %v5535
        %5625 = vmatpush.bf16.msra.mxu0 %v5534
        %5626 = vmatmul.bf16.gmra.mxu0 %v5563
        %v5627 = vpop.f32.mrf.mxu0
        %v5628 = vadd.f32 %v5615, %v5627
        %v5629 = vpop.f32.mrf.mxu0
        %5630 = vdwg.mxu0
        %5631 = vmatpush.bf16.msra.mxu0 %v5549
        %5632 = vmatpush.bf16.msra.mxu0 %v5548
        %5633 = vmatpush.bf16.msra.mxu0 %v5547
        %5634 = vmatpush.bf16.msra.mxu0 %v5546
        %5635 = vmatpush.bf16.msra.mxu0 %v5545
        %5636 = vmatpush.bf16.msra.mxu0 %v5544
        %5637 = vmatpush.bf16.msra.mxu0 %v5543
        %5638 = vmatpush.bf16.msra.mxu0 %v5542
        %5639 = vmatmul.bf16.gmra.mxu0 %v5564
        %v5640 = vpop.f32.mrf.mxu0
        %v5641 = vadd.f32 %v5628, %v5640
        %v5642 = vpop.f32.mrf.mxu0
        %5643 = vdwg.mxu0
        %5644 = vmatpush.bf16.msra.mxu0 0
        %5645 = vmatpush.bf16.msra.mxu0 0
        %5646 = vmatpush.bf16.msra.mxu0 0
        %5647 = vmatpush.bf16.msra.mxu0 0
        %5648 = vmatpush.bf16.msra.mxu0 0
        %5649 = vmatpush.bf16.msra.mxu0 0
        %5650 = vmatpush.bf16.msra.mxu0 0
        %5651 = vmatpush.bf16.msra.mxu0 %v5577
        %5652 = vmatmul.bf16.gmra.mxu0 %v5573
        %v5653 = vpop.f32.mrf.mxu0
        %v5654 = vadd.f32 %v5641, %v5653
        %v5655 = vpop.f32.mrf.mxu0
        %5656 = vdwg.mxu0
        %v5657 = vpack.c.bf16 %v5654, %v5654
        %v5658 = vld [vmem:[%s5] sm:$0xf]
        %v5659 = vld [vmem:[%s5 + $0x4] sm:$0xf]
        %v5660 = vld [vmem:[%s5 + $0x8] sm:$0xf]
        %v5661 = vld [vmem:[%s5 + $0xc] sm:$0xf]
        %v5662 = vld [vmem:[%s5 + $0x10] sm:$0xf]
        %v5663 = vld [vmem:[%s5 + $0x14] sm:$0xf]
        %v5664 = vld [vmem:[%s5 + $0x18] sm:$0xf]
        %v5665 = vld [vmem:[%s5 + $0x1c] sm:$0xf]
        %v5666 = vld [vmem:[%s5 + $0x20] sm:$0xf]
        %v5667 = vld [vmem:[%s5 + $0x24] sm:$0xf]
        %v5668 = vld [vmem:[%s5 + $0x28] sm:$0xf]
        %v5669 = vld [vmem:[%s5 + $0x2c] sm:$0xf]
        %v5670 = vld [vmem:[%s5 + $0x30] sm:$0xf]
        %v5671 = vld [vmem:[%s5 + $0x34] sm:$0xf]
        %v5672 = vld [vmem:[%s5 + $0x38] sm:$0xf]
        %v5673 = vld [vmem:[%s5 + $0x3c] sm:$0xf]
        %v5674 = vld [vmem:[%s6] sm:$0x1]
        %v5676 = vperm.slane %v5674, 0
        %v5694 = vunpack.c.l.b16 %v5658
        %v5695 = vunpack.c.l.b16 %v5659
        %v5696 = vunpack.c.l.b16 %v5660
        %v5697 = vunpack.c.l.b16 %v5661
        %v5698 = vunpack.c.l.b16 %v5662
        %v5699 = vunpack.c.l.b16 %v5663
        %v5700 = vunpack.c.l.b16 %v5664
        %v5701 = vunpack.c.l.b16 %v5665
        %v5702 = vunpack.c.l.b16 %v5666
        %v5703 = vunpack.c.l.b16 %v5667
        %v5704 = vunpack.c.l.b16 %v5668
        %v5705 = vunpack.c.l.b16 %v5669
        %v5706 = vunpack.c.l.b16 %v5670
        %v5707 = vunpack.c.l.b16 %v5671
        %v5708 = vunpack.c.l.b16 %v5672
        %v5709 = vunpack.c.l.b16 %v5673
        %v5710 = vpack.c.b16 %v5695, %v5694
        %v5711 = vpack.c.b16 %v5697, %v5696
        %v5712 = vpack.c.b16 %v5699, %v5698
        %v5713 = vpack.c.b16 %v5701, %v5700
        %v5714 = vpack.c.b16 %v5703, %v5702
        %v5715 = vpack.c.b16 %v5705, %v5704
        %v5716 = vpack.c.b16 %v5707, %v5706
        %v5717 = vpack.c.b16 %v5709, %v5708
        %5726 = vmatpush.bf16.msra.mxu0 %v5717
        %5727 = vmatpush.bf16.msra.mxu0 %v5716
        %5728 = vmatpush.bf16.msra.mxu0 %v5715
        %5729 = vmatpush.bf16.msra.mxu0 %v5714
        %5730 = vmatpush.bf16.msra.mxu0 %v5713
        %5731 = vmatpush.bf16.msra.mxu0 %v5712
        %5732 = vmatpush.bf16.msra.mxu0 %v5711
        %5733 = vmatpush.bf16.msra.mxu0 %v5710
        %5734 = vmatmul.bf16.gmra.mxu0 %v5657
        %v5735 = vpop.f32.mrf.mxu0
        %v5736 = vadd.f32 %v5676, %v5735
        %v5737 = vpop.f32.mrf.mxu0
        %5738 = vdwg.mxu0
        %v5739 = vmax.f32 %v5736, 0.0
        %v5740 = vpack.c.bf16 %v5739, %v5739
        %v5741 = vld [vmem:[%s7] sm:$0xf]
        %v5742 = vld [vmem:[%s7 + $0x4] sm:$0xf]
        %v5743 = vld [vmem:[%s7 + $0x8] sm:$0xf]
        %v5744 = vld [vmem:[%s7 + $0xc] sm:$0xf]
        %v5745 = vld [vmem:[%s7 + $0x10] sm:$0xf]
        %v5746 = vld [vmem:[%s7 + $0x14] sm:$0xf]
        %v5747 = vld [vmem:[%s7 + $0x18] sm:$0xf]
        %v5748 = vld [vmem:[%s7 + $0x1c] sm:$0xf]
        %v5749 = vld [vmem:[%s7 + $0x20] sm:$0xf]
        %v5750 = vld [vmem:[%s7 + $0x24] sm:$0xf]
        %v5751 = vld [vmem:[%s7 + $0x28] sm:$0xf]
        %v5752 = vld [vmem:[%s7 + $0x2c] sm:$0xf]
        %v5753 = vld [vmem:[%s7 + $0x30] sm:$0xf]
        %v5754 = vld [vmem:[%s7 + $0x34] sm:$0xf]
        %v5755 = vld [vmem:[%s7 + $0x38] sm:$0xf]
        %v5756 = vld [vmem:[%s7 + $0x3c] sm:$0xf]
        %v5757 = vld [vmem:[%s8] sm:$0x1]
        %v5759 = vperm.slane %v5757, 0
        %v5777 = vunpack.c.l.b16 %v5741
        %v5778 = vunpack.c.l.b16 %v5742
        %v5779 = vunpack.c.l.b16 %v5743
        %v5780 = vunpack.c.l.b16 %v5744
        %v5781 = vunpack.c.l.b16 %v5745
        %v5782 = vunpack.c.l.b16 %v5746
        %v5783 = vunpack.c.l.b16 %v5747
        %v5784 = vunpack.c.l.b16 %v5748
        %v5785 = vunpack.c.l.b16 %v5749
        %v5786 = vunpack.c.l.b16 %v5750
        %v5787 = vunpack.c.l.b16 %v5751
        %v5788 = vunpack.c.l.b16 %v5752
        %v5789 = vunpack.c.l.b16 %v5753
        %v5790 = vunpack.c.l.b16 %v5754
        %v5791 = vunpack.c.l.b16 %v5755
        %v5792 = vunpack.c.l.b16 %v5756
        %v5793 = vpack.c.b16 %v5778, %v5777
        %v5794 = vpack.c.b16 %v5780, %v5779
        %v5795 = vpack.c.b16 %v5782, %v5781
        %v5796 = vpack.c.b16 %v5784, %v5783
        %v5797 = vpack.c.b16 %v5786, %v5785
        %v5798 = vpack.c.b16 %v5788, %v5787
        %v5799 = vpack.c.b16 %v5790, %v5789
        %v5800 = vpack.c.b16 %v5792, %v5791
        %5809 = vmatpush.bf16.msra.mxu0 %v5800
        %5810 = vmatpush.bf16.msra.mxu0 %v5799
        %5811 = vmatpush.bf16.msra.mxu0 %v5798
        %5812 = vmatpush.bf16.msra.mxu0 %v5797
        %5813 = vmatpush.bf16.msra.mxu0 %v5796
        %5814 = vmatpush.bf16.msra.mxu0 %v5795
        %5815 = vmatpush.bf16.msra.mxu0 %v5794
        %5816 = vmatpush.bf16.msra.mxu0 %v5793
        %5817 = vmatmul.bf16.gmra.mxu0 %v5740
        %v5818 = vpop.f32.mrf.mxu0
        %v5819 = vadd.f32 %v5759, %v5818
        %v5820 = vpop.f32.mrf.mxu0
        %5821 = vdwg.mxu0
        %5822 = vst [vmem:[%s9] sm:$0xff] %v5819
      $region68: #{classifier_net_forward.1} parent=55 // pred_fallthru
        _
      // Predicated region
      $region69: #{classifier_net_forward.1} parent=55 // pred_check
        %p5823 = pneg %p232
      $region70: #{classifier_net_forward.1} parent=55 // pred_check_branch
        %5825 = sbr.rel (%p5823) target = $region72
      $region71: #{classifier_net_forward.1} parent=55 // pred_region
        _
      $region72: #{classifier_net_forward.1} parent=55 // pred_fallthru
        _
      // Predicated region
      $region73: #{classifier_net_forward.1} parent=55 // pred_check
        %p5826 = pneg %p232
      $region74: #{classifier_net_forward.1} parent=55 // pred_check_branch
        %5828 = sbr.rel (%p5826) target = $region76
      $region75: #{classifier_net_forward.1} parent=55 // pred_region
        _
      $region76: #{classifier_net_forward.1} parent=55 // pred_fallthru
        _
    $region56: #{classifier_net_forward.1} parent=5 // pred_fallthru
      _
    %p5829 = scmp.le.s32.totalorder 2, %s15
    // Predicated region
    $region77: #{classifier_net_forward.1} parent=5 // pred_check
      %p5830 = pneg %p5829
    $region78: #{classifier_net_forward.1} parent=5 // pred_check_branch
      %5832 = sbr.rel (%p5830) target = $region80
    $region79: #{classifier_net_forward.1} parent=5 // pred_region
      %s5833 = ssub.s32 %s15, 2
    $region80: #{classifier_net_forward.1} parent=5 // pred_fallthru
      _
  $region6: #{classifier_net_forward.1} parent=0 // loop_footer
    %s19 = sadd.s32 1, %s15
  $region7: #{classifier_net_forward.1} parent=0 // loop_footer_branch
    %14 = sbr.rel target = $region3
  $region8: #{classifier_net_forward.1} parent=0 // loop_exit
    _

</llo_original>
